<compile_context>
chip_gen: v5e
topology: v5e:2x2
jax: 0.10.0
libtpu: 0.0.40
codegen_flags: <defaults>
</compile_context>

<pallas_src>
import math
import functools

import jax
import jax.numpy as jnp
from jax.experimental import pallas as pl
from jax.experimental.pallas import tpu as pltpu


# --------------------------------------------------------------------------
# Single fused Pallas kernel: whole transformer forward for one batch element
# --------------------------------------------------------------------------

def _fused_transformer_kernel(*refs, nhead, num_layers, d_model, eps):
    (src_ref, tgt_ref, pe_ref,
     w_is_ref, b_is_ref, w_it_ref, b_it_ref,
     e_wqkv, e_bqkv, e_wo, e_bo, e_g1, e_beta1,
     e_w1, e_bf1, e_w2, e_bf2, e_g2, e_beta2,
     d_sa_wqkv, d_sa_bqkv, d_sa_wo, d_sa_bo, d_g1, d_beta1,
     d_ca_wq, d_ca_bq, d_ca_wkv, d_ca_bkv, d_ca_wo, d_ca_bo, d_g2, d_beta2,
     d_w1, d_bf1, d_w2, d_bf2, d_g3, d_beta3,
     w_out_ref, b_out_ref,
     out_ref) = refs

    D = d_model
    hd = D // nhead

    def mxm(a, w):
        # bf16 MXU matmul with f32 accumulation.
        return jnp.dot(a.astype(jnp.bfloat16), w, preferred_element_type=jnp.float32)

    def layer_norm(x, g, beta):
        mu = jnp.mean(x, axis=-1, keepdims=True)
        xc = x - mu
        var = jnp.mean(xc * xc, axis=-1, keepdims=True)
        return (xc * jax.lax.rsqrt(var + eps)) * g + beta

    def heads_attention(q, k, v):
        # q: (Sq, D) f32 (already carries the 1/sqrt(hd) scale folded into Wq),
        # k, v: (Sk, D) f32.  Returns the lane-dense concatenation of head
        # outputs, shape (Sq, D), f32.
        outs = []
        for h in range(nhead):
            lo = h * hd
            qh = q[:, lo:lo + hd].astype(jnp.bfloat16)
            kh = k[:, lo:lo + hd].astype(jnp.bfloat16)
            vh = v[:, lo:lo + hd].astype(jnp.bfloat16)
            s = jax.lax.dot_general(qh, kh, (((1,), (1,)), ((), ())),
                                    preferred_element_type=jnp.float32)
            s = s - jnp.max(s, axis=-1, keepdims=True)
            p = jnp.exp(s)
            p = p * pl.reciprocal(jnp.sum(p, axis=-1, keepdims=True), approx=True)
            outs.append(jnp.dot(p.astype(jnp.bfloat16), vh,
                                preferred_element_type=jnp.float32))
        return jnp.concatenate(outs, axis=-1)

    def self_attn_block(x, wqkv, bqkv, wo, bo, g, beta):
        qkv = mxm(x, wqkv) + bqkv                       # (S, 3D), q-part pre-scaled
        a = heads_attention(qkv[:, :D], qkv[:, D:2 * D], qkv[:, 2 * D:])
        a = mxm(a, wo) + bo                             # single (S,D)@(D,D) out-proj
        return layer_norm(x + a, g, beta)

    def cross_attn_block(x, mem, wq, bq, wkv, bkv, wo, bo, g, beta):
        q = mxm(x, wq) + bq                             # (T, D), pre-scaled
        kv = mxm(mem, wkv) + bkv                        # (S, 2D)
        a = heads_attention(q, kv[:, :D], kv[:, D:])
        a = mxm(a, wo) + bo
        return layer_norm(x + a, g, beta)

    def ffn_block(x, w1, b1, w2, b2, g, beta):
        h = jnp.maximum(mxm(x, w1) + b1, 0.0)           # dff hidden never leaves VMEM
        return layer_norm(x + mxm(h, w2) + b2, g, beta)

    # Positional encoding row for this batch element (reference's batch-index quirk).
    pe = pe_ref[0]                                      # (1, D)

    # ---- input projections + positional encoding (dropouts = identity) ----
    x = mxm(src_ref[0], w_is_ref[...]) + b_is_ref[...] + pe     # (S, D)
    y = mxm(tgt_ref[0], w_it_ref[...]) + b_it_ref[...] + pe     # (T, D)

    # ---- encoder stack (post-norm) ----
    for l in range(num_layers):
        x = self_attn_block(x, e_wqkv[l], e_bqkv[l], e_wo[l], e_bo[l],
                            e_g1[l], e_beta1[l])
        x = ffn_block(x, e_w1[l], e_bf1[l], e_w2[l], e_bf2[l],
                      e_g2[l], e_beta2[l])
    mem = x

    # ---- decoder stack (reference passes no masks) ----
    for l in range(num_layers):
        y = self_attn_block(y, d_sa_wqkv[l], d_sa_bqkv[l], d_sa_wo[l], d_sa_bo[l],
                            d_g1[l], d_beta1[l])
        y = cross_attn_block(y, mem, d_ca_wq[l], d_ca_bq[l], d_ca_wkv[l], d_ca_bkv[l],
                             d_ca_wo[l], d_ca_bo[l], d_g2[l], d_beta2[l])
        y = ffn_block(y, d_w1[l], d_bf1[l], d_w2[l], d_bf2[l],
                      d_g3[l], d_beta3[l])

    # ---- output projection ----
    out_ref[0] = mxm(y, w_out_ref[...]) + b_out_ref[...]


def transformer_forward(params, src, tgt, *, nhead, num_layers):
    B, S, Fin = src.shape
    T = tgt.shape[1]
    d_model = params['w_in_src'].shape[1]
    Fout = params['w_out'].shape[1]
    enc, dec = params['enc'], params['dec']

    operands = [
        src, tgt, params['pe'],
        params['w_in_src'], params['b_in_src'],
        params['w_in_tgt'], params['b_in_tgt'],
        enc['wqkv'], enc['bqkv'], enc['wo'], enc['bo'], enc['g1'], enc['beta1'],
        enc['w1'], enc['bf1'], enc['w2'], enc['bf2'], enc['g2'], enc['beta2'],
        dec['sa_wqkv'], dec['sa_bqkv'], dec['sa_wo'], dec['sa_bo'],
        dec['g1'], dec['beta1'],
        dec['ca_wq'], dec['ca_bq'], dec['ca_wkv'], dec['ca_bkv'],
        dec['ca_wo'], dec['ca_bo'], dec['g2'], dec['beta2'],
        dec['w1'], dec['bf1'], dec['w2'], dec['bf2'], dec['g3'], dec['beta3'],
        params['w_out'], params['b_out'],
    ]

    def batched(arr):
        trailing = arr.shape[1:]
        n = len(trailing)
        return pl.BlockSpec((1,) + trailing, lambda b, _n=n: (b,) + (0,) * _n)

    def const(arr):
        n = arr.ndim
        return pl.BlockSpec(arr.shape, lambda b, _n=n: (0,) * _n)

    in_specs = ([batched(src), batched(tgt), batched(params['pe'])]
                + [const(a) for a in operands[3:]])

    kernel = functools.partial(_fused_transformer_kernel, nhead=nhead,
                               num_layers=num_layers, d_model=d_model, eps=1e-5)

    return pl.pallas_call(
        kernel,
        out_shape=jax.ShapeDtypeStruct((B, T, Fout), jnp.float32),
        grid=(B,),
        in_specs=in_specs,
        out_specs=pl.BlockSpec((1, T, Fout), lambda b: (b, 0, 0)),
        compiler_params=pltpu.CompilerParams(
            dimension_semantics=("parallel",),          # 2x core split on v7x
            vmem_limit_bytes=32 * 1024 * 1024),
    )(*operands)


# --------------------------------------------------------------------------
# Deterministic parameter initialization (fused / pre-scaled layouts)
# --------------------------------------------------------------------------

_WEIGHT_KEYS = {'wqkv', 'wo', 'w1', 'w2', 'sa_wqkv', 'sa_wo',
                'ca_wq', 'ca_wkv', 'ca_wo'}


def _dense(key, din, dout):
    kw, kb = jax.random.split(key)
    bound = 1.0 / math.sqrt(din)
    w = jax.random.uniform(kw, (din, dout), jnp.float32, -bound, bound)
    b = jax.random.uniform(kb, (dout,), jnp.float32, -bound, bound)
    return w, b


def _self_attn_params(key, d, nhead):
    sc = 1.0 / math.sqrt(d // nhead)
    kq, kk, kv, ko = jax.random.split(key, 4)
    wq, bq = _dense(kq, d, d)
    wk, bk = _dense(kk, d, d)
    wv, bv = _dense(kv, d, d)
    wo, bo = _dense(ko, d, d)
    return dict(
        # 1/sqrt(hd) folded into the Q projection; Q/K/V fused into one (D,3D).
        wqkv=jnp.concatenate([wq * sc, wk, wv], axis=1),
        bqkv=jnp.concatenate([bq * sc, bk, bv]).reshape(1, 3 * d),
        wo=wo, bo=bo.reshape(1, d))


def _cross_attn_params(key, d, nhead):
    sc = 1.0 / math.sqrt(d // nhead)
    kq, kk, kv, ko = jax.random.split(key, 4)
    wq, bq = _dense(kq, d, d)
    wk, bk = _dense(kk, d, d)
    wv, bv = _dense(kv, d, d)
    wo, bo = _dense(ko, d, d)
    return dict(
        wq=wq * sc, bq=(bq * sc).reshape(1, d),
        wkv=jnp.concatenate([wk, wv], axis=1),
        bkv=jnp.concatenate([bk, bv]).reshape(1, 2 * d),
        wo=wo, bo=bo.reshape(1, d))


def _ffn_params(key, d, dff):
    k1, k2 = jax.random.split(key)
    w1, b1 = _dense(k1, d, dff)
    w2, b2 = _dense(k2, dff, d)
    return dict(w1=w1, bf1=b1.reshape(1, dff), w2=w2, bf2=b2.reshape(1, d))


def _ln(d):
    return jnp.ones((1, d), jnp.float32), jnp.zeros((1, d), jnp.float32)


def _stack_layers(layer_dicts):
    out = {}
    for k in layer_dicts[0]:
        arr = jnp.stack([ld[k] for ld in layer_dicts])
        if k in _WEIGHT_KEYS:
            arr = arr.astype(jnp.bfloat16)              # MXU operands stored bf16
        out[k] = arr
    return out


def make_pos_encoding(max_len, d):
    pos = jnp.arange(max_len, dtype=jnp.float32)[:, None]
    div = jnp.exp(jnp.arange(0, d, 2, dtype=jnp.float32) * (-math.log(10000.0) / d))
    pe = jnp.zeros((max_len, d), jnp.float32)
    pe = pe.at[:, 0::2].set(jnp.sin(pos * div))
    pe = pe.at[:, 1::2].set(jnp.cos(pos * div))
    return pe[:, None, :]                               # (max_len, 1, d)


def init_params(key, *, d_model, nhead, dff, num_layers, in_features, max_len=600):
    k_is, k_it, k_out, k_enc, k_dec = jax.random.split(key, 5)
    w_is, b_is = _dense(k_is, in_features, d_model)
    w_it, b_it = _dense(k_it, in_features, d_model)
    w_o, b_o = _dense(k_out, d_model, in_features)

    enc_layers = []
    for kk in jax.random.split(k_enc, num_layers):
        ka, kf = jax.random.split(kk)
        p = {}
        p.update(_self_attn_params(ka, d_model, nhead))
        p['g1'], p['beta1'] = _ln(d_model)
        p.update(_ffn_params(kf, d_model, dff))
        p['g2'], p['beta2'] = _ln(d_model)
        enc_layers.append(p)

    dec_layers = []
    for kk in jax.random.split(k_dec, num_layers):
        ka, kc, kf = jax.random.split(kk, 3)
        p = {}
        p.update({'sa_' + k: v for k, v in _self_attn_params(ka, d_model, nhead).items()})
        p['g1'], p['beta1'] = _ln(d_model)
        p.update({'ca_' + k: v for k, v in _cross_attn_params(kc, d_model, nhead).items()})
        p['g2'], p['beta2'] = _ln(d_model)
        p.update(_ffn_params(kf, d_model, dff))
        p['g3'], p['beta3'] = _ln(d_model)
        dec_layers.append(p)

    return dict(
        w_in_src=w_is.astype(jnp.bfloat16), b_in_src=b_is.reshape(1, d_model),
        w_in_tgt=w_it.astype(jnp.bfloat16), b_in_tgt=b_it.reshape(1, d_model),
        w_out=w_o.astype(jnp.bfloat16), b_out=b_o.reshape(1, in_features),
        pe=make_pos_encoding(max_len, d_model),
        enc=_stack_layers(enc_layers),
        dec=_stack_layers(dec_layers))


# --------------------------------------------------------------------------

if __name__ == "__main__":
    # Small shapes consistent with the module's forward:
    # src/tgt: (batch, seq, 20); scaled-down d_model / nhead / num_layers / dff.
    B, S, T = 2, 8, 8
    in_features = 20
    d_model, nhead, num_layers, dff = 32, 4, 2, 64

    key = jax.random.PRNGKey(0)
    kp, ks, kt = jax.random.split(key, 3)
    params = init_params(kp, d_model=d_model, nhead=nhead, dff=dff,
                         num_layers=num_layers, in_features=in_features)

    src = jax.random.normal(ks, (B, S, in_features), jnp.float32)
    tgt = jax.random.normal(kt, (B, T, in_features), jnp.float32)

    fwd = jax.jit(functools.partial(transformer_forward, nhead=nhead,
                                    num_layers=num_layers))
    out = jax.block_until_ready(fwd(params, src, tgt))
    assert out.shape == (B, T, in_features), out.shape
    assert jnp.all(jnp.isfinite(out))
    print("KERNEL_OK")
</pallas_src>

<mosaic_0001>
module attributes {stable_mosaic.version = 11 : i64} {
  func.func @_fused_transformer_kernel(%arg0: i32, %arg1: memref<1x8x20xf32, #tpu.memory_space<vmem>>, %arg2: memref<1x8x20xf32, #tpu.memory_space<vmem>>, %arg3: memref<1x1x32xf32, #tpu.memory_space<vmem>>, %arg4: memref<20x32xbf16, #tpu.memory_space<vmem>>, %arg5: memref<1x32xf32, #tpu.memory_space<vmem>>, %arg6: memref<20x32xbf16, #tpu.memory_space<vmem>>, %arg7: memref<1x32xf32, #tpu.memory_space<vmem>>, %arg8: memref<2x32x96xbf16, #tpu.memory_space<vmem>>, %arg9: memref<2x1x96xf32, #tpu.memory_space<vmem>>, %arg10: memref<2x32x32xbf16, #tpu.memory_space<vmem>>, %arg11: memref<2x1x32xf32, #tpu.memory_space<vmem>>, %arg12: memref<2x1x32xf32, #tpu.memory_space<vmem>>, %arg13: memref<2x1x32xf32, #tpu.memory_space<vmem>>, %arg14: memref<2x32x64xbf16, #tpu.memory_space<vmem>>, %arg15: memref<2x1x64xf32, #tpu.memory_space<vmem>>, %arg16: memref<2x64x32xbf16, #tpu.memory_space<vmem>>, %arg17: memref<2x1x32xf32, #tpu.memory_space<vmem>>, %arg18: memref<2x1x32xf32, #tpu.memory_space<vmem>>, %arg19: memref<2x1x32xf32, #tpu.memory_space<vmem>>, %arg20: memref<2x32x96xbf16, #tpu.memory_space<vmem>>, %arg21: memref<2x1x96xf32, #tpu.memory_space<vmem>>, %arg22: memref<2x32x32xbf16, #tpu.memory_space<vmem>>, %arg23: memref<2x1x32xf32, #tpu.memory_space<vmem>>, %arg24: memref<2x1x32xf32, #tpu.memory_space<vmem>>, %arg25: memref<2x1x32xf32, #tpu.memory_space<vmem>>, %arg26: memref<2x32x32xbf16, #tpu.memory_space<vmem>>, %arg27: memref<2x1x32xf32, #tpu.memory_space<vmem>>, %arg28: memref<2x32x64xbf16, #tpu.memory_space<vmem>>, %arg29: memref<2x1x64xf32, #tpu.memory_space<vmem>>, %arg30: memref<2x32x32xbf16, #tpu.memory_space<vmem>>, %arg31: memref<2x1x32xf32, #tpu.memory_space<vmem>>, %arg32: memref<2x1x32xf32, #tpu.memory_space<vmem>>, %arg33: memref<2x1x32xf32, #tpu.memory_space<vmem>>, %arg34: memref<2x32x64xbf16, #tpu.memory_space<vmem>>, %arg35: memref<2x1x64xf32, #tpu.memory_space<vmem>>, %arg36: memref<2x64x32xbf16, #tpu.memory_space<vmem>>, %arg37: memref<2x1x32xf32, #tpu.memory_space<vmem>>, %arg38: memref<2x1x32xf32, #tpu.memory_space<vmem>>, %arg39: memref<2x1x32xf32, #tpu.memory_space<vmem>>, %arg40: memref<32x20xbf16, #tpu.memory_space<vmem>>, %arg41: memref<1x20xf32, #tpu.memory_space<vmem>>, %arg42: memref<1x8x20xf32, #tpu.memory_space<vmem>>) attributes {dimension_semantics = [#tpu.dimension_semantics<parallel>], iteration_bounds = array<i64: 2>, scalar_prefetch = 0 : i64, scratch_operands = 0 : i64, tpu.core_type = #tpu.core_type<tc>, window_params = [{transform_indices = @transform_0, window_bounds = array<i64: 1, 8, 20>}, {transform_indices = @transform_1, window_bounds = array<i64: 1, 8, 20>}, {transform_indices = @transform_2, window_bounds = array<i64: 1, 1, 32>}, {pipeline_mode = #tpu.pipeline_mode<synchronous>, transform_indices = @transform_3, window_bounds = array<i64: 20, 32>}, {pipeline_mode = #tpu.pipeline_mode<synchronous>, transform_indices = @transform_4, window_bounds = array<i64: 1, 32>}, {pipeline_mode = #tpu.pipeline_mode<synchronous>, transform_indices = @transform_5, window_bounds = array<i64: 20, 32>}, {pipeline_mode = #tpu.pipeline_mode<synchronous>, transform_indices = @transform_6, window_bounds = array<i64: 1, 32>}, {pipeline_mode = #tpu.pipeline_mode<synchronous>, transform_indices = @transform_7, window_bounds = array<i64: 2, 32, 96>}, {pipeline_mode = #tpu.pipeline_mode<synchronous>, transform_indices = @transform_8, window_bounds = array<i64: 2, 1, 96>}, {pipeline_mode = #tpu.pipeline_mode<synchronous>, transform_indices = @transform_9, window_bounds = array<i64: 2, 32, 32>}, {pipeline_mode = #tpu.pipeline_mode<synchronous>, transform_indices = @transform_10, window_bounds = array<i64: 2, 1, 32>}, {pipeline_mode = #tpu.pipeline_mode<synchronous>, transform_indices = @transform_11, window_bounds = array<i64: 2, 1, 32>}, {pipeline_mode = #tpu.pipeline_mode<synchronous>, transform_indices = @transform_12, window_bounds = array<i64: 2, 1, 32>}, {pipeline_mode = #tpu.pipeline_mode<synchronous>, transform_indices = @transform_13, window_bounds = array<i64: 2, 32, 64>}, {pipeline_mode = #tpu.pipeline_mode<synchronous>, transform_indices = @transform_14, window_bounds = array<i64: 2, 1, 64>}, {pipeline_mode = #tpu.pipeline_mode<synchronous>, transform_indices = @transform_15, window_bounds = array<i64: 2, 64, 32>}, {pipeline_mode = #tpu.pipeline_mode<synchronous>, transform_indices = @transform_16, window_bounds = array<i64: 2, 1, 32>}, {pipeline_mode = #tpu.pipeline_mode<synchronous>, transform_indices = @transform_17, window_bounds = array<i64: 2, 1, 32>}, {pipeline_mode = #tpu.pipeline_mode<synchronous>, transform_indices = @transform_18, window_bounds = array<i64: 2, 1, 32>}, {pipeline_mode = #tpu.pipeline_mode<synchronous>, transform_indices = @transform_19, window_bounds = array<i64: 2, 32, 96>}, {pipeline_mode = #tpu.pipeline_mode<synchronous>, transform_indices = @transform_20, window_bounds = array<i64: 2, 1, 96>}, {pipeline_mode = #tpu.pipeline_mode<synchronous>, transform_indices = @transform_21, window_bounds = array<i64: 2, 32, 32>}, {pipeline_mode = #tpu.pipeline_mode<synchronous>, transform_indices = @transform_22, window_bounds = array<i64: 2, 1, 32>}, {pipeline_mode = #tpu.pipeline_mode<synchronous>, transform_indices = @transform_23, window_bounds = array<i64: 2, 1, 32>}, {pipeline_mode = #tpu.pipeline_mode<synchronous>, transform_indices = @transform_24, window_bounds = array<i64: 2, 1, 32>}, {pipeline_mode = #tpu.pipeline_mode<synchronous>, transform_indices = @transform_25, window_bounds = array<i64: 2, 32, 32>}, {pipeline_mode = #tpu.pipeline_mode<synchronous>, transform_indices = @transform_26, window_bounds = array<i64: 2, 1, 32>}, {pipeline_mode = #tpu.pipeline_mode<synchronous>, transform_indices = @transform_27, window_bounds = array<i64: 2, 32, 64>}, {pipeline_mode = #tpu.pipeline_mode<synchronous>, transform_indices = @transform_28, window_bounds = array<i64: 2, 1, 64>}, {pipeline_mode = #tpu.pipeline_mode<synchronous>, transform_indices = @transform_29, window_bounds = array<i64: 2, 32, 32>}, {pipeline_mode = #tpu.pipeline_mode<synchronous>, transform_indices = @transform_30, window_bounds = array<i64: 2, 1, 32>}, {pipeline_mode = #tpu.pipeline_mode<synchronous>, transform_indices = @transform_31, window_bounds = array<i64: 2, 1, 32>}, {pipeline_mode = #tpu.pipeline_mode<synchronous>, transform_indices = @transform_32, window_bounds = array<i64: 2, 1, 32>}, {pipeline_mode = #tpu.pipeline_mode<synchronous>, transform_indices = @transform_33, window_bounds = array<i64: 2, 32, 64>}, {pipeline_mode = #tpu.pipeline_mode<synchronous>, transform_indices = @transform_34, window_bounds = array<i64: 2, 1, 64>}, {pipeline_mode = #tpu.pipeline_mode<synchronous>, transform_indices = @transform_35, window_bounds = array<i64: 2, 64, 32>}, {pipeline_mode = #tpu.pipeline_mode<synchronous>, transform_indices = @transform_36, window_bounds = array<i64: 2, 1, 32>}, {pipeline_mode = #tpu.pipeline_mode<synchronous>, transform_indices = @transform_37, window_bounds = array<i64: 2, 1, 32>}, {pipeline_mode = #tpu.pipeline_mode<synchronous>, transform_indices = @transform_38, window_bounds = array<i64: 2, 1, 32>}, {pipeline_mode = #tpu.pipeline_mode<synchronous>, transform_indices = @transform_39, window_bounds = array<i64: 32, 20>}, {pipeline_mode = #tpu.pipeline_mode<synchronous>, transform_indices = @transform_40, window_bounds = array<i64: 1, 20>}, {transform_indices = @transform_41, window_bounds = array<i64: 1, 8, 20>}]} {
    %c0 = arith.constant 0 : index
    %c0_0 = arith.constant 0 : index
    %c0_1 = arith.constant 0 : index
    %0 = vector.load %arg3[%c0, %c0_0, %c0_1] : memref<1x1x32xf32, #tpu.memory_space<vmem>>, vector<1x1x32xf32>
    %1 = vector.shape_cast %0 : vector<1x1x32xf32> to vector<1x32xf32>
    %c0_2 = arith.constant 0 : index
    %c0_3 = arith.constant 0 : index
    %c0_4 = arith.constant 0 : index
    %2 = vector.load %arg1[%c0_2, %c0_3, %c0_4] : memref<1x8x20xf32, #tpu.memory_space<vmem>>, vector<1x8x20xf32>
    %3 = vector.shape_cast %2 : vector<1x8x20xf32> to vector<8x20xf32>
    %c0_5 = arith.constant 0 : index
    %c0_6 = arith.constant 0 : index
    %4 = vector.load %arg4[%c0_5, %c0_6] : memref<20x32xbf16, #tpu.memory_space<vmem>>, vector<20x32xbf16>
    %5 = arith.truncf %3 : vector<8x20xf32> to vector<8x20xbf16>
    %cst = arith.constant dense<0.000000e+00> : vector<8x32xf32>
    %6 = tpu.matmul %5, %4, %cst {dimension_numbers = #tpu.dot_dimension_numbers<[1], [0], [0], [1], [0, 0, 1, 1], [], []>} : vector<8x20xbf16>, vector<20x32xbf16>, vector<8x32xf32> -> vector<8x32xf32>
    %c0_7 = arith.constant 0 : index
    %c0_8 = arith.constant 0 : index
    %7 = vector.load %arg5[%c0_7, %c0_8] : memref<1x32xf32, #tpu.memory_space<vmem>>, vector<1x32xf32>
    %8 = vector.broadcast %7 : vector<1x32xf32> to vector<8x32xf32>
    %9 = arith.addf %6, %8 : vector<8x32xf32>
    %10 = vector.broadcast %1 : vector<1x32xf32> to vector<8x32xf32>
    %11 = arith.addf %9, %10 : vector<8x32xf32>
    %c0_9 = arith.constant 0 : index
    %c0_10 = arith.constant 0 : index
    %c0_11 = arith.constant 0 : index
    %12 = vector.load %arg2[%c0_9, %c0_10, %c0_11] : memref<1x8x20xf32, #tpu.memory_space<vmem>>, vector<1x8x20xf32>
    %13 = vector.shape_cast %12 : vector<1x8x20xf32> to vector<8x20xf32>
    %c0_12 = arith.constant 0 : index
    %c0_13 = arith.constant 0 : index
    %14 = vector.load %arg6[%c0_12, %c0_13] : memref<20x32xbf16, #tpu.memory_space<vmem>>, vector<20x32xbf16>
    %15 = arith.truncf %13 : vector<8x20xf32> to vector<8x20xbf16>
    %cst_14 = arith.constant dense<0.000000e+00> : vector<8x32xf32>
    %16 = tpu.matmul %15, %14, %cst_14 {dimension_numbers = #tpu.dot_dimension_numbers<[1], [0], [0], [1], [0, 0, 1, 1], [], []>} : vector<8x20xbf16>, vector<20x32xbf16>, vector<8x32xf32> -> vector<8x32xf32>
    %c0_15 = arith.constant 0 : index
    %c0_16 = arith.constant 0 : index
    %17 = vector.load %arg7[%c0_15, %c0_16] : memref<1x32xf32, #tpu.memory_space<vmem>>, vector<1x32xf32>
    %18 = vector.broadcast %17 : vector<1x32xf32> to vector<8x32xf32>
    %19 = arith.addf %16, %18 : vector<8x32xf32>
    %20 = vector.broadcast %1 : vector<1x32xf32> to vector<8x32xf32>
    %21 = arith.addf %19, %20 : vector<8x32xf32>
    %c0_17 = arith.constant 0 : index
    %c0_18 = arith.constant 0 : index
    %c0_19 = arith.constant 0 : index
    %22 = vector.load %arg8[%c0_17, %c0_18, %c0_19] : memref<2x32x96xbf16, #tpu.memory_space<vmem>>, vector<1x32x96xbf16>
    %23 = vector.shape_cast %22 : vector<1x32x96xbf16> to vector<32x96xbf16>
    %c0_20 = arith.constant 0 : index
    %c0_21 = arith.constant 0 : index
    %c0_22 = arith.constant 0 : index
    %24 = vector.load %arg9[%c0_20, %c0_21, %c0_22] : memref<2x1x96xf32, #tpu.memory_space<vmem>>, vector<1x1x96xf32>
    %25 = vector.shape_cast %24 : vector<1x1x96xf32> to vector<1x96xf32>
    %c0_23 = arith.constant 0 : index
    %c0_24 = arith.constant 0 : index
    %c0_25 = arith.constant 0 : index
    %26 = vector.load %arg10[%c0_23, %c0_24, %c0_25] : memref<2x32x32xbf16, #tpu.memory_space<vmem>>, vector<1x32x32xbf16>
    %27 = vector.shape_cast %26 : vector<1x32x32xbf16> to vector<32x32xbf16>
    %c0_26 = arith.constant 0 : index
    %c0_27 = arith.constant 0 : index
    %c0_28 = arith.constant 0 : index
    %28 = vector.load %arg11[%c0_26, %c0_27, %c0_28] : memref<2x1x32xf32, #tpu.memory_space<vmem>>, vector<1x1x32xf32>
    %29 = vector.shape_cast %28 : vector<1x1x32xf32> to vector<1x32xf32>
    %c0_29 = arith.constant 0 : index
    %c0_30 = arith.constant 0 : index
    %c0_31 = arith.constant 0 : index
    %30 = vector.load %arg12[%c0_29, %c0_30, %c0_31] : memref<2x1x32xf32, #tpu.memory_space<vmem>>, vector<1x1x32xf32>
    %31 = vector.shape_cast %30 : vector<1x1x32xf32> to vector<1x32xf32>
    %c0_32 = arith.constant 0 : index
    %c0_33 = arith.constant 0 : index
    %c0_34 = arith.constant 0 : index
    %32 = vector.load %arg13[%c0_32, %c0_33, %c0_34] : memref<2x1x32xf32, #tpu.memory_space<vmem>>, vector<1x1x32xf32>
    %33 = vector.shape_cast %32 : vector<1x1x32xf32> to vector<1x32xf32>
    %34 = arith.truncf %11 : vector<8x32xf32> to vector<8x32xbf16>
    %cst_35 = arith.constant dense<0.000000e+00> : vector<8x96xf32>
    %35 = tpu.matmul %34, %23, %cst_35 {dimension_numbers = #tpu.dot_dimension_numbers<[1], [0], [0], [1], [0, 0, 1, 1], [], []>} : vector<8x32xbf16>, vector<32x96xbf16>, vector<8x96xf32> -> vector<8x96xf32>
    %36 = vector.broadcast %25 : vector<1x96xf32> to vector<8x96xf32>
    %37 = arith.addf %35, %36 : vector<8x96xf32>
    %38 = vector.extract_strided_slice %37 {offsets = [0, 0], sizes = [8, 32], strides = [1, 1]} : vector<8x96xf32> to vector<8x32xf32>
    %39 = vector.extract_strided_slice %37 {offsets = [0, 32], sizes = [8, 32], strides = [1, 1]} : vector<8x96xf32> to vector<8x32xf32>
    %40 = vector.extract_strided_slice %37 {offsets = [0, 64], sizes = [8, 32], strides = [1, 1]} : vector<8x96xf32> to vector<8x32xf32>
    %41 = vector.extract_strided_slice %38 {offsets = [0, 0], sizes = [8, 8], strides = [1, 1]} : vector<8x32xf32> to vector<8x8xf32>
    %42 = arith.truncf %41 : vector<8x8xf32> to vector<8x8xbf16>
    %43 = vector.extract_strided_slice %39 {offsets = [0, 0], sizes = [8, 8], strides = [1, 1]} : vector<8x32xf32> to vector<8x8xf32>
    %44 = arith.truncf %43 : vector<8x8xf32> to vector<8x8xbf16>
    %45 = vector.extract_strided_slice %40 {offsets = [0, 0], sizes = [8, 8], strides = [1, 1]} : vector<8x32xf32> to vector<8x8xf32>
    %46 = arith.truncf %45 : vector<8x8xf32> to vector<8x8xbf16>
    %cst_36 = arith.constant dense<0.000000e+00> : vector<8x8xf32>
    %47 = tpu.matmul %42, %44, %cst_36 {dimension_numbers = #tpu.dot_dimension_numbers<[1], [1], [0], [0], [0, 0, 1, 0], [], []>} : vector<8x8xbf16>, vector<8x8xbf16>, vector<8x8xf32> -> vector<8x8xf32>
    %cst_37 = arith.constant dense<0xFF800000> : vector<8xf32>
    %48 = vector.multi_reduction <maximumf>, %47, %cst_37 [1] : vector<8x8xf32> to vector<8xf32>
    %49 = vector.shape_cast %48 : vector<8xf32> to vector<8x1xf32>
    %50 = vector.broadcast %49 : vector<8x1xf32> to vector<8x8xf32>
    %51 = arith.subf %47, %50 : vector<8x8xf32>
    %52 = math.exp %51 : vector<8x8xf32>
    %cst_38 = arith.constant dense<0.000000e+00> : vector<8xf32>
    %53 = vector.multi_reduction <add>, %52, %cst_38 [1] : vector<8x8xf32> to vector<8xf32>
    %54 = vector.shape_cast %53 : vector<8xf32> to vector<8x1xf32>
    %55 = tpu.reciprocal %54 {approx = true} : vector<8x1xf32> -> vector<8x1xf32>
    %56 = vector.broadcast %55 : vector<8x1xf32> to vector<8x8xf32>
    %57 = arith.mulf %52, %56 : vector<8x8xf32>
    %58 = arith.truncf %57 : vector<8x8xf32> to vector<8x8xbf16>
    %cst_39 = arith.constant dense<0.000000e+00> : vector<8x8xf32>
    %59 = tpu.matmul %58, %46, %cst_39 {dimension_numbers = #tpu.dot_dimension_numbers<[1], [0], [0], [1], [0, 0, 1, 1], [], []>} : vector<8x8xbf16>, vector<8x8xbf16>, vector<8x8xf32> -> vector<8x8xf32>
    %60 = vector.extract_strided_slice %38 {offsets = [0, 8], sizes = [8, 8], strides = [1, 1]} : vector<8x32xf32> to vector<8x8xf32>
    %61 = arith.truncf %60 : vector<8x8xf32> to vector<8x8xbf16>
    %62 = vector.extract_strided_slice %39 {offsets = [0, 8], sizes = [8, 8], strides = [1, 1]} : vector<8x32xf32> to vector<8x8xf32>
    %63 = arith.truncf %62 : vector<8x8xf32> to vector<8x8xbf16>
    %64 = vector.extract_strided_slice %40 {offsets = [0, 8], sizes = [8, 8], strides = [1, 1]} : vector<8x32xf32> to vector<8x8xf32>
    %65 = arith.truncf %64 : vector<8x8xf32> to vector<8x8xbf16>
    %cst_40 = arith.constant dense<0.000000e+00> : vector<8x8xf32>
    %66 = tpu.matmul %61, %63, %cst_40 {dimension_numbers = #tpu.dot_dimension_numbers<[1], [1], [0], [0], [0, 0, 1, 0], [], []>} : vector<8x8xbf16>, vector<8x8xbf16>, vector<8x8xf32> -> vector<8x8xf32>
    %cst_41 = arith.constant dense<0xFF800000> : vector<8xf32>
    %67 = vector.multi_reduction <maximumf>, %66, %cst_41 [1] : vector<8x8xf32> to vector<8xf32>
    %68 = vector.shape_cast %67 : vector<8xf32> to vector<8x1xf32>
    %69 = vector.broadcast %68 : vector<8x1xf32> to vector<8x8xf32>
    %70 = arith.subf %66, %69 : vector<8x8xf32>
    %71 = math.exp %70 : vector<8x8xf32>
    %cst_42 = arith.constant dense<0.000000e+00> : vector<8xf32>
    %72 = vector.multi_reduction <add>, %71, %cst_42 [1] : vector<8x8xf32> to vector<8xf32>
    %73 = vector.shape_cast %72 : vector<8xf32> to vector<8x1xf32>
    %74 = tpu.reciprocal %73 {approx = true} : vector<8x1xf32> -> vector<8x1xf32>
    %75 = vector.broadcast %74 : vector<8x1xf32> to vector<8x8xf32>
    %76 = arith.mulf %71, %75 : vector<8x8xf32>
    %77 = arith.truncf %76 : vector<8x8xf32> to vector<8x8xbf16>
    %cst_43 = arith.constant dense<0.000000e+00> : vector<8x8xf32>
    %78 = tpu.matmul %77, %65, %cst_43 {dimension_numbers = #tpu.dot_dimension_numbers<[1], [0], [0], [1], [0, 0, 1, 1], [], []>} : vector<8x8xbf16>, vector<8x8xbf16>, vector<8x8xf32> -> vector<8x8xf32>
    %79 = vector.extract_strided_slice %38 {offsets = [0, 16], sizes = [8, 8], strides = [1, 1]} : vector<8x32xf32> to vector<8x8xf32>
    %80 = arith.truncf %79 : vector<8x8xf32> to vector<8x8xbf16>
    %81 = vector.extract_strided_slice %39 {offsets = [0, 16], sizes = [8, 8], strides = [1, 1]} : vector<8x32xf32> to vector<8x8xf32>
    %82 = arith.truncf %81 : vector<8x8xf32> to vector<8x8xbf16>
    %83 = vector.extract_strided_slice %40 {offsets = [0, 16], sizes = [8, 8], strides = [1, 1]} : vector<8x32xf32> to vector<8x8xf32>
    %84 = arith.truncf %83 : vector<8x8xf32> to vector<8x8xbf16>
    %cst_44 = arith.constant dense<0.000000e+00> : vector<8x8xf32>
    %85 = tpu.matmul %80, %82, %cst_44 {dimension_numbers = #tpu.dot_dimension_numbers<[1], [1], [0], [0], [0, 0, 1, 0], [], []>} : vector<8x8xbf16>, vector<8x8xbf16>, vector<8x8xf32> -> vector<8x8xf32>
    %cst_45 = arith.constant dense<0xFF800000> : vector<8xf32>
    %86 = vector.multi_reduction <maximumf>, %85, %cst_45 [1] : vector<8x8xf32> to vector<8xf32>
    %87 = vector.shape_cast %86 : vector<8xf32> to vector<8x1xf32>
    %88 = vector.broadcast %87 : vector<8x1xf32> to vector<8x8xf32>
    %89 = arith.subf %85, %88 : vector<8x8xf32>
    %90 = math.exp %89 : vector<8x8xf32>
    %cst_46 = arith.constant dense<0.000000e+00> : vector<8xf32>
    %91 = vector.multi_reduction <add>, %90, %cst_46 [1] : vector<8x8xf32> to vector<8xf32>
    %92 = vector.shape_cast %91 : vector<8xf32> to vector<8x1xf32>
    %93 = tpu.reciprocal %92 {approx = true} : vector<8x1xf32> -> vector<8x1xf32>
    %94 = vector.broadcast %93 : vector<8x1xf32> to vector<8x8xf32>
    %95 = arith.mulf %90, %94 : vector<8x8xf32>
    %96 = arith.truncf %95 : vector<8x8xf32> to vector<8x8xbf16>
    %cst_47 = arith.constant dense<0.000000e+00> : vector<8x8xf32>
    %97 = tpu.matmul %96, %84, %cst_47 {dimension_numbers = #tpu.dot_dimension_numbers<[1], [0], [0], [1], [0, 0, 1, 1], [], []>} : vector<8x8xbf16>, vector<8x8xbf16>, vector<8x8xf32> -> vector<8x8xf32>
    %98 = vector.extract_strided_slice %38 {offsets = [0, 24], sizes = [8, 8], strides = [1, 1]} : vector<8x32xf32> to vector<8x8xf32>
    %99 = arith.truncf %98 : vector<8x8xf32> to vector<8x8xbf16>
    %100 = vector.extract_strided_slice %39 {offsets = [0, 24], sizes = [8, 8], strides = [1, 1]} : vector<8x32xf32> to vector<8x8xf32>
    %101 = arith.truncf %100 : vector<8x8xf32> to vector<8x8xbf16>
    %102 = vector.extract_strided_slice %40 {offsets = [0, 24], sizes = [8, 8], strides = [1, 1]} : vector<8x32xf32> to vector<8x8xf32>
    %103 = arith.truncf %102 : vector<8x8xf32> to vector<8x8xbf16>
    %cst_48 = arith.constant dense<0.000000e+00> : vector<8x8xf32>
    %104 = tpu.matmul %99, %101, %cst_48 {dimension_numbers = #tpu.dot_dimension_numbers<[1], [1], [0], [0], [0, 0, 1, 0], [], []>} : vector<8x8xbf16>, vector<8x8xbf16>, vector<8x8xf32> -> vector<8x8xf32>
    %cst_49 = arith.constant dense<0xFF800000> : vector<8xf32>
    %105 = vector.multi_reduction <maximumf>, %104, %cst_49 [1] : vector<8x8xf32> to vector<8xf32>
    %106 = vector.shape_cast %105 : vector<8xf32> to vector<8x1xf32>
    %107 = vector.broadcast %106 : vector<8x1xf32> to vector<8x8xf32>
    %108 = arith.subf %104, %107 : vector<8x8xf32>
    %109 = math.exp %108 : vector<8x8xf32>
    %cst_50 = arith.constant dense<0.000000e+00> : vector<8xf32>
    %110 = vector.multi_reduction <add>, %109, %cst_50 [1] : vector<8x8xf32> to vector<8xf32>
    %111 = vector.shape_cast %110 : vector<8xf32> to vector<8x1xf32>
    %112 = tpu.reciprocal %111 {approx = true} : vector<8x1xf32> -> vector<8x1xf32>
    %113 = vector.broadcast %112 : vector<8x1xf32> to vector<8x8xf32>
    %114 = arith.mulf %109, %113 : vector<8x8xf32>
    %115 = arith.truncf %114 : vector<8x8xf32> to vector<8x8xbf16>
    %cst_51 = arith.constant dense<0.000000e+00> : vector<8x8xf32>
    %116 = tpu.matmul %115, %103, %cst_51 {dimension_numbers = #tpu.dot_dimension_numbers<[1], [0], [0], [1], [0, 0, 1, 1], [], []>} : vector<8x8xbf16>, vector<8x8xbf16>, vector<8x8xf32> -> vector<8x8xf32>
    %117 = tpu.concatenate %59, %78, %97, %116 in 1 : vector<8x8xf32>, vector<8x8xf32>, vector<8x8xf32>, vector<8x8xf32> -> vector<8x32xf32>
    %118 = arith.truncf %117 : vector<8x32xf32> to vector<8x32xbf16>
    %cst_52 = arith.constant dense<0.000000e+00> : vector<8x32xf32>
    %119 = tpu.matmul %118, %27, %cst_52 {dimension_numbers = #tpu.dot_dimension_numbers<[1], [0], [0], [1], [0, 0, 1, 1], [], []>} : vector<8x32xbf16>, vector<32x32xbf16>, vector<8x32xf32> -> vector<8x32xf32>
    %120 = vector.broadcast %29 : vector<1x32xf32> to vector<8x32xf32>
    %121 = arith.addf %119, %120 : vector<8x32xf32>
    %122 = arith.addf %11, %121 : vector<8x32xf32>
    %cst_53 = arith.constant dense<0.000000e+00> : vector<8xf32>
    %123 = vector.multi_reduction <add>, %122, %cst_53 [1] : vector<8x32xf32> to vector<8xf32>
    %124 = vector.shape_cast %123 : vector<8xf32> to vector<8x1xf32>
    %cst_54 = arith.constant 3.200000e+01 : f32
    %125 = vector.broadcast %cst_54 : f32 to vector<8x1xf32>
    %126 = arith.divf %124, %125 : vector<8x1xf32>
    %127 = vector.broadcast %126 : vector<8x1xf32> to vector<8x32xf32>
    %128 = arith.subf %122, %127 : vector<8x32xf32>
    %129 = arith.mulf %128, %128 : vector<8x32xf32>
    %cst_55 = arith.constant dense<0.000000e+00> : vector<8xf32>
    %130 = vector.multi_reduction <add>, %129, %cst_55 [1] : vector<8x32xf32> to vector<8xf32>
    %131 = vector.shape_cast %130 : vector<8xf32> to vector<8x1xf32>
    %cst_56 = arith.constant 3.200000e+01 : f32
    %132 = vector.broadcast %cst_56 : f32 to vector<8x1xf32>
    %133 = arith.divf %131, %132 : vector<8x1xf32>
    %cst_57 = arith.constant 9.99999974E-6 : f32
    %134 = vector.broadcast %cst_57 : f32 to vector<8x1xf32>
    %135 = arith.addf %133, %134 : vector<8x1xf32>
    %136 = math.rsqrt %135 : vector<8x1xf32>
    %137 = vector.broadcast %136 : vector<8x1xf32> to vector<8x32xf32>
    %138 = arith.mulf %128, %137 : vector<8x32xf32>
    %139 = vector.broadcast %31 : vector<1x32xf32> to vector<8x32xf32>
    %140 = arith.mulf %138, %139 : vector<8x32xf32>
    %141 = vector.broadcast %33 : vector<1x32xf32> to vector<8x32xf32>
    %142 = arith.addf %140, %141 : vector<8x32xf32>
    %c0_58 = arith.constant 0 : index
    %c0_59 = arith.constant 0 : index
    %c0_60 = arith.constant 0 : index
    %143 = vector.load %arg14[%c0_58, %c0_59, %c0_60] : memref<2x32x64xbf16, #tpu.memory_space<vmem>>, vector<1x32x64xbf16>
    %144 = vector.shape_cast %143 : vector<1x32x64xbf16> to vector<32x64xbf16>
    %c0_61 = arith.constant 0 : index
    %c0_62 = arith.constant 0 : index
    %c0_63 = arith.constant 0 : index
    %145 = vector.load %arg15[%c0_61, %c0_62, %c0_63] : memref<2x1x64xf32, #tpu.memory_space<vmem>>, vector<1x1x64xf32>
    %146 = vector.shape_cast %145 : vector<1x1x64xf32> to vector<1x64xf32>
    %c0_64 = arith.constant 0 : index
    %c0_65 = arith.constant 0 : index
    %c0_66 = arith.constant 0 : index
    %147 = vector.load %arg16[%c0_64, %c0_65, %c0_66] : memref<2x64x32xbf16, #tpu.memory_space<vmem>>, vector<1x64x32xbf16>
    %148 = vector.shape_cast %147 : vector<1x64x32xbf16> to vector<64x32xbf16>
    %c0_67 = arith.constant 0 : index
    %c0_68 = arith.constant 0 : index
    %c0_69 = arith.constant 0 : index
    %149 = vector.load %arg17[%c0_67, %c0_68, %c0_69] : memref<2x1x32xf32, #tpu.memory_space<vmem>>, vector<1x1x32xf32>
    %150 = vector.shape_cast %149 : vector<1x1x32xf32> to vector<1x32xf32>
    %c0_70 = arith.constant 0 : index
    %c0_71 = arith.constant 0 : index
    %c0_72 = arith.constant 0 : index
    %151 = vector.load %arg18[%c0_70, %c0_71, %c0_72] : memref<2x1x32xf32, #tpu.memory_space<vmem>>, vector<1x1x32xf32>
    %152 = vector.shape_cast %151 : vector<1x1x32xf32> to vector<1x32xf32>
    %c0_73 = arith.constant 0 : index
    %c0_74 = arith.constant 0 : index
    %c0_75 = arith.constant 0 : index
    %153 = vector.load %arg19[%c0_73, %c0_74, %c0_75] : memref<2x1x32xf32, #tpu.memory_space<vmem>>, vector<1x1x32xf32>
    %154 = vector.shape_cast %153 : vector<1x1x32xf32> to vector<1x32xf32>
    %155 = arith.truncf %142 : vector<8x32xf32> to vector<8x32xbf16>
    %cst_76 = arith.constant dense<0.000000e+00> : vector<8x64xf32>
    %156 = tpu.matmul %155, %144, %cst_76 {dimension_numbers = #tpu.dot_dimension_numbers<[1], [0], [0], [1], [0, 0, 1, 1], [], []>} : vector<8x32xbf16>, vector<32x64xbf16>, vector<8x64xf32> -> vector<8x64xf32>
    %157 = vector.broadcast %146 : vector<1x64xf32> to vector<8x64xf32>
    %158 = arith.addf %156, %157 : vector<8x64xf32>
    %cst_77 = arith.constant 0.000000e+00 : f32
    %159 = vector.broadcast %cst_77 : f32 to vector<8x64xf32>
    %160 = arith.maximumf %158, %159 : vector<8x64xf32>
    %161 = arith.truncf %160 : vector<8x64xf32> to vector<8x64xbf16>
    %cst_78 = arith.constant dense<0.000000e+00> : vector<8x32xf32>
    %162 = tpu.matmul %161, %148, %cst_78 {dimension_numbers = #tpu.dot_dimension_numbers<[1], [0], [0], [1], [0, 0, 1, 1], [], []>} : vector<8x64xbf16>, vector<64x32xbf16>, vector<8x32xf32> -> vector<8x32xf32>
    %163 = arith.addf %142, %162 : vector<8x32xf32>
    %164 = vector.broadcast %150 : vector<1x32xf32> to vector<8x32xf32>
    %165 = arith.addf %163, %164 : vector<8x32xf32>
    %cst_79 = arith.constant dense<0.000000e+00> : vector<8xf32>
    %166 = vector.multi_reduction <add>, %165, %cst_79 [1] : vector<8x32xf32> to vector<8xf32>
    %167 = vector.shape_cast %166 : vector<8xf32> to vector<8x1xf32>
    %cst_80 = arith.constant 3.200000e+01 : f32
    %168 = vector.broadcast %cst_80 : f32 to vector<8x1xf32>
    %169 = arith.divf %167, %168 : vector<8x1xf32>
    %170 = vector.broadcast %169 : vector<8x1xf32> to vector<8x32xf32>
    %171 = arith.subf %165, %170 : vector<8x32xf32>
    %172 = arith.mulf %171, %171 : vector<8x32xf32>
    %cst_81 = arith.constant dense<0.000000e+00> : vector<8xf32>
    %173 = vector.multi_reduction <add>, %172, %cst_81 [1] : vector<8x32xf32> to vector<8xf32>
    %174 = vector.shape_cast %173 : vector<8xf32> to vector<8x1xf32>
    %cst_82 = arith.constant 3.200000e+01 : f32
    %175 = vector.broadcast %cst_82 : f32 to vector<8x1xf32>
    %176 = arith.divf %174, %175 : vector<8x1xf32>
    %cst_83 = arith.constant 9.99999974E-6 : f32
    %177 = vector.broadcast %cst_83 : f32 to vector<8x1xf32>
    %178 = arith.addf %176, %177 : vector<8x1xf32>
    %179 = math.rsqrt %178 : vector<8x1xf32>
    %180 = vector.broadcast %179 : vector<8x1xf32> to vector<8x32xf32>
    %181 = arith.mulf %171, %180 : vector<8x32xf32>
    %182 = vector.broadcast %152 : vector<1x32xf32> to vector<8x32xf32>
    %183 = arith.mulf %181, %182 : vector<8x32xf32>
    %184 = vector.broadcast %154 : vector<1x32xf32> to vector<8x32xf32>
    %185 = arith.addf %183, %184 : vector<8x32xf32>
    %c1 = arith.constant 1 : index
    %c0_84 = arith.constant 0 : index
    %c0_85 = arith.constant 0 : index
    %186 = vector.load %arg8[%c1, %c0_84, %c0_85] : memref<2x32x96xbf16, #tpu.memory_space<vmem>>, vector<1x32x96xbf16>
    %187 = vector.shape_cast %186 : vector<1x32x96xbf16> to vector<32x96xbf16>
    %c1_86 = arith.constant 1 : index
    %c0_87 = arith.constant 0 : index
    %c0_88 = arith.constant 0 : index
    %188 = vector.load %arg9[%c1_86, %c0_87, %c0_88] : memref<2x1x96xf32, #tpu.memory_space<vmem>>, vector<1x1x96xf32>
    %189 = vector.shape_cast %188 : vector<1x1x96xf32> to vector<1x96xf32>
    %c1_89 = arith.constant 1 : index
    %c0_90 = arith.constant 0 : index
    %c0_91 = arith.constant 0 : index
    %190 = vector.load %arg10[%c1_89, %c0_90, %c0_91] : memref<2x32x32xbf16, #tpu.memory_space<vmem>>, vector<1x32x32xbf16>
    %191 = vector.shape_cast %190 : vector<1x32x32xbf16> to vector<32x32xbf16>
    %c1_92 = arith.constant 1 : index
    %c0_93 = arith.constant 0 : index
    %c0_94 = arith.constant 0 : index
    %192 = vector.load %arg11[%c1_92, %c0_93, %c0_94] : memref<2x1x32xf32, #tpu.memory_space<vmem>>, vector<1x1x32xf32>
    %193 = vector.shape_cast %192 : vector<1x1x32xf32> to vector<1x32xf32>
    %c1_95 = arith.constant 1 : index
    %c0_96 = arith.constant 0 : index
    %c0_97 = arith.constant 0 : index
    %194 = vector.load %arg12[%c1_95, %c0_96, %c0_97] : memref<2x1x32xf32, #tpu.memory_space<vmem>>, vector<1x1x32xf32>
    %195 = vector.shape_cast %194 : vector<1x1x32xf32> to vector<1x32xf32>
    %c1_98 = arith.constant 1 : index
    %c0_99 = arith.constant 0 : index
    %c0_100 = arith.constant 0 : index
    %196 = vector.load %arg13[%c1_98, %c0_99, %c0_100] : memref<2x1x32xf32, #tpu.memory_space<vmem>>, vector<1x1x32xf32>
    %197 = vector.shape_cast %196 : vector<1x1x32xf32> to vector<1x32xf32>
    %198 = arith.truncf %185 : vector<8x32xf32> to vector<8x32xbf16>
    %cst_101 = arith.constant dense<0.000000e+00> : vector<8x96xf32>
    %199 = tpu.matmul %198, %187, %cst_101 {dimension_numbers = #tpu.dot_dimension_numbers<[1], [0], [0], [1], [0, 0, 1, 1], [], []>} : vector<8x32xbf16>, vector<32x96xbf16>, vector<8x96xf32> -> vector<8x96xf32>
    %200 = vector.broadcast %189 : vector<1x96xf32> to vector<8x96xf32>
    %201 = arith.addf %199, %200 : vector<8x96xf32>
    %202 = vector.extract_strided_slice %201 {offsets = [0, 0], sizes = [8, 32], strides = [1, 1]} : vector<8x96xf32> to vector<8x32xf32>
    %203 = vector.extract_strided_slice %201 {offsets = [0, 32], sizes = [8, 32], strides = [1, 1]} : vector<8x96xf32> to vector<8x32xf32>
    %204 = vector.extract_strided_slice %201 {offsets = [0, 64], sizes = [8, 32], strides = [1, 1]} : vector<8x96xf32> to vector<8x32xf32>
    %205 = vector.extract_strided_slice %202 {offsets = [0, 0], sizes = [8, 8], strides = [1, 1]} : vector<8x32xf32> to vector<8x8xf32>
    %206 = arith.truncf %205 : vector<8x8xf32> to vector<8x8xbf16>
    %207 = vector.extract_strided_slice %203 {offsets = [0, 0], sizes = [8, 8], strides = [1, 1]} : vector<8x32xf32> to vector<8x8xf32>
    %208 = arith.truncf %207 : vector<8x8xf32> to vector<8x8xbf16>
    %209 = vector.extract_strided_slice %204 {offsets = [0, 0], sizes = [8, 8], strides = [1, 1]} : vector<8x32xf32> to vector<8x8xf32>
    %210 = arith.truncf %209 : vector<8x8xf32> to vector<8x8xbf16>
    %cst_102 = arith.constant dense<0.000000e+00> : vector<8x8xf32>
    %211 = tpu.matmul %206, %208, %cst_102 {dimension_numbers = #tpu.dot_dimension_numbers<[1], [1], [0], [0], [0, 0, 1, 0], [], []>} : vector<8x8xbf16>, vector<8x8xbf16>, vector<8x8xf32> -> vector<8x8xf32>
    %cst_103 = arith.constant dense<0xFF800000> : vector<8xf32>
    %212 = vector.multi_reduction <maximumf>, %211, %cst_103 [1] : vector<8x8xf32> to vector<8xf32>
    %213 = vector.shape_cast %212 : vector<8xf32> to vector<8x1xf32>
    %214 = vector.broadcast %213 : vector<8x1xf32> to vector<8x8xf32>
    %215 = arith.subf %211, %214 : vector<8x8xf32>
    %216 = math.exp %215 : vector<8x8xf32>
    %cst_104 = arith.constant dense<0.000000e+00> : vector<8xf32>
    %217 = vector.multi_reduction <add>, %216, %cst_104 [1] : vector<8x8xf32> to vector<8xf32>
    %218 = vector.shape_cast %217 : vector<8xf32> to vector<8x1xf32>
    %219 = tpu.reciprocal %218 {approx = true} : vector<8x1xf32> -> vector<8x1xf32>
    %220 = vector.broadcast %219 : vector<8x1xf32> to vector<8x8xf32>
    %221 = arith.mulf %216, %220 : vector<8x8xf32>
    %222 = arith.truncf %221 : vector<8x8xf32> to vector<8x8xbf16>
    %cst_105 = arith.constant dense<0.000000e+00> : vector<8x8xf32>
    %223 = tpu.matmul %222, %210, %cst_105 {dimension_numbers = #tpu.dot_dimension_numbers<[1], [0], [0], [1], [0, 0, 1, 1], [], []>} : vector<8x8xbf16>, vector<8x8xbf16>, vector<8x8xf32> -> vector<8x8xf32>
    %224 = vector.extract_strided_slice %202 {offsets = [0, 8], sizes = [8, 8], strides = [1, 1]} : vector<8x32xf32> to vector<8x8xf32>
    %225 = arith.truncf %224 : vector<8x8xf32> to vector<8x8xbf16>
    %226 = vector.extract_strided_slice %203 {offsets = [0, 8], sizes = [8, 8], strides = [1, 1]} : vector<8x32xf32> to vector<8x8xf32>
    %227 = arith.truncf %226 : vector<8x8xf32> to vector<8x8xbf16>
    %228 = vector.extract_strided_slice %204 {offsets = [0, 8], sizes = [8, 8], strides = [1, 1]} : vector<8x32xf32> to vector<8x8xf32>
    %229 = arith.truncf %228 : vector<8x8xf32> to vector<8x8xbf16>
    %cst_106 = arith.constant dense<0.000000e+00> : vector<8x8xf32>
    %230 = tpu.matmul %225, %227, %cst_106 {dimension_numbers = #tpu.dot_dimension_numbers<[1], [1], [0], [0], [0, 0, 1, 0], [], []>} : vector<8x8xbf16>, vector<8x8xbf16>, vector<8x8xf32> -> vector<8x8xf32>
    %cst_107 = arith.constant dense<0xFF800000> : vector<8xf32>
    %231 = vector.multi_reduction <maximumf>, %230, %cst_107 [1] : vector<8x8xf32> to vector<8xf32>
    %232 = vector.shape_cast %231 : vector<8xf32> to vector<8x1xf32>
    %233 = vector.broadcast %232 : vector<8x1xf32> to vector<8x8xf32>
    %234 = arith.subf %230, %233 : vector<8x8xf32>
    %235 = math.exp %234 : vector<8x8xf32>
    %cst_108 = arith.constant dense<0.000000e+00> : vector<8xf32>
    %236 = vector.multi_reduction <add>, %235, %cst_108 [1] : vector<8x8xf32> to vector<8xf32>
    %237 = vector.shape_cast %236 : vector<8xf32> to vector<8x1xf32>
    %238 = tpu.reciprocal %237 {approx = true} : vector<8x1xf32> -> vector<8x1xf32>
    %239 = vector.broadcast %238 : vector<8x1xf32> to vector<8x8xf32>
    %240 = arith.mulf %235, %239 : vector<8x8xf32>
    %241 = arith.truncf %240 : vector<8x8xf32> to vector<8x8xbf16>
    %cst_109 = arith.constant dense<0.000000e+00> : vector<8x8xf32>
    %242 = tpu.matmul %241, %229, %cst_109 {dimension_numbers = #tpu.dot_dimension_numbers<[1], [0], [0], [1], [0, 0, 1, 1], [], []>} : vector<8x8xbf16>, vector<8x8xbf16>, vector<8x8xf32> -> vector<8x8xf32>
    %243 = vector.extract_strided_slice %202 {offsets = [0, 16], sizes = [8, 8], strides = [1, 1]} : vector<8x32xf32> to vector<8x8xf32>
    %244 = arith.truncf %243 : vector<8x8xf32> to vector<8x8xbf16>
    %245 = vector.extract_strided_slice %203 {offsets = [0, 16], sizes = [8, 8], strides = [1, 1]} : vector<8x32xf32> to vector<8x8xf32>
    %246 = arith.truncf %245 : vector<8x8xf32> to vector<8x8xbf16>
    %247 = vector.extract_strided_slice %204 {offsets = [0, 16], sizes = [8, 8], strides = [1, 1]} : vector<8x32xf32> to vector<8x8xf32>
    %248 = arith.truncf %247 : vector<8x8xf32> to vector<8x8xbf16>
    %cst_110 = arith.constant dense<0.000000e+00> : vector<8x8xf32>
    %249 = tpu.matmul %244, %246, %cst_110 {dimension_numbers = #tpu.dot_dimension_numbers<[1], [1], [0], [0], [0, 0, 1, 0], [], []>} : vector<8x8xbf16>, vector<8x8xbf16>, vector<8x8xf32> -> vector<8x8xf32>
    %cst_111 = arith.constant dense<0xFF800000> : vector<8xf32>
    %250 = vector.multi_reduction <maximumf>, %249, %cst_111 [1] : vector<8x8xf32> to vector<8xf32>
    %251 = vector.shape_cast %250 : vector<8xf32> to vector<8x1xf32>
    %252 = vector.broadcast %251 : vector<8x1xf32> to vector<8x8xf32>
    %253 = arith.subf %249, %252 : vector<8x8xf32>
    %254 = math.exp %253 : vector<8x8xf32>
    %cst_112 = arith.constant dense<0.000000e+00> : vector<8xf32>
    %255 = vector.multi_reduction <add>, %254, %cst_112 [1] : vector<8x8xf32> to vector<8xf32>
    %256 = vector.shape_cast %255 : vector<8xf32> to vector<8x1xf32>
    %257 = tpu.reciprocal %256 {approx = true} : vector<8x1xf32> -> vector<8x1xf32>
    %258 = vector.broadcast %257 : vector<8x1xf32> to vector<8x8xf32>
    %259 = arith.mulf %254, %258 : vector<8x8xf32>
    %260 = arith.truncf %259 : vector<8x8xf32> to vector<8x8xbf16>
    %cst_113 = arith.constant dense<0.000000e+00> : vector<8x8xf32>
    %261 = tpu.matmul %260, %248, %cst_113 {dimension_numbers = #tpu.dot_dimension_numbers<[1], [0], [0], [1], [0, 0, 1, 1], [], []>} : vector<8x8xbf16>, vector<8x8xbf16>, vector<8x8xf32> -> vector<8x8xf32>
    %262 = vector.extract_strided_slice %202 {offsets = [0, 24], sizes = [8, 8], strides = [1, 1]} : vector<8x32xf32> to vector<8x8xf32>
    %263 = arith.truncf %262 : vector<8x8xf32> to vector<8x8xbf16>
    %264 = vector.extract_strided_slice %203 {offsets = [0, 24], sizes = [8, 8], strides = [1, 1]} : vector<8x32xf32> to vector<8x8xf32>
    %265 = arith.truncf %264 : vector<8x8xf32> to vector<8x8xbf16>
    %266 = vector.extract_strided_slice %204 {offsets = [0, 24], sizes = [8, 8], strides = [1, 1]} : vector<8x32xf32> to vector<8x8xf32>
    %267 = arith.truncf %266 : vector<8x8xf32> to vector<8x8xbf16>
    %cst_114 = arith.constant dense<0.000000e+00> : vector<8x8xf32>
    %268 = tpu.matmul %263, %265, %cst_114 {dimension_numbers = #tpu.dot_dimension_numbers<[1], [1], [0], [0], [0, 0, 1, 0], [], []>} : vector<8x8xbf16>, vector<8x8xbf16>, vector<8x8xf32> -> vector<8x8xf32>
    %cst_115 = arith.constant dense<0xFF800000> : vector<8xf32>
    %269 = vector.multi_reduction <maximumf>, %268, %cst_115 [1] : vector<8x8xf32> to vector<8xf32>
    %270 = vector.shape_cast %269 : vector<8xf32> to vector<8x1xf32>
    %271 = vector.broadcast %270 : vector<8x1xf32> to vector<8x8xf32>
    %272 = arith.subf %268, %271 : vector<8x8xf32>
    %273 = math.exp %272 : vector<8x8xf32>
    %cst_116 = arith.constant dense<0.000000e+00> : vector<8xf32>
    %274 = vector.multi_reduction <add>, %273, %cst_116 [1] : vector<8x8xf32> to vector<8xf32>
    %275 = vector.shape_cast %274 : vector<8xf32> to vector<8x1xf32>
    %276 = tpu.reciprocal %275 {approx = true} : vector<8x1xf32> -> vector<8x1xf32>
    %277 = vector.broadcast %276 : vector<8x1xf32> to vector<8x8xf32>
    %278 = arith.mulf %273, %277 : vector<8x8xf32>
    %279 = arith.truncf %278 : vector<8x8xf32> to vector<8x8xbf16>
    %cst_117 = arith.constant dense<0.000000e+00> : vector<8x8xf32>
    %280 = tpu.matmul %279, %267, %cst_117 {dimension_numbers = #tpu.dot_dimension_numbers<[1], [0], [0], [1], [0, 0, 1, 1], [], []>} : vector<8x8xbf16>, vector<8x8xbf16>, vector<8x8xf32> -> vector<8x8xf32>
    %281 = tpu.concatenate %223, %242, %261, %280 in 1 : vector<8x8xf32>, vector<8x8xf32>, vector<8x8xf32>, vector<8x8xf32> -> vector<8x32xf32>
    %282 = arith.truncf %281 : vector<8x32xf32> to vector<8x32xbf16>
    %cst_118 = arith.constant dense<0.000000e+00> : vector<8x32xf32>
    %283 = tpu.matmul %282, %191, %cst_118 {dimension_numbers = #tpu.dot_dimension_numbers<[1], [0], [0], [1], [0, 0, 1, 1], [], []>} : vector<8x32xbf16>, vector<32x32xbf16>, vector<8x32xf32> -> vector<8x32xf32>
    %284 = vector.broadcast %193 : vector<1x32xf32> to vector<8x32xf32>
    %285 = arith.addf %283, %284 : vector<8x32xf32>
    %286 = arith.addf %185, %285 : vector<8x32xf32>
    %cst_119 = arith.constant dense<0.000000e+00> : vector<8xf32>
    %287 = vector.multi_reduction <add>, %286, %cst_119 [1] : vector<8x32xf32> to vector<8xf32>
    %288 = vector.shape_cast %287 : vector<8xf32> to vector<8x1xf32>
    %cst_120 = arith.constant 3.200000e+01 : f32
    %289 = vector.broadcast %cst_120 : f32 to vector<8x1xf32>
    %290 = arith.divf %288, %289 : vector<8x1xf32>
    %291 = vector.broadcast %290 : vector<8x1xf32> to vector<8x32xf32>
    %292 = arith.subf %286, %291 : vector<8x32xf32>
    %293 = arith.mulf %292, %292 : vector<8x32xf32>
    %cst_121 = arith.constant dense<0.000000e+00> : vector<8xf32>
    %294 = vector.multi_reduction <add>, %293, %cst_121 [1] : vector<8x32xf32> to vector<8xf32>
    %295 = vector.shape_cast %294 : vector<8xf32> to vector<8x1xf32>
    %cst_122 = arith.constant 3.200000e+01 : f32
    %296 = vector.broadcast %cst_122 : f32 to vector<8x1xf32>
    %297 = arith.divf %295, %296 : vector<8x1xf32>
    %cst_123 = arith.constant 9.99999974E-6 : f32
    %298 = vector.broadcast %cst_123 : f32 to vector<8x1xf32>
    %299 = arith.addf %297, %298 : vector<8x1xf32>
    %300 = math.rsqrt %299 : vector<8x1xf32>
    %301 = vector.broadcast %300 : vector<8x1xf32> to vector<8x32xf32>
    %302 = arith.mulf %292, %301 : vector<8x32xf32>
    %303 = vector.broadcast %195 : vector<1x32xf32> to vector<8x32xf32>
    %304 = arith.mulf %302, %303 : vector<8x32xf32>
    %305 = vector.broadcast %197 : vector<1x32xf32> to vector<8x32xf32>
    %306 = arith.addf %304, %305 : vector<8x32xf32>
    %c1_124 = arith.constant 1 : index
    %c0_125 = arith.constant 0 : index
    %c0_126 = arith.constant 0 : index
    %307 = vector.load %arg14[%c1_124, %c0_125, %c0_126] : memref<2x32x64xbf16, #tpu.memory_space<vmem>>, vector<1x32x64xbf16>
    %308 = vector.shape_cast %307 : vector<1x32x64xbf16> to vector<32x64xbf16>
    %c1_127 = arith.constant 1 : index
    %c0_128 = arith.constant 0 : index
    %c0_129 = arith.constant 0 : index
    %309 = vector.load %arg15[%c1_127, %c0_128, %c0_129] : memref<2x1x64xf32, #tpu.memory_space<vmem>>, vector<1x1x64xf32>
    %310 = vector.shape_cast %309 : vector<1x1x64xf32> to vector<1x64xf32>
    %c1_130 = arith.constant 1 : index
    %c0_131 = arith.constant 0 : index
    %c0_132 = arith.constant 0 : index
    %311 = vector.load %arg16[%c1_130, %c0_131, %c0_132] : memref<2x64x32xbf16, #tpu.memory_space<vmem>>, vector<1x64x32xbf16>
    %312 = vector.shape_cast %311 : vector<1x64x32xbf16> to vector<64x32xbf16>
    %c1_133 = arith.constant 1 : index
    %c0_134 = arith.constant 0 : index
    %c0_135 = arith.constant 0 : index
    %313 = vector.load %arg17[%c1_133, %c0_134, %c0_135] : memref<2x1x32xf32, #tpu.memory_space<vmem>>, vector<1x1x32xf32>
    %314 = vector.shape_cast %313 : vector<1x1x32xf32> to vector<1x32xf32>
    %c1_136 = arith.constant 1 : index
    %c0_137 = arith.constant 0 : index
    %c0_138 = arith.constant 0 : index
    %315 = vector.load %arg18[%c1_136, %c0_137, %c0_138] : memref<2x1x32xf32, #tpu.memory_space<vmem>>, vector<1x1x32xf32>
    %316 = vector.shape_cast %315 : vector<1x1x32xf32> to vector<1x32xf32>
    %c1_139 = arith.constant 1 : index
    %c0_140 = arith.constant 0 : index
    %c0_141 = arith.constant 0 : index
    %317 = vector.load %arg19[%c1_139, %c0_140, %c0_141] : memref<2x1x32xf32, #tpu.memory_space<vmem>>, vector<1x1x32xf32>
    %318 = vector.shape_cast %317 : vector<1x1x32xf32> to vector<1x32xf32>
    %319 = arith.truncf %306 : vector<8x32xf32> to vector<8x32xbf16>
    %cst_142 = arith.constant dense<0.000000e+00> : vector<8x64xf32>
    %320 = tpu.matmul %319, %308, %cst_142 {dimension_numbers = #tpu.dot_dimension_numbers<[1], [0], [0], [1], [0, 0, 1, 1], [], []>} : vector<8x32xbf16>, vector<32x64xbf16>, vector<8x64xf32> -> vector<8x64xf32>
    %321 = vector.broadcast %310 : vector<1x64xf32> to vector<8x64xf32>
    %322 = arith.addf %320, %321 : vector<8x64xf32>
    %cst_143 = arith.constant 0.000000e+00 : f32
    %323 = vector.broadcast %cst_143 : f32 to vector<8x64xf32>
    %324 = arith.maximumf %322, %323 : vector<8x64xf32>
    %325 = arith.truncf %324 : vector<8x64xf32> to vector<8x64xbf16>
    %cst_144 = arith.constant dense<0.000000e+00> : vector<8x32xf32>
    %326 = tpu.matmul %325, %312, %cst_144 {dimension_numbers = #tpu.dot_dimension_numbers<[1], [0], [0], [1], [0, 0, 1, 1], [], []>} : vector<8x64xbf16>, vector<64x32xbf16>, vector<8x32xf32> -> vector<8x32xf32>
    %327 = arith.addf %306, %326 : vector<8x32xf32>
    %328 = vector.broadcast %314 : vector<1x32xf32> to vector<8x32xf32>
    %329 = arith.addf %327, %328 : vector<8x32xf32>
    %cst_145 = arith.constant dense<0.000000e+00> : vector<8xf32>
    %330 = vector.multi_reduction <add>, %329, %cst_145 [1] : vector<8x32xf32> to vector<8xf32>
    %331 = vector.shape_cast %330 : vector<8xf32> to vector<8x1xf32>
    %cst_146 = arith.constant 3.200000e+01 : f32
    %332 = vector.broadcast %cst_146 : f32 to vector<8x1xf32>
    %333 = arith.divf %331, %332 : vector<8x1xf32>
    %334 = vector.broadcast %333 : vector<8x1xf32> to vector<8x32xf32>
    %335 = arith.subf %329, %334 : vector<8x32xf32>
    %336 = arith.mulf %335, %335 : vector<8x32xf32>
    %cst_147 = arith.constant dense<0.000000e+00> : vector<8xf32>
    %337 = vector.multi_reduction <add>, %336, %cst_147 [1] : vector<8x32xf32> to vector<8xf32>
    %338 = vector.shape_cast %337 : vector<8xf32> to vector<8x1xf32>
    %cst_148 = arith.constant 3.200000e+01 : f32
    %339 = vector.broadcast %cst_148 : f32 to vector<8x1xf32>
    %340 = arith.divf %338, %339 : vector<8x1xf32>
    %cst_149 = arith.constant 9.99999974E-6 : f32
    %341 = vector.broadcast %cst_149 : f32 to vector<8x1xf32>
    %342 = arith.addf %340, %341 : vector<8x1xf32>
    %343 = math.rsqrt %342 : vector<8x1xf32>
    %344 = vector.broadcast %343 : vector<8x1xf32> to vector<8x32xf32>
    %345 = arith.mulf %335, %344 : vector<8x32xf32>
    %346 = vector.broadcast %316 : vector<1x32xf32> to vector<8x32xf32>
    %347 = arith.mulf %345, %346 : vector<8x32xf32>
    %348 = vector.broadcast %318 : vector<1x32xf32> to vector<8x32xf32>
    %349 = arith.addf %347, %348 : vector<8x32xf32>
    %c0_150 = arith.constant 0 : index
    %c0_151 = arith.constant 0 : index
    %c0_152 = arith.constant 0 : index
    %350 = vector.load %arg20[%c0_150, %c0_151, %c0_152] : memref<2x32x96xbf16, #tpu.memory_space<vmem>>, vector<1x32x96xbf16>
    %351 = vector.shape_cast %350 : vector<1x32x96xbf16> to vector<32x96xbf16>
    %c0_153 = arith.constant 0 : index
    %c0_154 = arith.constant 0 : index
    %c0_155 = arith.constant 0 : index
    %352 = vector.load %arg21[%c0_153, %c0_154, %c0_155] : memref<2x1x96xf32, #tpu.memory_space<vmem>>, vector<1x1x96xf32>
    %353 = vector.shape_cast %352 : vector<1x1x96xf32> to vector<1x96xf32>
    %c0_156 = arith.constant 0 : index
    %c0_157 = arith.constant 0 : index
    %c0_158 = arith.constant 0 : index
    %354 = vector.load %arg22[%c0_156, %c0_157, %c0_158] : memref<2x32x32xbf16, #tpu.memory_space<vmem>>, vector<1x32x32xbf16>
    %355 = vector.shape_cast %354 : vector<1x32x32xbf16> to vector<32x32xbf16>
    %c0_159 = arith.constant 0 : index
    %c0_160 = arith.constant 0 : index
    %c0_161 = arith.constant 0 : index
    %356 = vector.load %arg23[%c0_159, %c0_160, %c0_161] : memref<2x1x32xf32, #tpu.memory_space<vmem>>, vector<1x1x32xf32>
    %357 = vector.shape_cast %356 : vector<1x1x32xf32> to vector<1x32xf32>
    %c0_162 = arith.constant 0 : index
    %c0_163 = arith.constant 0 : index
    %c0_164 = arith.constant 0 : index
    %358 = vector.load %arg24[%c0_162, %c0_163, %c0_164] : memref<2x1x32xf32, #tpu.memory_space<vmem>>, vector<1x1x32xf32>
    %359 = vector.shape_cast %358 : vector<1x1x32xf32> to vector<1x32xf32>
    %c0_165 = arith.constant 0 : index
    %c0_166 = arith.constant 0 : index
    %c0_167 = arith.constant 0 : index
    %360 = vector.load %arg25[%c0_165, %c0_166, %c0_167] : memref<2x1x32xf32, #tpu.memory_space<vmem>>, vector<1x1x32xf32>
    %361 = vector.shape_cast %360 : vector<1x1x32xf32> to vector<1x32xf32>
    %362 = arith.truncf %21 : vector<8x32xf32> to vector<8x32xbf16>
    %cst_168 = arith.constant dense<0.000000e+00> : vector<8x96xf32>
    %363 = tpu.matmul %362, %351, %cst_168 {dimension_numbers = #tpu.dot_dimension_numbers<[1], [0], [0], [1], [0, 0, 1, 1], [], []>} : vector<8x32xbf16>, vector<32x96xbf16>, vector<8x96xf32> -> vector<8x96xf32>
    %364 = vector.broadcast %353 : vector<1x96xf32> to vector<8x96xf32>
    %365 = arith.addf %363, %364 : vector<8x96xf32>
    %366 = vector.extract_strided_slice %365 {offsets = [0, 0], sizes = [8, 32], strides = [1, 1]} : vector<8x96xf32> to vector<8x32xf32>
    %367 = vector.extract_strided_slice %365 {offsets = [0, 32], sizes = [8, 32], strides = [1, 1]} : vector<8x96xf32> to vector<8x32xf32>
    %368 = vector.extract_strided_slice %365 {offsets = [0, 64], sizes = [8, 32], strides = [1, 1]} : vector<8x96xf32> to vector<8x32xf32>
    %369 = vector.extract_strided_slice %366 {offsets = [0, 0], sizes = [8, 8], strides = [1, 1]} : vector<8x32xf32> to vector<8x8xf32>
    %370 = arith.truncf %369 : vector<8x8xf32> to vector<8x8xbf16>
    %371 = vector.extract_strided_slice %367 {offsets = [0, 0], sizes = [8, 8], strides = [1, 1]} : vector<8x32xf32> to vector<8x8xf32>
    %372 = arith.truncf %371 : vector<8x8xf32> to vector<8x8xbf16>
    %373 = vector.extract_strided_slice %368 {offsets = [0, 0], sizes = [8, 8], strides = [1, 1]} : vector<8x32xf32> to vector<8x8xf32>
    %374 = arith.truncf %373 : vector<8x8xf32> to vector<8x8xbf16>
    %cst_169 = arith.constant dense<0.000000e+00> : vector<8x8xf32>
    %375 = tpu.matmul %370, %372, %cst_169 {dimension_numbers = #tpu.dot_dimension_numbers<[1], [1], [0], [0], [0, 0, 1, 0], [], []>} : vector<8x8xbf16>, vector<8x8xbf16>, vector<8x8xf32> -> vector<8x8xf32>
    %cst_170 = arith.constant dense<0xFF800000> : vector<8xf32>
    %376 = vector.multi_reduction <maximumf>, %375, %cst_170 [1] : vector<8x8xf32> to vector<8xf32>
    %377 = vector.shape_cast %376 : vector<8xf32> to vector<8x1xf32>
    %378 = vector.broadcast %377 : vector<8x1xf32> to vector<8x8xf32>
    %379 = arith.subf %375, %378 : vector<8x8xf32>
    %380 = math.exp %379 : vector<8x8xf32>
    %cst_171 = arith.constant dense<0.000000e+00> : vector<8xf32>
    %381 = vector.multi_reduction <add>, %380, %cst_171 [1] : vector<8x8xf32> to vector<8xf32>
    %382 = vector.shape_cast %381 : vector<8xf32> to vector<8x1xf32>
    %383 = tpu.reciprocal %382 {approx = true} : vector<8x1xf32> -> vector<8x1xf32>
    %384 = vector.broadcast %383 : vector<8x1xf32> to vector<8x8xf32>
    %385 = arith.mulf %380, %384 : vector<8x8xf32>
    %386 = arith.truncf %385 : vector<8x8xf32> to vector<8x8xbf16>
    %cst_172 = arith.constant dense<0.000000e+00> : vector<8x8xf32>
    %387 = tpu.matmul %386, %374, %cst_172 {dimension_numbers = #tpu.dot_dimension_numbers<[1], [0], [0], [1], [0, 0, 1, 1], [], []>} : vector<8x8xbf16>, vector<8x8xbf16>, vector<8x8xf32> -> vector<8x8xf32>
    %388 = vector.extract_strided_slice %366 {offsets = [0, 8], sizes = [8, 8], strides = [1, 1]} : vector<8x32xf32> to vector<8x8xf32>
    %389 = arith.truncf %388 : vector<8x8xf32> to vector<8x8xbf16>
    %390 = vector.extract_strided_slice %367 {offsets = [0, 8], sizes = [8, 8], strides = [1, 1]} : vector<8x32xf32> to vector<8x8xf32>
    %391 = arith.truncf %390 : vector<8x8xf32> to vector<8x8xbf16>
    %392 = vector.extract_strided_slice %368 {offsets = [0, 8], sizes = [8, 8], strides = [1, 1]} : vector<8x32xf32> to vector<8x8xf32>
    %393 = arith.truncf %392 : vector<8x8xf32> to vector<8x8xbf16>
    %cst_173 = arith.constant dense<0.000000e+00> : vector<8x8xf32>
    %394 = tpu.matmul %389, %391, %cst_173 {dimension_numbers = #tpu.dot_dimension_numbers<[1], [1], [0], [0], [0, 0, 1, 0], [], []>} : vector<8x8xbf16>, vector<8x8xbf16>, vector<8x8xf32> -> vector<8x8xf32>
    %cst_174 = arith.constant dense<0xFF800000> : vector<8xf32>
    %395 = vector.multi_reduction <maximumf>, %394, %cst_174 [1] : vector<8x8xf32> to vector<8xf32>
    %396 = vector.shape_cast %395 : vector<8xf32> to vector<8x1xf32>
    %397 = vector.broadcast %396 : vector<8x1xf32> to vector<8x8xf32>
    %398 = arith.subf %394, %397 : vector<8x8xf32>
    %399 = math.exp %398 : vector<8x8xf32>
    %cst_175 = arith.constant dense<0.000000e+00> : vector<8xf32>
    %400 = vector.multi_reduction <add>, %399, %cst_175 [1] : vector<8x8xf32> to vector<8xf32>
    %401 = vector.shape_cast %400 : vector<8xf32> to vector<8x1xf32>
    %402 = tpu.reciprocal %401 {approx = true} : vector<8x1xf32> -> vector<8x1xf32>
    %403 = vector.broadcast %402 : vector<8x1xf32> to vector<8x8xf32>
    %404 = arith.mulf %399, %403 : vector<8x8xf32>
    %405 = arith.truncf %404 : vector<8x8xf32> to vector<8x8xbf16>
    %cst_176 = arith.constant dense<0.000000e+00> : vector<8x8xf32>
    %406 = tpu.matmul %405, %393, %cst_176 {dimension_numbers = #tpu.dot_dimension_numbers<[1], [0], [0], [1], [0, 0, 1, 1], [], []>} : vector<8x8xbf16>, vector<8x8xbf16>, vector<8x8xf32> -> vector<8x8xf32>
    %407 = vector.extract_strided_slice %366 {offsets = [0, 16], sizes = [8, 8], strides = [1, 1]} : vector<8x32xf32> to vector<8x8xf32>
    %408 = arith.truncf %407 : vector<8x8xf32> to vector<8x8xbf16>
    %409 = vector.extract_strided_slice %367 {offsets = [0, 16], sizes = [8, 8], strides = [1, 1]} : vector<8x32xf32> to vector<8x8xf32>
    %410 = arith.truncf %409 : vector<8x8xf32> to vector<8x8xbf16>
    %411 = vector.extract_strided_slice %368 {offsets = [0, 16], sizes = [8, 8], strides = [1, 1]} : vector<8x32xf32> to vector<8x8xf32>
    %412 = arith.truncf %411 : vector<8x8xf32> to vector<8x8xbf16>
    %cst_177 = arith.constant dense<0.000000e+00> : vector<8x8xf32>
    %413 = tpu.matmul %408, %410, %cst_177 {dimension_numbers = #tpu.dot_dimension_numbers<[1], [1], [0], [0], [0, 0, 1, 0], [], []>} : vector<8x8xbf16>, vector<8x8xbf16>, vector<8x8xf32> -> vector<8x8xf32>
    %cst_178 = arith.constant dense<0xFF800000> : vector<8xf32>
    %414 = vector.multi_reduction <maximumf>, %413, %cst_178 [1] : vector<8x8xf32> to vector<8xf32>
    %415 = vector.shape_cast %414 : vector<8xf32> to vector<8x1xf32>
    %416 = vector.broadcast %415 : vector<8x1xf32> to vector<8x8xf32>
    %417 = arith.subf %413, %416 : vector<8x8xf32>
    %418 = math.exp %417 : vector<8x8xf32>
    %cst_179 = arith.constant dense<0.000000e+00> : vector<8xf32>
    %419 = vector.multi_reduction <add>, %418, %cst_179 [1] : vector<8x8xf32> to vector<8xf32>
    %420 = vector.shape_cast %419 : vector<8xf32> to vector<8x1xf32>
    %421 = tpu.reciprocal %420 {approx = true} : vector<8x1xf32> -> vector<8x1xf32>
    %422 = vector.broadcast %421 : vector<8x1xf32> to vector<8x8xf32>
    %423 = arith.mulf %418, %422 : vector<8x8xf32>
    %424 = arith.truncf %423 : vector<8x8xf32> to vector<8x8xbf16>
    %cst_180 = arith.constant dense<0.000000e+00> : vector<8x8xf32>
    %425 = tpu.matmul %424, %412, %cst_180 {dimension_numbers = #tpu.dot_dimension_numbers<[1], [0], [0], [1], [0, 0, 1, 1], [], []>} : vector<8x8xbf16>, vector<8x8xbf16>, vector<8x8xf32> -> vector<8x8xf32>
    %426 = vector.extract_strided_slice %366 {offsets = [0, 24], sizes = [8, 8], strides = [1, 1]} : vector<8x32xf32> to vector<8x8xf32>
    %427 = arith.truncf %426 : vector<8x8xf32> to vector<8x8xbf16>
    %428 = vector.extract_strided_slice %367 {offsets = [0, 24], sizes = [8, 8], strides = [1, 1]} : vector<8x32xf32> to vector<8x8xf32>
    %429 = arith.truncf %428 : vector<8x8xf32> to vector<8x8xbf16>
    %430 = vector.extract_strided_slice %368 {offsets = [0, 24], sizes = [8, 8], strides = [1, 1]} : vector<8x32xf32> to vector<8x8xf32>
    %431 = arith.truncf %430 : vector<8x8xf32> to vector<8x8xbf16>
    %cst_181 = arith.constant dense<0.000000e+00> : vector<8x8xf32>
    %432 = tpu.matmul %427, %429, %cst_181 {dimension_numbers = #tpu.dot_dimension_numbers<[1], [1], [0], [0], [0, 0, 1, 0], [], []>} : vector<8x8xbf16>, vector<8x8xbf16>, vector<8x8xf32> -> vector<8x8xf32>
    %cst_182 = arith.constant dense<0xFF800000> : vector<8xf32>
    %433 = vector.multi_reduction <maximumf>, %432, %cst_182 [1] : vector<8x8xf32> to vector<8xf32>
    %434 = vector.shape_cast %433 : vector<8xf32> to vector<8x1xf32>
    %435 = vector.broadcast %434 : vector<8x1xf32> to vector<8x8xf32>
    %436 = arith.subf %432, %435 : vector<8x8xf32>
    %437 = math.exp %436 : vector<8x8xf32>
    %cst_183 = arith.constant dense<0.000000e+00> : vector<8xf32>
    %438 = vector.multi_reduction <add>, %437, %cst_183 [1] : vector<8x8xf32> to vector<8xf32>
    %439 = vector.shape_cast %438 : vector<8xf32> to vector<8x1xf32>
    %440 = tpu.reciprocal %439 {approx = true} : vector<8x1xf32> -> vector<8x1xf32>
    %441 = vector.broadcast %440 : vector<8x1xf32> to vector<8x8xf32>
    %442 = arith.mulf %437, %441 : vector<8x8xf32>
    %443 = arith.truncf %442 : vector<8x8xf32> to vector<8x8xbf16>
    %cst_184 = arith.constant dense<0.000000e+00> : vector<8x8xf32>
    %444 = tpu.matmul %443, %431, %cst_184 {dimension_numbers = #tpu.dot_dimension_numbers<[1], [0], [0], [1], [0, 0, 1, 1], [], []>} : vector<8x8xbf16>, vector<8x8xbf16>, vector<8x8xf32> -> vector<8x8xf32>
    %445 = tpu.concatenate %387, %406, %425, %444 in 1 : vector<8x8xf32>, vector<8x8xf32>, vector<8x8xf32>, vector<8x8xf32> -> vector<8x32xf32>
    %446 = arith.truncf %445 : vector<8x32xf32> to vector<8x32xbf16>
    %cst_185 = arith.constant dense<0.000000e+00> : vector<8x32xf32>
    %447 = tpu.matmul %446, %355, %cst_185 {dimension_numbers = #tpu.dot_dimension_numbers<[1], [0], [0], [1], [0, 0, 1, 1], [], []>} : vector<8x32xbf16>, vector<32x32xbf16>, vector<8x32xf32> -> vector<8x32xf32>
    %448 = vector.broadcast %357 : vector<1x32xf32> to vector<8x32xf32>
    %449 = arith.addf %447, %448 : vector<8x32xf32>
    %450 = arith.addf %21, %449 : vector<8x32xf32>
    %cst_186 = arith.constant dense<0.000000e+00> : vector<8xf32>
    %451 = vector.multi_reduction <add>, %450, %cst_186 [1] : vector<8x32xf32> to vector<8xf32>
    %452 = vector.shape_cast %451 : vector<8xf32> to vector<8x1xf32>
    %cst_187 = arith.constant 3.200000e+01 : f32
    %453 = vector.broadcast %cst_187 : f32 to vector<8x1xf32>
    %454 = arith.divf %452, %453 : vector<8x1xf32>
    %455 = vector.broadcast %454 : vector<8x1xf32> to vector<8x32xf32>
    %456 = arith.subf %450, %455 : vector<8x32xf32>
    %457 = arith.mulf %456, %456 : vector<8x32xf32>
    %cst_188 = arith.constant dense<0.000000e+00> : vector<8xf32>
    %458 = vector.multi_reduction <add>, %457, %cst_188 [1] : vector<8x32xf32> to vector<8xf32>
    %459 = vector.shape_cast %458 : vector<8xf32> to vector<8x1xf32>
    %cst_189 = arith.constant 3.200000e+01 : f32
    %460 = vector.broadcast %cst_189 : f32 to vector<8x1xf32>
    %461 = arith.divf %459, %460 : vector<8x1xf32>
    %cst_190 = arith.constant 9.99999974E-6 : f32
    %462 = vector.broadcast %cst_190 : f32 to vector<8x1xf32>
    %463 = arith.addf %461, %462 : vector<8x1xf32>
    %464 = math.rsqrt %463 : vector<8x1xf32>
    %465 = vector.broadcast %464 : vector<8x1xf32> to vector<8x32xf32>
    %466 = arith.mulf %456, %465 : vector<8x32xf32>
    %467 = vector.broadcast %359 : vector<1x32xf32> to vector<8x32xf32>
    %468 = arith.mulf %466, %467 : vector<8x32xf32>
    %469 = vector.broadcast %361 : vector<1x32xf32> to vector<8x32xf32>
    %470 = arith.addf %468, %469 : vector<8x32xf32>
    %c0_191 = arith.constant 0 : index
    %c0_192 = arith.constant 0 : index
    %c0_193 = arith.constant 0 : index
    %471 = vector.load %arg26[%c0_191, %c0_192, %c0_193] : memref<2x32x32xbf16, #tpu.memory_space<vmem>>, vector<1x32x32xbf16>
    %472 = vector.shape_cast %471 : vector<1x32x32xbf16> to vector<32x32xbf16>
    %c0_194 = arith.constant 0 : index
    %c0_195 = arith.constant 0 : index
    %c0_196 = arith.constant 0 : index
    %473 = vector.load %arg27[%c0_194, %c0_195, %c0_196] : memref<2x1x32xf32, #tpu.memory_space<vmem>>, vector<1x1x32xf32>
    %474 = vector.shape_cast %473 : vector<1x1x32xf32> to vector<1x32xf32>
    %c0_197 = arith.constant 0 : index
    %c0_198 = arith.constant 0 : index
    %c0_199 = arith.constant 0 : index
    %475 = vector.load %arg28[%c0_197, %c0_198, %c0_199] : memref<2x32x64xbf16, #tpu.memory_space<vmem>>, vector<1x32x64xbf16>
    %476 = vector.shape_cast %475 : vector<1x32x64xbf16> to vector<32x64xbf16>
    %c0_200 = arith.constant 0 : index
    %c0_201 = arith.constant 0 : index
    %c0_202 = arith.constant 0 : index
    %477 = vector.load %arg29[%c0_200, %c0_201, %c0_202] : memref<2x1x64xf32, #tpu.memory_space<vmem>>, vector<1x1x64xf32>
    %478 = vector.shape_cast %477 : vector<1x1x64xf32> to vector<1x64xf32>
    %c0_203 = arith.constant 0 : index
    %c0_204 = arith.constant 0 : index
    %c0_205 = arith.constant 0 : index
    %479 = vector.load %arg30[%c0_203, %c0_204, %c0_205] : memref<2x32x32xbf16, #tpu.memory_space<vmem>>, vector<1x32x32xbf16>
    %480 = vector.shape_cast %479 : vector<1x32x32xbf16> to vector<32x32xbf16>
    %c0_206 = arith.constant 0 : index
    %c0_207 = arith.constant 0 : index
    %c0_208 = arith.constant 0 : index
    %481 = vector.load %arg31[%c0_206, %c0_207, %c0_208] : memref<2x1x32xf32, #tpu.memory_space<vmem>>, vector<1x1x32xf32>
    %482 = vector.shape_cast %481 : vector<1x1x32xf32> to vector<1x32xf32>
    %c0_209 = arith.constant 0 : index
    %c0_210 = arith.constant 0 : index
    %c0_211 = arith.constant 0 : index
    %483 = vector.load %arg32[%c0_209, %c0_210, %c0_211] : memref<2x1x32xf32, #tpu.memory_space<vmem>>, vector<1x1x32xf32>
    %484 = vector.shape_cast %483 : vector<1x1x32xf32> to vector<1x32xf32>
    %c0_212 = arith.constant 0 : index
    %c0_213 = arith.constant 0 : index
    %c0_214 = arith.constant 0 : index
    %485 = vector.load %arg33[%c0_212, %c0_213, %c0_214] : memref<2x1x32xf32, #tpu.memory_space<vmem>>, vector<1x1x32xf32>
    %486 = vector.shape_cast %485 : vector<1x1x32xf32> to vector<1x32xf32>
    %487 = arith.truncf %470 : vector<8x32xf32> to vector<8x32xbf16>
    %cst_215 = arith.constant dense<0.000000e+00> : vector<8x32xf32>
    %488 = tpu.matmul %487, %472, %cst_215 {dimension_numbers = #tpu.dot_dimension_numbers<[1], [0], [0], [1], [0, 0, 1, 1], [], []>} : vector<8x32xbf16>, vector<32x32xbf16>, vector<8x32xf32> -> vector<8x32xf32>
    %489 = vector.broadcast %474 : vector<1x32xf32> to vector<8x32xf32>
    %490 = arith.addf %488, %489 : vector<8x32xf32>
    %491 = arith.truncf %349 : vector<8x32xf32> to vector<8x32xbf16>
    %cst_216 = arith.constant dense<0.000000e+00> : vector<8x64xf32>
    %492 = tpu.matmul %491, %476, %cst_216 {dimension_numbers = #tpu.dot_dimension_numbers<[1], [0], [0], [1], [0, 0, 1, 1], [], []>} : vector<8x32xbf16>, vector<32x64xbf16>, vector<8x64xf32> -> vector<8x64xf32>
    %493 = vector.broadcast %478 : vector<1x64xf32> to vector<8x64xf32>
    %494 = arith.addf %492, %493 : vector<8x64xf32>
    %495 = vector.extract_strided_slice %494 {offsets = [0, 0], sizes = [8, 32], strides = [1, 1]} : vector<8x64xf32> to vector<8x32xf32>
    %496 = vector.extract_strided_slice %494 {offsets = [0, 32], sizes = [8, 32], strides = [1, 1]} : vector<8x64xf32> to vector<8x32xf32>
    %497 = vector.extract_strided_slice %490 {offsets = [0, 0], sizes = [8, 8], strides = [1, 1]} : vector<8x32xf32> to vector<8x8xf32>
    %498 = arith.truncf %497 : vector<8x8xf32> to vector<8x8xbf16>
    %499 = vector.extract_strided_slice %495 {offsets = [0, 0], sizes = [8, 8], strides = [1, 1]} : vector<8x32xf32> to vector<8x8xf32>
    %500 = arith.truncf %499 : vector<8x8xf32> to vector<8x8xbf16>
    %501 = vector.extract_strided_slice %496 {offsets = [0, 0], sizes = [8, 8], strides = [1, 1]} : vector<8x32xf32> to vector<8x8xf32>
    %502 = arith.truncf %501 : vector<8x8xf32> to vector<8x8xbf16>
    %cst_217 = arith.constant dense<0.000000e+00> : vector<8x8xf32>
    %503 = tpu.matmul %498, %500, %cst_217 {dimension_numbers = #tpu.dot_dimension_numbers<[1], [1], [0], [0], [0, 0, 1, 0], [], []>} : vector<8x8xbf16>, vector<8x8xbf16>, vector<8x8xf32> -> vector<8x8xf32>
    %cst_218 = arith.constant dense<0xFF800000> : vector<8xf32>
    %504 = vector.multi_reduction <maximumf>, %503, %cst_218 [1] : vector<8x8xf32> to vector<8xf32>
    %505 = vector.shape_cast %504 : vector<8xf32> to vector<8x1xf32>
    %506 = vector.broadcast %505 : vector<8x1xf32> to vector<8x8xf32>
    %507 = arith.subf %503, %506 : vector<8x8xf32>
    %508 = math.exp %507 : vector<8x8xf32>
    %cst_219 = arith.constant dense<0.000000e+00> : vector<8xf32>
    %509 = vector.multi_reduction <add>, %508, %cst_219 [1] : vector<8x8xf32> to vector<8xf32>
    %510 = vector.shape_cast %509 : vector<8xf32> to vector<8x1xf32>
    %511 = tpu.reciprocal %510 {approx = true} : vector<8x1xf32> -> vector<8x1xf32>
    %512 = vector.broadcast %511 : vector<8x1xf32> to vector<8x8xf32>
    %513 = arith.mulf %508, %512 : vector<8x8xf32>
    %514 = arith.truncf %513 : vector<8x8xf32> to vector<8x8xbf16>
    %cst_220 = arith.constant dense<0.000000e+00> : vector<8x8xf32>
    %515 = tpu.matmul %514, %502, %cst_220 {dimension_numbers = #tpu.dot_dimension_numbers<[1], [0], [0], [1], [0, 0, 1, 1], [], []>} : vector<8x8xbf16>, vector<8x8xbf16>, vector<8x8xf32> -> vector<8x8xf32>
    %516 = vector.extract_strided_slice %490 {offsets = [0, 8], sizes = [8, 8], strides = [1, 1]} : vector<8x32xf32> to vector<8x8xf32>
    %517 = arith.truncf %516 : vector<8x8xf32> to vector<8x8xbf16>
    %518 = vector.extract_strided_slice %495 {offsets = [0, 8], sizes = [8, 8], strides = [1, 1]} : vector<8x32xf32> to vector<8x8xf32>
    %519 = arith.truncf %518 : vector<8x8xf32> to vector<8x8xbf16>
    %520 = vector.extract_strided_slice %496 {offsets = [0, 8], sizes = [8, 8], strides = [1, 1]} : vector<8x32xf32> to vector<8x8xf32>
    %521 = arith.truncf %520 : vector<8x8xf32> to vector<8x8xbf16>
    %cst_221 = arith.constant dense<0.000000e+00> : vector<8x8xf32>
    %522 = tpu.matmul %517, %519, %cst_221 {dimension_numbers = #tpu.dot_dimension_numbers<[1], [1], [0], [0], [0, 0, 1, 0], [], []>} : vector<8x8xbf16>, vector<8x8xbf16>, vector<8x8xf32> -> vector<8x8xf32>
    %cst_222 = arith.constant dense<0xFF800000> : vector<8xf32>
    %523 = vector.multi_reduction <maximumf>, %522, %cst_222 [1] : vector<8x8xf32> to vector<8xf32>
    %524 = vector.shape_cast %523 : vector<8xf32> to vector<8x1xf32>
    %525 = vector.broadcast %524 : vector<8x1xf32> to vector<8x8xf32>
    %526 = arith.subf %522, %525 : vector<8x8xf32>
    %527 = math.exp %526 : vector<8x8xf32>
    %cst_223 = arith.constant dense<0.000000e+00> : vector<8xf32>
    %528 = vector.multi_reduction <add>, %527, %cst_223 [1] : vector<8x8xf32> to vector<8xf32>
    %529 = vector.shape_cast %528 : vector<8xf32> to vector<8x1xf32>
    %530 = tpu.reciprocal %529 {approx = true} : vector<8x1xf32> -> vector<8x1xf32>
    %531 = vector.broadcast %530 : vector<8x1xf32> to vector<8x8xf32>
    %532 = arith.mulf %527, %531 : vector<8x8xf32>
    %533 = arith.truncf %532 : vector<8x8xf32> to vector<8x8xbf16>
    %cst_224 = arith.constant dense<0.000000e+00> : vector<8x8xf32>
    %534 = tpu.matmul %533, %521, %cst_224 {dimension_numbers = #tpu.dot_dimension_numbers<[1], [0], [0], [1], [0, 0, 1, 1], [], []>} : vector<8x8xbf16>, vector<8x8xbf16>, vector<8x8xf32> -> vector<8x8xf32>
    %535 = vector.extract_strided_slice %490 {offsets = [0, 16], sizes = [8, 8], strides = [1, 1]} : vector<8x32xf32> to vector<8x8xf32>
    %536 = arith.truncf %535 : vector<8x8xf32> to vector<8x8xbf16>
    %537 = vector.extract_strided_slice %495 {offsets = [0, 16], sizes = [8, 8], strides = [1, 1]} : vector<8x32xf32> to vector<8x8xf32>
    %538 = arith.truncf %537 : vector<8x8xf32> to vector<8x8xbf16>
    %539 = vector.extract_strided_slice %496 {offsets = [0, 16], sizes = [8, 8], strides = [1, 1]} : vector<8x32xf32> to vector<8x8xf32>
    %540 = arith.truncf %539 : vector<8x8xf32> to vector<8x8xbf16>
    %cst_225 = arith.constant dense<0.000000e+00> : vector<8x8xf32>
    %541 = tpu.matmul %536, %538, %cst_225 {dimension_numbers = #tpu.dot_dimension_numbers<[1], [1], [0], [0], [0, 0, 1, 0], [], []>} : vector<8x8xbf16>, vector<8x8xbf16>, vector<8x8xf32> -> vector<8x8xf32>
    %cst_226 = arith.constant dense<0xFF800000> : vector<8xf32>
    %542 = vector.multi_reduction <maximumf>, %541, %cst_226 [1] : vector<8x8xf32> to vector<8xf32>
    %543 = vector.shape_cast %542 : vector<8xf32> to vector<8x1xf32>
    %544 = vector.broadcast %543 : vector<8x1xf32> to vector<8x8xf32>
    %545 = arith.subf %541, %544 : vector<8x8xf32>
    %546 = math.exp %545 : vector<8x8xf32>
    %cst_227 = arith.constant dense<0.000000e+00> : vector<8xf32>
    %547 = vector.multi_reduction <add>, %546, %cst_227 [1] : vector<8x8xf32> to vector<8xf32>
    %548 = vector.shape_cast %547 : vector<8xf32> to vector<8x1xf32>
    %549 = tpu.reciprocal %548 {approx = true} : vector<8x1xf32> -> vector<8x1xf32>
    %550 = vector.broadcast %549 : vector<8x1xf32> to vector<8x8xf32>
    %551 = arith.mulf %546, %550 : vector<8x8xf32>
    %552 = arith.truncf %551 : vector<8x8xf32> to vector<8x8xbf16>
    %cst_228 = arith.constant dense<0.000000e+00> : vector<8x8xf32>
    %553 = tpu.matmul %552, %540, %cst_228 {dimension_numbers = #tpu.dot_dimension_numbers<[1], [0], [0], [1], [0, 0, 1, 1], [], []>} : vector<8x8xbf16>, vector<8x8xbf16>, vector<8x8xf32> -> vector<8x8xf32>
    %554 = vector.extract_strided_slice %490 {offsets = [0, 24], sizes = [8, 8], strides = [1, 1]} : vector<8x32xf32> to vector<8x8xf32>
    %555 = arith.truncf %554 : vector<8x8xf32> to vector<8x8xbf16>
    %556 = vector.extract_strided_slice %495 {offsets = [0, 24], sizes = [8, 8], strides = [1, 1]} : vector<8x32xf32> to vector<8x8xf32>
    %557 = arith.truncf %556 : vector<8x8xf32> to vector<8x8xbf16>
    %558 = vector.extract_strided_slice %496 {offsets = [0, 24], sizes = [8, 8], strides = [1, 1]} : vector<8x32xf32> to vector<8x8xf32>
    %559 = arith.truncf %558 : vector<8x8xf32> to vector<8x8xbf16>
    %cst_229 = arith.constant dense<0.000000e+00> : vector<8x8xf32>
    %560 = tpu.matmul %555, %557, %cst_229 {dimension_numbers = #tpu.dot_dimension_numbers<[1], [1], [0], [0], [0, 0, 1, 0], [], []>} : vector<8x8xbf16>, vector<8x8xbf16>, vector<8x8xf32> -> vector<8x8xf32>
    %cst_230 = arith.constant dense<0xFF800000> : vector<8xf32>
    %561 = vector.multi_reduction <maximumf>, %560, %cst_230 [1] : vector<8x8xf32> to vector<8xf32>
    %562 = vector.shape_cast %561 : vector<8xf32> to vector<8x1xf32>
    %563 = vector.broadcast %562 : vector<8x1xf32> to vector<8x8xf32>
    %564 = arith.subf %560, %563 : vector<8x8xf32>
    %565 = math.exp %564 : vector<8x8xf32>
    %cst_231 = arith.constant dense<0.000000e+00> : vector<8xf32>
    %566 = vector.multi_reduction <add>, %565, %cst_231 [1] : vector<8x8xf32> to vector<8xf32>
    %567 = vector.shape_cast %566 : vector<8xf32> to vector<8x1xf32>
    %568 = tpu.reciprocal %567 {approx = true} : vector<8x1xf32> -> vector<8x1xf32>
    %569 = vector.broadcast %568 : vector<8x1xf32> to vector<8x8xf32>
    %570 = arith.mulf %565, %569 : vector<8x8xf32>
    %571 = arith.truncf %570 : vector<8x8xf32> to vector<8x8xbf16>
    %cst_232 = arith.constant dense<0.000000e+00> : vector<8x8xf32>
    %572 = tpu.matmul %571, %559, %cst_232 {dimension_numbers = #tpu.dot_dimension_numbers<[1], [0], [0], [1], [0, 0, 1, 1], [], []>} : vector<8x8xbf16>, vector<8x8xbf16>, vector<8x8xf32> -> vector<8x8xf32>
    %573 = tpu.concatenate %515, %534, %553, %572 in 1 : vector<8x8xf32>, vector<8x8xf32>, vector<8x8xf32>, vector<8x8xf32> -> vector<8x32xf32>
    %574 = arith.truncf %573 : vector<8x32xf32> to vector<8x32xbf16>
    %cst_233 = arith.constant dense<0.000000e+00> : vector<8x32xf32>
    %575 = tpu.matmul %574, %480, %cst_233 {dimension_numbers = #tpu.dot_dimension_numbers<[1], [0], [0], [1], [0, 0, 1, 1], [], []>} : vector<8x32xbf16>, vector<32x32xbf16>, vector<8x32xf32> -> vector<8x32xf32>
    %576 = vector.broadcast %482 : vector<1x32xf32> to vector<8x32xf32>
    %577 = arith.addf %575, %576 : vector<8x32xf32>
    %578 = arith.addf %470, %577 : vector<8x32xf32>
    %cst_234 = arith.constant dense<0.000000e+00> : vector<8xf32>
    %579 = vector.multi_reduction <add>, %578, %cst_234 [1] : vector<8x32xf32> to vector<8xf32>
    %580 = vector.shape_cast %579 : vector<8xf32> to vector<8x1xf32>
    %cst_235 = arith.constant 3.200000e+01 : f32
    %581 = vector.broadcast %cst_235 : f32 to vector<8x1xf32>
    %582 = arith.divf %580, %581 : vector<8x1xf32>
    %583 = vector.broadcast %582 : vector<8x1xf32> to vector<8x32xf32>
    %584 = arith.subf %578, %583 : vector<8x32xf32>
    %585 = arith.mulf %584, %584 : vector<8x32xf32>
    %cst_236 = arith.constant dense<0.000000e+00> : vector<8xf32>
    %586 = vector.multi_reduction <add>, %585, %cst_236 [1] : vector<8x32xf32> to vector<8xf32>
    %587 = vector.shape_cast %586 : vector<8xf32> to vector<8x1xf32>
    %cst_237 = arith.constant 3.200000e+01 : f32
    %588 = vector.broadcast %cst_237 : f32 to vector<8x1xf32>
    %589 = arith.divf %587, %588 : vector<8x1xf32>
    %cst_238 = arith.constant 9.99999974E-6 : f32
    %590 = vector.broadcast %cst_238 : f32 to vector<8x1xf32>
    %591 = arith.addf %589, %590 : vector<8x1xf32>
    %592 = math.rsqrt %591 : vector<8x1xf32>
    %593 = vector.broadcast %592 : vector<8x1xf32> to vector<8x32xf32>
    %594 = arith.mulf %584, %593 : vector<8x32xf32>
    %595 = vector.broadcast %484 : vector<1x32xf32> to vector<8x32xf32>
    %596 = arith.mulf %594, %595 : vector<8x32xf32>
    %597 = vector.broadcast %486 : vector<1x32xf32> to vector<8x32xf32>
    %598 = arith.addf %596, %597 : vector<8x32xf32>
    %c0_239 = arith.constant 0 : index
    %c0_240 = arith.constant 0 : index
    %c0_241 = arith.constant 0 : index
    %599 = vector.load %arg34[%c0_239, %c0_240, %c0_241] : memref<2x32x64xbf16, #tpu.memory_space<vmem>>, vector<1x32x64xbf16>
    %600 = vector.shape_cast %599 : vector<1x32x64xbf16> to vector<32x64xbf16>
    %c0_242 = arith.constant 0 : index
    %c0_243 = arith.constant 0 : index
    %c0_244 = arith.constant 0 : index
    %601 = vector.load %arg35[%c0_242, %c0_243, %c0_244] : memref<2x1x64xf32, #tpu.memory_space<vmem>>, vector<1x1x64xf32>
    %602 = vector.shape_cast %601 : vector<1x1x64xf32> to vector<1x64xf32>
    %c0_245 = arith.constant 0 : index
    %c0_246 = arith.constant 0 : index
    %c0_247 = arith.constant 0 : index
    %603 = vector.load %arg36[%c0_245, %c0_246, %c0_247] : memref<2x64x32xbf16, #tpu.memory_space<vmem>>, vector<1x64x32xbf16>
    %604 = vector.shape_cast %603 : vector<1x64x32xbf16> to vector<64x32xbf16>
    %c0_248 = arith.constant 0 : index
    %c0_249 = arith.constant 0 : index
    %c0_250 = arith.constant 0 : index
    %605 = vector.load %arg37[%c0_248, %c0_249, %c0_250] : memref<2x1x32xf32, #tpu.memory_space<vmem>>, vector<1x1x32xf32>
    %606 = vector.shape_cast %605 : vector<1x1x32xf32> to vector<1x32xf32>
    %c0_251 = arith.constant 0 : index
    %c0_252 = arith.constant 0 : index
    %c0_253 = arith.constant 0 : index
    %607 = vector.load %arg38[%c0_251, %c0_252, %c0_253] : memref<2x1x32xf32, #tpu.memory_space<vmem>>, vector<1x1x32xf32>
    %608 = vector.shape_cast %607 : vector<1x1x32xf32> to vector<1x32xf32>
    %c0_254 = arith.constant 0 : index
    %c0_255 = arith.constant 0 : index
    %c0_256 = arith.constant 0 : index
    %609 = vector.load %arg39[%c0_254, %c0_255, %c0_256] : memref<2x1x32xf32, #tpu.memory_space<vmem>>, vector<1x1x32xf32>
    %610 = vector.shape_cast %609 : vector<1x1x32xf32> to vector<1x32xf32>
    %611 = arith.truncf %598 : vector<8x32xf32> to vector<8x32xbf16>
    %cst_257 = arith.constant dense<0.000000e+00> : vector<8x64xf32>
    %612 = tpu.matmul %611, %600, %cst_257 {dimension_numbers = #tpu.dot_dimension_numbers<[1], [0], [0], [1], [0, 0, 1, 1], [], []>} : vector<8x32xbf16>, vector<32x64xbf16>, vector<8x64xf32> -> vector<8x64xf32>
    %613 = vector.broadcast %602 : vector<1x64xf32> to vector<8x64xf32>
    %614 = arith.addf %612, %613 : vector<8x64xf32>
    %cst_258 = arith.constant 0.000000e+00 : f32
    %615 = vector.broadcast %cst_258 : f32 to vector<8x64xf32>
    %616 = arith.maximumf %614, %615 : vector<8x64xf32>
    %617 = arith.truncf %616 : vector<8x64xf32> to vector<8x64xbf16>
    %cst_259 = arith.constant dense<0.000000e+00> : vector<8x32xf32>
    %618 = tpu.matmul %617, %604, %cst_259 {dimension_numbers = #tpu.dot_dimension_numbers<[1], [0], [0], [1], [0, 0, 1, 1], [], []>} : vector<8x64xbf16>, vector<64x32xbf16>, vector<8x32xf32> -> vector<8x32xf32>
    %619 = arith.addf %598, %618 : vector<8x32xf32>
    %620 = vector.broadcast %606 : vector<1x32xf32> to vector<8x32xf32>
    %621 = arith.addf %619, %620 : vector<8x32xf32>
    %cst_260 = arith.constant dense<0.000000e+00> : vector<8xf32>
    %622 = vector.multi_reduction <add>, %621, %cst_260 [1] : vector<8x32xf32> to vector<8xf32>
    %623 = vector.shape_cast %622 : vector<8xf32> to vector<8x1xf32>
    %cst_261 = arith.constant 3.200000e+01 : f32
    %624 = vector.broadcast %cst_261 : f32 to vector<8x1xf32>
    %625 = arith.divf %623, %624 : vector<8x1xf32>
    %626 = vector.broadcast %625 : vector<8x1xf32> to vector<8x32xf32>
    %627 = arith.subf %621, %626 : vector<8x32xf32>
    %628 = arith.mulf %627, %627 : vector<8x32xf32>
    %cst_262 = arith.constant dense<0.000000e+00> : vector<8xf32>
    %629 = vector.multi_reduction <add>, %628, %cst_262 [1] : vector<8x32xf32> to vector<8xf32>
    %630 = vector.shape_cast %629 : vector<8xf32> to vector<8x1xf32>
    %cst_263 = arith.constant 3.200000e+01 : f32
    %631 = vector.broadcast %cst_263 : f32 to vector<8x1xf32>
    %632 = arith.divf %630, %631 : vector<8x1xf32>
    %cst_264 = arith.constant 9.99999974E-6 : f32
    %633 = vector.broadcast %cst_264 : f32 to vector<8x1xf32>
    %634 = arith.addf %632, %633 : vector<8x1xf32>
    %635 = math.rsqrt %634 : vector<8x1xf32>
    %636 = vector.broadcast %635 : vector<8x1xf32> to vector<8x32xf32>
    %637 = arith.mulf %627, %636 : vector<8x32xf32>
    %638 = vector.broadcast %608 : vector<1x32xf32> to vector<8x32xf32>
    %639 = arith.mulf %637, %638 : vector<8x32xf32>
    %640 = vector.broadcast %610 : vector<1x32xf32> to vector<8x32xf32>
    %641 = arith.addf %639, %640 : vector<8x32xf32>
    %c1_265 = arith.constant 1 : index
    %c0_266 = arith.constant 0 : index
    %c0_267 = arith.constant 0 : index
    %642 = vector.load %arg20[%c1_265, %c0_266, %c0_267] : memref<2x32x96xbf16, #tpu.memory_space<vmem>>, vector<1x32x96xbf16>
    %643 = vector.shape_cast %642 : vector<1x32x96xbf16> to vector<32x96xbf16>
    %c1_268 = arith.constant 1 : index
    %c0_269 = arith.constant 0 : index
    %c0_270 = arith.constant 0 : index
    %644 = vector.load %arg21[%c1_268, %c0_269, %c0_270] : memref<2x1x96xf32, #tpu.memory_space<vmem>>, vector<1x1x96xf32>
    %645 = vector.shape_cast %644 : vector<1x1x96xf32> to vector<1x96xf32>
    %c1_271 = arith.constant 1 : index
    %c0_272 = arith.constant 0 : index
    %c0_273 = arith.constant 0 : index
    %646 = vector.load %arg22[%c1_271, %c0_272, %c0_273] : memref<2x32x32xbf16, #tpu.memory_space<vmem>>, vector<1x32x32xbf16>
    %647 = vector.shape_cast %646 : vector<1x32x32xbf16> to vector<32x32xbf16>
    %c1_274 = arith.constant 1 : index
    %c0_275 = arith.constant 0 : index
    %c0_276 = arith.constant 0 : index
    %648 = vector.load %arg23[%c1_274, %c0_275, %c0_276] : memref<2x1x32xf32, #tpu.memory_space<vmem>>, vector<1x1x32xf32>
    %649 = vector.shape_cast %648 : vector<1x1x32xf32> to vector<1x32xf32>
    %c1_277 = arith.constant 1 : index
    %c0_278 = arith.constant 0 : index
    %c0_279 = arith.constant 0 : index
    %650 = vector.load %arg24[%c1_277, %c0_278, %c0_279] : memref<2x1x32xf32, #tpu.memory_space<vmem>>, vector<1x1x32xf32>
    %651 = vector.shape_cast %650 : vector<1x1x32xf32> to vector<1x32xf32>
    %c1_280 = arith.constant 1 : index
    %c0_281 = arith.constant 0 : index
    %c0_282 = arith.constant 0 : index
    %652 = vector.load %arg25[%c1_280, %c0_281, %c0_282] : memref<2x1x32xf32, #tpu.memory_space<vmem>>, vector<1x1x32xf32>
    %653 = vector.shape_cast %652 : vector<1x1x32xf32> to vector<1x32xf32>
    %654 = arith.truncf %641 : vector<8x32xf32> to vector<8x32xbf16>
    %cst_283 = arith.constant dense<0.000000e+00> : vector<8x96xf32>
    %655 = tpu.matmul %654, %643, %cst_283 {dimension_numbers = #tpu.dot_dimension_numbers<[1], [0], [0], [1], [0, 0, 1, 1], [], []>} : vector<8x32xbf16>, vector<32x96xbf16>, vector<8x96xf32> -> vector<8x96xf32>
    %656 = vector.broadcast %645 : vector<1x96xf32> to vector<8x96xf32>
    %657 = arith.addf %655, %656 : vector<8x96xf32>
    %658 = vector.extract_strided_slice %657 {offsets = [0, 0], sizes = [8, 32], strides = [1, 1]} : vector<8x96xf32> to vector<8x32xf32>
    %659 = vector.extract_strided_slice %657 {offsets = [0, 32], sizes = [8, 32], strides = [1, 1]} : vector<8x96xf32> to vector<8x32xf32>
    %660 = vector.extract_strided_slice %657 {offsets = [0, 64], sizes = [8, 32], strides = [1, 1]} : vector<8x96xf32> to vector<8x32xf32>
    %661 = vector.extract_strided_slice %658 {offsets = [0, 0], sizes = [8, 8], strides = [1, 1]} : vector<8x32xf32> to vector<8x8xf32>
    %662 = arith.truncf %661 : vector<8x8xf32> to vector<8x8xbf16>
    %663 = vector.extract_strided_slice %659 {offsets = [0, 0], sizes = [8, 8], strides = [1, 1]} : vector<8x32xf32> to vector<8x8xf32>
    %664 = arith.truncf %663 : vector<8x8xf32> to vector<8x8xbf16>
    %665 = vector.extract_strided_slice %660 {offsets = [0, 0], sizes = [8, 8], strides = [1, 1]} : vector<8x32xf32> to vector<8x8xf32>
    %666 = arith.truncf %665 : vector<8x8xf32> to vector<8x8xbf16>
    %cst_284 = arith.constant dense<0.000000e+00> : vector<8x8xf32>
    %667 = tpu.matmul %662, %664, %cst_284 {dimension_numbers = #tpu.dot_dimension_numbers<[1], [1], [0], [0], [0, 0, 1, 0], [], []>} : vector<8x8xbf16>, vector<8x8xbf16>, vector<8x8xf32> -> vector<8x8xf32>
    %cst_285 = arith.constant dense<0xFF800000> : vector<8xf32>
    %668 = vector.multi_reduction <maximumf>, %667, %cst_285 [1] : vector<8x8xf32> to vector<8xf32>
    %669 = vector.shape_cast %668 : vector<8xf32> to vector<8x1xf32>
    %670 = vector.broadcast %669 : vector<8x1xf32> to vector<8x8xf32>
    %671 = arith.subf %667, %670 : vector<8x8xf32>
    %672 = math.exp %671 : vector<8x8xf32>
    %cst_286 = arith.constant dense<0.000000e+00> : vector<8xf32>
    %673 = vector.multi_reduction <add>, %672, %cst_286 [1] : vector<8x8xf32> to vector<8xf32>
    %674 = vector.shape_cast %673 : vector<8xf32> to vector<8x1xf32>
    %675 = tpu.reciprocal %674 {approx = true} : vector<8x1xf32> -> vector<8x1xf32>
    %676 = vector.broadcast %675 : vector<8x1xf32> to vector<8x8xf32>
    %677 = arith.mulf %672, %676 : vector<8x8xf32>
    %678 = arith.truncf %677 : vector<8x8xf32> to vector<8x8xbf16>
    %cst_287 = arith.constant dense<0.000000e+00> : vector<8x8xf32>
    %679 = tpu.matmul %678, %666, %cst_287 {dimension_numbers = #tpu.dot_dimension_numbers<[1], [0], [0], [1], [0, 0, 1, 1], [], []>} : vector<8x8xbf16>, vector<8x8xbf16>, vector<8x8xf32> -> vector<8x8xf32>
    %680 = vector.extract_strided_slice %658 {offsets = [0, 8], sizes = [8, 8], strides = [1, 1]} : vector<8x32xf32> to vector<8x8xf32>
    %681 = arith.truncf %680 : vector<8x8xf32> to vector<8x8xbf16>
    %682 = vector.extract_strided_slice %659 {offsets = [0, 8], sizes = [8, 8], strides = [1, 1]} : vector<8x32xf32> to vector<8x8xf32>
    %683 = arith.truncf %682 : vector<8x8xf32> to vector<8x8xbf16>
    %684 = vector.extract_strided_slice %660 {offsets = [0, 8], sizes = [8, 8], strides = [1, 1]} : vector<8x32xf32> to vector<8x8xf32>
    %685 = arith.truncf %684 : vector<8x8xf32> to vector<8x8xbf16>
    %cst_288 = arith.constant dense<0.000000e+00> : vector<8x8xf32>
    %686 = tpu.matmul %681, %683, %cst_288 {dimension_numbers = #tpu.dot_dimension_numbers<[1], [1], [0], [0], [0, 0, 1, 0], [], []>} : vector<8x8xbf16>, vector<8x8xbf16>, vector<8x8xf32> -> vector<8x8xf32>
    %cst_289 = arith.constant dense<0xFF800000> : vector<8xf32>
    %687 = vector.multi_reduction <maximumf>, %686, %cst_289 [1] : vector<8x8xf32> to vector<8xf32>
    %688 = vector.shape_cast %687 : vector<8xf32> to vector<8x1xf32>
    %689 = vector.broadcast %688 : vector<8x1xf32> to vector<8x8xf32>
    %690 = arith.subf %686, %689 : vector<8x8xf32>
    %691 = math.exp %690 : vector<8x8xf32>
    %cst_290 = arith.constant dense<0.000000e+00> : vector<8xf32>
    %692 = vector.multi_reduction <add>, %691, %cst_290 [1] : vector<8x8xf32> to vector<8xf32>
    %693 = vector.shape_cast %692 : vector<8xf32> to vector<8x1xf32>
    %694 = tpu.reciprocal %693 {approx = true} : vector<8x1xf32> -> vector<8x1xf32>
    %695 = vector.broadcast %694 : vector<8x1xf32> to vector<8x8xf32>
    %696 = arith.mulf %691, %695 : vector<8x8xf32>
    %697 = arith.truncf %696 : vector<8x8xf32> to vector<8x8xbf16>
    %cst_291 = arith.constant dense<0.000000e+00> : vector<8x8xf32>
    %698 = tpu.matmul %697, %685, %cst_291 {dimension_numbers = #tpu.dot_dimension_numbers<[1], [0], [0], [1], [0, 0, 1, 1], [], []>} : vector<8x8xbf16>, vector<8x8xbf16>, vector<8x8xf32> -> vector<8x8xf32>
    %699 = vector.extract_strided_slice %658 {offsets = [0, 16], sizes = [8, 8], strides = [1, 1]} : vector<8x32xf32> to vector<8x8xf32>
    %700 = arith.truncf %699 : vector<8x8xf32> to vector<8x8xbf16>
    %701 = vector.extract_strided_slice %659 {offsets = [0, 16], sizes = [8, 8], strides = [1, 1]} : vector<8x32xf32> to vector<8x8xf32>
    %702 = arith.truncf %701 : vector<8x8xf32> to vector<8x8xbf16>
    %703 = vector.extract_strided_slice %660 {offsets = [0, 16], sizes = [8, 8], strides = [1, 1]} : vector<8x32xf32> to vector<8x8xf32>
    %704 = arith.truncf %703 : vector<8x8xf32> to vector<8x8xbf16>
    %cst_292 = arith.constant dense<0.000000e+00> : vector<8x8xf32>
    %705 = tpu.matmul %700, %702, %cst_292 {dimension_numbers = #tpu.dot_dimension_numbers<[1], [1], [0], [0], [0, 0, 1, 0], [], []>} : vector<8x8xbf16>, vector<8x8xbf16>, vector<8x8xf32> -> vector<8x8xf32>
    %cst_293 = arith.constant dense<0xFF800000> : vector<8xf32>
    %706 = vector.multi_reduction <maximumf>, %705, %cst_293 [1] : vector<8x8xf32> to vector<8xf32>
    %707 = vector.shape_cast %706 : vector<8xf32> to vector<8x1xf32>
    %708 = vector.broadcast %707 : vector<8x1xf32> to vector<8x8xf32>
    %709 = arith.subf %705, %708 : vector<8x8xf32>
    %710 = math.exp %709 : vector<8x8xf32>
    %cst_294 = arith.constant dense<0.000000e+00> : vector<8xf32>
    %711 = vector.multi_reduction <add>, %710, %cst_294 [1] : vector<8x8xf32> to vector<8xf32>
    %712 = vector.shape_cast %711 : vector<8xf32> to vector<8x1xf32>
    %713 = tpu.reciprocal %712 {approx = true} : vector<8x1xf32> -> vector<8x1xf32>
    %714 = vector.broadcast %713 : vector<8x1xf32> to vector<8x8xf32>
    %715 = arith.mulf %710, %714 : vector<8x8xf32>
    %716 = arith.truncf %715 : vector<8x8xf32> to vector<8x8xbf16>
    %cst_295 = arith.constant dense<0.000000e+00> : vector<8x8xf32>
    %717 = tpu.matmul %716, %704, %cst_295 {dimension_numbers = #tpu.dot_dimension_numbers<[1], [0], [0], [1], [0, 0, 1, 1], [], []>} : vector<8x8xbf16>, vector<8x8xbf16>, vector<8x8xf32> -> vector<8x8xf32>
    %718 = vector.extract_strided_slice %658 {offsets = [0, 24], sizes = [8, 8], strides = [1, 1]} : vector<8x32xf32> to vector<8x8xf32>
    %719 = arith.truncf %718 : vector<8x8xf32> to vector<8x8xbf16>
    %720 = vector.extract_strided_slice %659 {offsets = [0, 24], sizes = [8, 8], strides = [1, 1]} : vector<8x32xf32> to vector<8x8xf32>
    %721 = arith.truncf %720 : vector<8x8xf32> to vector<8x8xbf16>
    %722 = vector.extract_strided_slice %660 {offsets = [0, 24], sizes = [8, 8], strides = [1, 1]} : vector<8x32xf32> to vector<8x8xf32>
    %723 = arith.truncf %722 : vector<8x8xf32> to vector<8x8xbf16>
    %cst_296 = arith.constant dense<0.000000e+00> : vector<8x8xf32>
    %724 = tpu.matmul %719, %721, %cst_296 {dimension_numbers = #tpu.dot_dimension_numbers<[1], [1], [0], [0], [0, 0, 1, 0], [], []>} : vector<8x8xbf16>, vector<8x8xbf16>, vector<8x8xf32> -> vector<8x8xf32>
    %cst_297 = arith.constant dense<0xFF800000> : vector<8xf32>
    %725 = vector.multi_reduction <maximumf>, %724, %cst_297 [1] : vector<8x8xf32> to vector<8xf32>
    %726 = vector.shape_cast %725 : vector<8xf32> to vector<8x1xf32>
    %727 = vector.broadcast %726 : vector<8x1xf32> to vector<8x8xf32>
    %728 = arith.subf %724, %727 : vector<8x8xf32>
    %729 = math.exp %728 : vector<8x8xf32>
    %cst_298 = arith.constant dense<0.000000e+00> : vector<8xf32>
    %730 = vector.multi_reduction <add>, %729, %cst_298 [1] : vector<8x8xf32> to vector<8xf32>
    %731 = vector.shape_cast %730 : vector<8xf32> to vector<8x1xf32>
    %732 = tpu.reciprocal %731 {approx = true} : vector<8x1xf32> -> vector<8x1xf32>
    %733 = vector.broadcast %732 : vector<8x1xf32> to vector<8x8xf32>
    %734 = arith.mulf %729, %733 : vector<8x8xf32>
    %735 = arith.truncf %734 : vector<8x8xf32> to vector<8x8xbf16>
    %cst_299 = arith.constant dense<0.000000e+00> : vector<8x8xf32>
    %736 = tpu.matmul %735, %723, %cst_299 {dimension_numbers = #tpu.dot_dimension_numbers<[1], [0], [0], [1], [0, 0, 1, 1], [], []>} : vector<8x8xbf16>, vector<8x8xbf16>, vector<8x8xf32> -> vector<8x8xf32>
    %737 = tpu.concatenate %679, %698, %717, %736 in 1 : vector<8x8xf32>, vector<8x8xf32>, vector<8x8xf32>, vector<8x8xf32> -> vector<8x32xf32>
    %738 = arith.truncf %737 : vector<8x32xf32> to vector<8x32xbf16>
    %cst_300 = arith.constant dense<0.000000e+00> : vector<8x32xf32>
    %739 = tpu.matmul %738, %647, %cst_300 {dimension_numbers = #tpu.dot_dimension_numbers<[1], [0], [0], [1], [0, 0, 1, 1], [], []>} : vector<8x32xbf16>, vector<32x32xbf16>, vector<8x32xf32> -> vector<8x32xf32>
    %740 = vector.broadcast %649 : vector<1x32xf32> to vector<8x32xf32>
    %741 = arith.addf %739, %740 : vector<8x32xf32>
    %742 = arith.addf %641, %741 : vector<8x32xf32>
    %cst_301 = arith.constant dense<0.000000e+00> : vector<8xf32>
    %743 = vector.multi_reduction <add>, %742, %cst_301 [1] : vector<8x32xf32> to vector<8xf32>
    %744 = vector.shape_cast %743 : vector<8xf32> to vector<8x1xf32>
    %cst_302 = arith.constant 3.200000e+01 : f32
    %745 = vector.broadcast %cst_302 : f32 to vector<8x1xf32>
    %746 = arith.divf %744, %745 : vector<8x1xf32>
    %747 = vector.broadcast %746 : vector<8x1xf32> to vector<8x32xf32>
    %748 = arith.subf %742, %747 : vector<8x32xf32>
    %749 = arith.mulf %748, %748 : vector<8x32xf32>
    %cst_303 = arith.constant dense<0.000000e+00> : vector<8xf32>
    %750 = vector.multi_reduction <add>, %749, %cst_303 [1] : vector<8x32xf32> to vector<8xf32>
    %751 = vector.shape_cast %750 : vector<8xf32> to vector<8x1xf32>
    %cst_304 = arith.constant 3.200000e+01 : f32
    %752 = vector.broadcast %cst_304 : f32 to vector<8x1xf32>
    %753 = arith.divf %751, %752 : vector<8x1xf32>
    %cst_305 = arith.constant 9.99999974E-6 : f32
    %754 = vector.broadcast %cst_305 : f32 to vector<8x1xf32>
    %755 = arith.addf %753, %754 : vector<8x1xf32>
    %756 = math.rsqrt %755 : vector<8x1xf32>
    %757 = vector.broadcast %756 : vector<8x1xf32> to vector<8x32xf32>
    %758 = arith.mulf %748, %757 : vector<8x32xf32>
    %759 = vector.broadcast %651 : vector<1x32xf32> to vector<8x32xf32>
    %760 = arith.mulf %758, %759 : vector<8x32xf32>
    %761 = vector.broadcast %653 : vector<1x32xf32> to vector<8x32xf32>
    %762 = arith.addf %760, %761 : vector<8x32xf32>
    %c1_306 = arith.constant 1 : index
    %c0_307 = arith.constant 0 : index
    %c0_308 = arith.constant 0 : index
    %763 = vector.load %arg26[%c1_306, %c0_307, %c0_308] : memref<2x32x32xbf16, #tpu.memory_space<vmem>>, vector<1x32x32xbf16>
    %764 = vector.shape_cast %763 : vector<1x32x32xbf16> to vector<32x32xbf16>
    %c1_309 = arith.constant 1 : index
    %c0_310 = arith.constant 0 : index
    %c0_311 = arith.constant 0 : index
    %765 = vector.load %arg27[%c1_309, %c0_310, %c0_311] : memref<2x1x32xf32, #tpu.memory_space<vmem>>, vector<1x1x32xf32>
    %766 = vector.shape_cast %765 : vector<1x1x32xf32> to vector<1x32xf32>
    %c1_312 = arith.constant 1 : index
    %c0_313 = arith.constant 0 : index
    %c0_314 = arith.constant 0 : index
    %767 = vector.load %arg28[%c1_312, %c0_313, %c0_314] : memref<2x32x64xbf16, #tpu.memory_space<vmem>>, vector<1x32x64xbf16>
    %768 = vector.shape_cast %767 : vector<1x32x64xbf16> to vector<32x64xbf16>
    %c1_315 = arith.constant 1 : index
    %c0_316 = arith.constant 0 : index
    %c0_317 = arith.constant 0 : index
    %769 = vector.load %arg29[%c1_315, %c0_316, %c0_317] : memref<2x1x64xf32, #tpu.memory_space<vmem>>, vector<1x1x64xf32>
    %770 = vector.shape_cast %769 : vector<1x1x64xf32> to vector<1x64xf32>
    %c1_318 = arith.constant 1 : index
    %c0_319 = arith.constant 0 : index
    %c0_320 = arith.constant 0 : index
    %771 = vector.load %arg30[%c1_318, %c0_319, %c0_320] : memref<2x32x32xbf16, #tpu.memory_space<vmem>>, vector<1x32x32xbf16>
    %772 = vector.shape_cast %771 : vector<1x32x32xbf16> to vector<32x32xbf16>
    %c1_321 = arith.constant 1 : index
    %c0_322 = arith.constant 0 : index
    %c0_323 = arith.constant 0 : index
    %773 = vector.load %arg31[%c1_321, %c0_322, %c0_323] : memref<2x1x32xf32, #tpu.memory_space<vmem>>, vector<1x1x32xf32>
    %774 = vector.shape_cast %773 : vector<1x1x32xf32> to vector<1x32xf32>
    %c1_324 = arith.constant 1 : index
    %c0_325 = arith.constant 0 : index
    %c0_326 = arith.constant 0 : index
    %775 = vector.load %arg32[%c1_324, %c0_325, %c0_326] : memref<2x1x32xf32, #tpu.memory_space<vmem>>, vector<1x1x32xf32>
    %776 = vector.shape_cast %775 : vector<1x1x32xf32> to vector<1x32xf32>
    %c1_327 = arith.constant 1 : index
    %c0_328 = arith.constant 0 : index
    %c0_329 = arith.constant 0 : index
    %777 = vector.load %arg33[%c1_327, %c0_328, %c0_329] : memref<2x1x32xf32, #tpu.memory_space<vmem>>, vector<1x1x32xf32>
    %778 = vector.shape_cast %777 : vector<1x1x32xf32> to vector<1x32xf32>
    %779 = arith.truncf %762 : vector<8x32xf32> to vector<8x32xbf16>
    %cst_330 = arith.constant dense<0.000000e+00> : vector<8x32xf32>
    %780 = tpu.matmul %779, %764, %cst_330 {dimension_numbers = #tpu.dot_dimension_numbers<[1], [0], [0], [1], [0, 0, 1, 1], [], []>} : vector<8x32xbf16>, vector<32x32xbf16>, vector<8x32xf32> -> vector<8x32xf32>
    %781 = vector.broadcast %766 : vector<1x32xf32> to vector<8x32xf32>
    %782 = arith.addf %780, %781 : vector<8x32xf32>
    %783 = arith.truncf %349 : vector<8x32xf32> to vector<8x32xbf16>
    %cst_331 = arith.constant dense<0.000000e+00> : vector<8x64xf32>
    %784 = tpu.matmul %783, %768, %cst_331 {dimension_numbers = #tpu.dot_dimension_numbers<[1], [0], [0], [1], [0, 0, 1, 1], [], []>} : vector<8x32xbf16>, vector<32x64xbf16>, vector<8x64xf32> -> vector<8x64xf32>
    %785 = vector.broadcast %770 : vector<1x64xf32> to vector<8x64xf32>
    %786 = arith.addf %784, %785 : vector<8x64xf32>
    %787 = vector.extract_strided_slice %786 {offsets = [0, 0], sizes = [8, 32], strides = [1, 1]} : vector<8x64xf32> to vector<8x32xf32>
    %788 = vector.extract_strided_slice %786 {offsets = [0, 32], sizes = [8, 32], strides = [1, 1]} : vector<8x64xf32> to vector<8x32xf32>
    %789 = vector.extract_strided_slice %782 {offsets = [0, 0], sizes = [8, 8], strides = [1, 1]} : vector<8x32xf32> to vector<8x8xf32>
    %790 = arith.truncf %789 : vector<8x8xf32> to vector<8x8xbf16>
    %791 = vector.extract_strided_slice %787 {offsets = [0, 0], sizes = [8, 8], strides = [1, 1]} : vector<8x32xf32> to vector<8x8xf32>
    %792 = arith.truncf %791 : vector<8x8xf32> to vector<8x8xbf16>
    %793 = vector.extract_strided_slice %788 {offsets = [0, 0], sizes = [8, 8], strides = [1, 1]} : vector<8x32xf32> to vector<8x8xf32>
    %794 = arith.truncf %793 : vector<8x8xf32> to vector<8x8xbf16>
    %cst_332 = arith.constant dense<0.000000e+00> : vector<8x8xf32>
    %795 = tpu.matmul %790, %792, %cst_332 {dimension_numbers = #tpu.dot_dimension_numbers<[1], [1], [0], [0], [0, 0, 1, 0], [], []>} : vector<8x8xbf16>, vector<8x8xbf16>, vector<8x8xf32> -> vector<8x8xf32>
    %cst_333 = arith.constant dense<0xFF800000> : vector<8xf32>
    %796 = vector.multi_reduction <maximumf>, %795, %cst_333 [1] : vector<8x8xf32> to vector<8xf32>
    %797 = vector.shape_cast %796 : vector<8xf32> to vector<8x1xf32>
    %798 = vector.broadcast %797 : vector<8x1xf32> to vector<8x8xf32>
    %799 = arith.subf %795, %798 : vector<8x8xf32>
    %800 = math.exp %799 : vector<8x8xf32>
    %cst_334 = arith.constant dense<0.000000e+00> : vector<8xf32>
    %801 = vector.multi_reduction <add>, %800, %cst_334 [1] : vector<8x8xf32> to vector<8xf32>
    %802 = vector.shape_cast %801 : vector<8xf32> to vector<8x1xf32>
    %803 = tpu.reciprocal %802 {approx = true} : vector<8x1xf32> -> vector<8x1xf32>
    %804 = vector.broadcast %803 : vector<8x1xf32> to vector<8x8xf32>
    %805 = arith.mulf %800, %804 : vector<8x8xf32>
    %806 = arith.truncf %805 : vector<8x8xf32> to vector<8x8xbf16>
    %cst_335 = arith.constant dense<0.000000e+00> : vector<8x8xf32>
    %807 = tpu.matmul %806, %794, %cst_335 {dimension_numbers = #tpu.dot_dimension_numbers<[1], [0], [0], [1], [0, 0, 1, 1], [], []>} : vector<8x8xbf16>, vector<8x8xbf16>, vector<8x8xf32> -> vector<8x8xf32>
    %808 = vector.extract_strided_slice %782 {offsets = [0, 8], sizes = [8, 8], strides = [1, 1]} : vector<8x32xf32> to vector<8x8xf32>
    %809 = arith.truncf %808 : vector<8x8xf32> to vector<8x8xbf16>
    %810 = vector.extract_strided_slice %787 {offsets = [0, 8], sizes = [8, 8], strides = [1, 1]} : vector<8x32xf32> to vector<8x8xf32>
    %811 = arith.truncf %810 : vector<8x8xf32> to vector<8x8xbf16>
    %812 = vector.extract_strided_slice %788 {offsets = [0, 8], sizes = [8, 8], strides = [1, 1]} : vector<8x32xf32> to vector<8x8xf32>
    %813 = arith.truncf %812 : vector<8x8xf32> to vector<8x8xbf16>
    %cst_336 = arith.constant dense<0.000000e+00> : vector<8x8xf32>
    %814 = tpu.matmul %809, %811, %cst_336 {dimension_numbers = #tpu.dot_dimension_numbers<[1], [1], [0], [0], [0, 0, 1, 0], [], []>} : vector<8x8xbf16>, vector<8x8xbf16>, vector<8x8xf32> -> vector<8x8xf32>
    %cst_337 = arith.constant dense<0xFF800000> : vector<8xf32>
    %815 = vector.multi_reduction <maximumf>, %814, %cst_337 [1] : vector<8x8xf32> to vector<8xf32>
    %816 = vector.shape_cast %815 : vector<8xf32> to vector<8x1xf32>
    %817 = vector.broadcast %816 : vector<8x1xf32> to vector<8x8xf32>
    %818 = arith.subf %814, %817 : vector<8x8xf32>
    %819 = math.exp %818 : vector<8x8xf32>
    %cst_338 = arith.constant dense<0.000000e+00> : vector<8xf32>
    %820 = vector.multi_reduction <add>, %819, %cst_338 [1] : vector<8x8xf32> to vector<8xf32>
    %821 = vector.shape_cast %820 : vector<8xf32> to vector<8x1xf32>
    %822 = tpu.reciprocal %821 {approx = true} : vector<8x1xf32> -> vector<8x1xf32>
    %823 = vector.broadcast %822 : vector<8x1xf32> to vector<8x8xf32>
    %824 = arith.mulf %819, %823 : vector<8x8xf32>
    %825 = arith.truncf %824 : vector<8x8xf32> to vector<8x8xbf16>
    %cst_339 = arith.constant dense<0.000000e+00> : vector<8x8xf32>
    %826 = tpu.matmul %825, %813, %cst_339 {dimension_numbers = #tpu.dot_dimension_numbers<[1], [0], [0], [1], [0, 0, 1, 1], [], []>} : vector<8x8xbf16>, vector<8x8xbf16>, vector<8x8xf32> -> vector<8x8xf32>
    %827 = vector.extract_strided_slice %782 {offsets = [0, 16], sizes = [8, 8], strides = [1, 1]} : vector<8x32xf32> to vector<8x8xf32>
    %828 = arith.truncf %827 : vector<8x8xf32> to vector<8x8xbf16>
    %829 = vector.extract_strided_slice %787 {offsets = [0, 16], sizes = [8, 8], strides = [1, 1]} : vector<8x32xf32> to vector<8x8xf32>
    %830 = arith.truncf %829 : vector<8x8xf32> to vector<8x8xbf16>
    %831 = vector.extract_strided_slice %788 {offsets = [0, 16], sizes = [8, 8], strides = [1, 1]} : vector<8x32xf32> to vector<8x8xf32>
    %832 = arith.truncf %831 : vector<8x8xf32> to vector<8x8xbf16>
    %cst_340 = arith.constant dense<0.000000e+00> : vector<8x8xf32>
    %833 = tpu.matmul %828, %830, %cst_340 {dimension_numbers = #tpu.dot_dimension_numbers<[1], [1], [0], [0], [0, 0, 1, 0], [], []>} : vector<8x8xbf16>, vector<8x8xbf16>, vector<8x8xf32> -> vector<8x8xf32>
    %cst_341 = arith.constant dense<0xFF800000> : vector<8xf32>
    %834 = vector.multi_reduction <maximumf>, %833, %cst_341 [1] : vector<8x8xf32> to vector<8xf32>
    %835 = vector.shape_cast %834 : vector<8xf32> to vector<8x1xf32>
    %836 = vector.broadcast %835 : vector<8x1xf32> to vector<8x8xf32>
    %837 = arith.subf %833, %836 : vector<8x8xf32>
    %838 = math.exp %837 : vector<8x8xf32>
    %cst_342 = arith.constant dense<0.000000e+00> : vector<8xf32>
    %839 = vector.multi_reduction <add>, %838, %cst_342 [1] : vector<8x8xf32> to vector<8xf32>
    %840 = vector.shape_cast %839 : vector<8xf32> to vector<8x1xf32>
    %841 = tpu.reciprocal %840 {approx = true} : vector<8x1xf32> -> vector<8x1xf32>
    %842 = vector.broadcast %841 : vector<8x1xf32> to vector<8x8xf32>
    %843 = arith.mulf %838, %842 : vector<8x8xf32>
    %844 = arith.truncf %843 : vector<8x8xf32> to vector<8x8xbf16>
    %cst_343 = arith.constant dense<0.000000e+00> : vector<8x8xf32>
    %845 = tpu.matmul %844, %832, %cst_343 {dimension_numbers = #tpu.dot_dimension_numbers<[1], [0], [0], [1], [0, 0, 1, 1], [], []>} : vector<8x8xbf16>, vector<8x8xbf16>, vector<8x8xf32> -> vector<8x8xf32>
    %846 = vector.extract_strided_slice %782 {offsets = [0, 24], sizes = [8, 8], strides = [1, 1]} : vector<8x32xf32> to vector<8x8xf32>
    %847 = arith.truncf %846 : vector<8x8xf32> to vector<8x8xbf16>
    %848 = vector.extract_strided_slice %787 {offsets = [0, 24], sizes = [8, 8], strides = [1, 1]} : vector<8x32xf32> to vector<8x8xf32>
    %849 = arith.truncf %848 : vector<8x8xf32> to vector<8x8xbf16>
    %850 = vector.extract_strided_slice %788 {offsets = [0, 24], sizes = [8, 8], strides = [1, 1]} : vector<8x32xf32> to vector<8x8xf32>
    %851 = arith.truncf %850 : vector<8x8xf32> to vector<8x8xbf16>
    %cst_344 = arith.constant dense<0.000000e+00> : vector<8x8xf32>
    %852 = tpu.matmul %847, %849, %cst_344 {dimension_numbers = #tpu.dot_dimension_numbers<[1], [1], [0], [0], [0, 0, 1, 0], [], []>} : vector<8x8xbf16>, vector<8x8xbf16>, vector<8x8xf32> -> vector<8x8xf32>
    %cst_345 = arith.constant dense<0xFF800000> : vector<8xf32>
    %853 = vector.multi_reduction <maximumf>, %852, %cst_345 [1] : vector<8x8xf32> to vector<8xf32>
    %854 = vector.shape_cast %853 : vector<8xf32> to vector<8x1xf32>
    %855 = vector.broadcast %854 : vector<8x1xf32> to vector<8x8xf32>
    %856 = arith.subf %852, %855 : vector<8x8xf32>
    %857 = math.exp %856 : vector<8x8xf32>
    %cst_346 = arith.constant dense<0.000000e+00> : vector<8xf32>
    %858 = vector.multi_reduction <add>, %857, %cst_346 [1] : vector<8x8xf32> to vector<8xf32>
    %859 = vector.shape_cast %858 : vector<8xf32> to vector<8x1xf32>
    %860 = tpu.reciprocal %859 {approx = true} : vector<8x1xf32> -> vector<8x1xf32>
    %861 = vector.broadcast %860 : vector<8x1xf32> to vector<8x8xf32>
    %862 = arith.mulf %857, %861 : vector<8x8xf32>
    %863 = arith.truncf %862 : vector<8x8xf32> to vector<8x8xbf16>
    %cst_347 = arith.constant dense<0.000000e+00> : vector<8x8xf32>
    %864 = tpu.matmul %863, %851, %cst_347 {dimension_numbers = #tpu.dot_dimension_numbers<[1], [0], [0], [1], [0, 0, 1, 1], [], []>} : vector<8x8xbf16>, vector<8x8xbf16>, vector<8x8xf32> -> vector<8x8xf32>
    %865 = tpu.concatenate %807, %826, %845, %864 in 1 : vector<8x8xf32>, vector<8x8xf32>, vector<8x8xf32>, vector<8x8xf32> -> vector<8x32xf32>
    %866 = arith.truncf %865 : vector<8x32xf32> to vector<8x32xbf16>
    %cst_348 = arith.constant dense<0.000000e+00> : vector<8x32xf32>
    %867 = tpu.matmul %866, %772, %cst_348 {dimension_numbers = #tpu.dot_dimension_numbers<[1], [0], [0], [1], [0, 0, 1, 1], [], []>} : vector<8x32xbf16>, vector<32x32xbf16>, vector<8x32xf32> -> vector<8x32xf32>
    %868 = vector.broadcast %774 : vector<1x32xf32> to vector<8x32xf32>
    %869 = arith.addf %867, %868 : vector<8x32xf32>
    %870 = arith.addf %762, %869 : vector<8x32xf32>
    %cst_349 = arith.constant dense<0.000000e+00> : vector<8xf32>
    %871 = vector.multi_reduction <add>, %870, %cst_349 [1] : vector<8x32xf32> to vector<8xf32>
    %872 = vector.shape_cast %871 : vector<8xf32> to vector<8x1xf32>
    %cst_350 = arith.constant 3.200000e+01 : f32
    %873 = vector.broadcast %cst_350 : f32 to vector<8x1xf32>
    %874 = arith.divf %872, %873 : vector<8x1xf32>
    %875 = vector.broadcast %874 : vector<8x1xf32> to vector<8x32xf32>
    %876 = arith.subf %870, %875 : vector<8x32xf32>
    %877 = arith.mulf %876, %876 : vector<8x32xf32>
    %cst_351 = arith.constant dense<0.000000e+00> : vector<8xf32>
    %878 = vector.multi_reduction <add>, %877, %cst_351 [1] : vector<8x32xf32> to vector<8xf32>
    %879 = vector.shape_cast %878 : vector<8xf32> to vector<8x1xf32>
    %cst_352 = arith.constant 3.200000e+01 : f32
    %880 = vector.broadcast %cst_352 : f32 to vector<8x1xf32>
    %881 = arith.divf %879, %880 : vector<8x1xf32>
    %cst_353 = arith.constant 9.99999974E-6 : f32
    %882 = vector.broadcast %cst_353 : f32 to vector<8x1xf32>
    %883 = arith.addf %881, %882 : vector<8x1xf32>
    %884 = math.rsqrt %883 : vector<8x1xf32>
    %885 = vector.broadcast %884 : vector<8x1xf32> to vector<8x32xf32>
    %886 = arith.mulf %876, %885 : vector<8x32xf32>
    %887 = vector.broadcast %776 : vector<1x32xf32> to vector<8x32xf32>
    %888 = arith.mulf %886, %887 : vector<8x32xf32>
    %889 = vector.broadcast %778 : vector<1x32xf32> to vector<8x32xf32>
    %890 = arith.addf %888, %889 : vector<8x32xf32>
    %c1_354 = arith.constant 1 : index
    %c0_355 = arith.constant 0 : index
    %c0_356 = arith.constant 0 : index
    %891 = vector.load %arg34[%c1_354, %c0_355, %c0_356] : memref<2x32x64xbf16, #tpu.memory_space<vmem>>, vector<1x32x64xbf16>
    %892 = vector.shape_cast %891 : vector<1x32x64xbf16> to vector<32x64xbf16>
    %c1_357 = arith.constant 1 : index
    %c0_358 = arith.constant 0 : index
    %c0_359 = arith.constant 0 : index
    %893 = vector.load %arg35[%c1_357, %c0_358, %c0_359] : memref<2x1x64xf32, #tpu.memory_space<vmem>>, vector<1x1x64xf32>
    %894 = vector.shape_cast %893 : vector<1x1x64xf32> to vector<1x64xf32>
    %c1_360 = arith.constant 1 : index
    %c0_361 = arith.constant 0 : index
    %c0_362 = arith.constant 0 : index
    %895 = vector.load %arg36[%c1_360, %c0_361, %c0_362] : memref<2x64x32xbf16, #tpu.memory_space<vmem>>, vector<1x64x32xbf16>
    %896 = vector.shape_cast %895 : vector<1x64x32xbf16> to vector<64x32xbf16>
    %c1_363 = arith.constant 1 : index
    %c0_364 = arith.constant 0 : index
    %c0_365 = arith.constant 0 : index
    %897 = vector.load %arg37[%c1_363, %c0_364, %c0_365] : memref<2x1x32xf32, #tpu.memory_space<vmem>>, vector<1x1x32xf32>
    %898 = vector.shape_cast %897 : vector<1x1x32xf32> to vector<1x32xf32>
    %c1_366 = arith.constant 1 : index
    %c0_367 = arith.constant 0 : index
    %c0_368 = arith.constant 0 : index
    %899 = vector.load %arg38[%c1_366, %c0_367, %c0_368] : memref<2x1x32xf32, #tpu.memory_space<vmem>>, vector<1x1x32xf32>
    %900 = vector.shape_cast %899 : vector<1x1x32xf32> to vector<1x32xf32>
    %c1_369 = arith.constant 1 : index
    %c0_370 = arith.constant 0 : index
    %c0_371 = arith.constant 0 : index
    %901 = vector.load %arg39[%c1_369, %c0_370, %c0_371] : memref<2x1x32xf32, #tpu.memory_space<vmem>>, vector<1x1x32xf32>
    %902 = vector.shape_cast %901 : vector<1x1x32xf32> to vector<1x32xf32>
    %903 = arith.truncf %890 : vector<8x32xf32> to vector<8x32xbf16>
    %cst_372 = arith.constant dense<0.000000e+00> : vector<8x64xf32>
    %904 = tpu.matmul %903, %892, %cst_372 {dimension_numbers = #tpu.dot_dimension_numbers<[1], [0], [0], [1], [0, 0, 1, 1], [], []>} : vector<8x32xbf16>, vector<32x64xbf16>, vector<8x64xf32> -> vector<8x64xf32>
    %905 = vector.broadcast %894 : vector<1x64xf32> to vector<8x64xf32>
    %906 = arith.addf %904, %905 : vector<8x64xf32>
    %cst_373 = arith.constant 0.000000e+00 : f32
    %907 = vector.broadcast %cst_373 : f32 to vector<8x64xf32>
    %908 = arith.maximumf %906, %907 : vector<8x64xf32>
    %909 = arith.truncf %908 : vector<8x64xf32> to vector<8x64xbf16>
    %cst_374 = arith.constant dense<0.000000e+00> : vector<8x32xf32>
    %910 = tpu.matmul %909, %896, %cst_374 {dimension_numbers = #tpu.dot_dimension_numbers<[1], [0], [0], [1], [0, 0, 1, 1], [], []>} : vector<8x64xbf16>, vector<64x32xbf16>, vector<8x32xf32> -> vector<8x32xf32>
    %911 = arith.addf %890, %910 : vector<8x32xf32>
    %912 = vector.broadcast %898 : vector<1x32xf32> to vector<8x32xf32>
    %913 = arith.addf %911, %912 : vector<8x32xf32>
    %cst_375 = arith.constant dense<0.000000e+00> : vector<8xf32>
    %914 = vector.multi_reduction <add>, %913, %cst_375 [1] : vector<8x32xf32> to vector<8xf32>
    %915 = vector.shape_cast %914 : vector<8xf32> to vector<8x1xf32>
    %cst_376 = arith.constant 3.200000e+01 : f32
    %916 = vector.broadcast %cst_376 : f32 to vector<8x1xf32>
    %917 = arith.divf %915, %916 : vector<8x1xf32>
    %918 = vector.broadcast %917 : vector<8x1xf32> to vector<8x32xf32>
    %919 = arith.subf %913, %918 : vector<8x32xf32>
    %920 = arith.mulf %919, %919 : vector<8x32xf32>
    %cst_377 = arith.constant dense<0.000000e+00> : vector<8xf32>
    %921 = vector.multi_reduction <add>, %920, %cst_377 [1] : vector<8x32xf32> to vector<8xf32>
    %922 = vector.shape_cast %921 : vector<8xf32> to vector<8x1xf32>
    %cst_378 = arith.constant 3.200000e+01 : f32
    %923 = vector.broadcast %cst_378 : f32 to vector<8x1xf32>
    %924 = arith.divf %922, %923 : vector<8x1xf32>
    %cst_379 = arith.constant 9.99999974E-6 : f32
    %925 = vector.broadcast %cst_379 : f32 to vector<8x1xf32>
    %926 = arith.addf %924, %925 : vector<8x1xf32>
    %927 = math.rsqrt %926 : vector<8x1xf32>
    %928 = vector.broadcast %927 : vector<8x1xf32> to vector<8x32xf32>
    %929 = arith.mulf %919, %928 : vector<8x32xf32>
    %930 = vector.broadcast %900 : vector<1x32xf32> to vector<8x32xf32>
    %931 = arith.mulf %929, %930 : vector<8x32xf32>
    %932 = vector.broadcast %902 : vector<1x32xf32> to vector<8x32xf32>
    %933 = arith.addf %931, %932 : vector<8x32xf32>
    %c0_380 = arith.constant 0 : index
    %c0_381 = arith.constant 0 : index
    %934 = vector.load %arg40[%c0_380, %c0_381] : memref<32x20xbf16, #tpu.memory_space<vmem>>, vector<32x20xbf16>
    %935 = arith.truncf %933 : vector<8x32xf32> to vector<8x32xbf16>
    %cst_382 = arith.constant dense<0.000000e+00> : vector<8x20xf32>
    %936 = tpu.matmul %935, %934, %cst_382 {dimension_numbers = #tpu.dot_dimension_numbers<[1], [0], [0], [1], [0, 0, 1, 1], [], []>} : vector<8x32xbf16>, vector<32x20xbf16>, vector<8x20xf32> -> vector<8x20xf32>
    %c0_383 = arith.constant 0 : index
    %c0_384 = arith.constant 0 : index
    %937 = vector.load %arg41[%c0_383, %c0_384] : memref<1x20xf32, #tpu.memory_space<vmem>>, vector<1x20xf32>
    %938 = vector.broadcast %937 : vector<1x20xf32> to vector<8x20xf32>
    %939 = arith.addf %936, %938 : vector<8x20xf32>
    %c0_385 = arith.constant 0 : index
    %c0_386 = arith.constant 0 : index
    %c0_387 = arith.constant 0 : index
    %940 = vector.load %arg42[%c0_385, %c0_386, %c0_387] : memref<1x8x20xf32, #tpu.memory_space<vmem>>, vector<1x8x20xf32>
    %941 = vector.shape_cast %940 : vector<1x8x20xf32> to vector<8x20xf32>
    %942 = vector.shape_cast %939 : vector<8x20xf32> to vector<1x8x20xf32>
    tpu.vector_store %arg42[%c0_385, %c0_386, %c0_387], %942 {strides = array<i32>} : memref<1x8x20xf32, #tpu.memory_space<vmem>>, vector<1x8x20xf32>,
    return
  }
  func.func @transform_0(%arg0: i32) -> (i32, i32, i32) {
    %c0_i32 = arith.constant 0 : i32
    %c0_i32_0 = arith.constant 0 : i32
    %c0_i32_1 = arith.constant 0 : i32
    return %arg0, %c0_i32, %c0_i32_0 : i32, i32, i32
  }
  func.func @transform_1(%arg0: i32) -> (i32, i32, i32) {
    %c0_i32 = arith.constant 0 : i32
    %c0_i32_0 = arith.constant 0 : i32
    %c0_i32_1 = arith.constant 0 : i32
    return %arg0, %c0_i32, %c0_i32_0 : i32, i32, i32
  }
  func.func @transform_2(%arg0: i32) -> (i32, i32, i32) {
    %c0_i32 = arith.constant 0 : i32
    %c0_i32_0 = arith.constant 0 : i32
    %c0_i32_1 = arith.constant 0 : i32
    return %arg0, %c0_i32, %c0_i32_0 : i32, i32, i32
  }
  func.func @transform_3(%arg0: i32) -> (i32, i32) {
    %c0_i32 = arith.constant 0 : i32
    %c0_i32_0 = arith.constant 0 : i32
    %c0_i32_1 = arith.constant 0 : i32
    return %c0_i32, %c0_i32_0 : i32, i32
  }
  func.func @transform_4(%arg0: i32) -> (i32, i32) {
    %c0_i32 = arith.constant 0 : i32
    %c0_i32_0 = arith.constant 0 : i32
    %c0_i32_1 = arith.constant 0 : i32
    return %c0_i32, %c0_i32_0 : i32, i32
  }
  func.func @transform_5(%arg0: i32) -> (i32, i32) {
    %c0_i32 = arith.constant 0 : i32
    %c0_i32_0 = arith.constant 0 : i32
    %c0_i32_1 = arith.constant 0 : i32
    return %c0_i32, %c0_i32_0 : i32, i32
  }
  func.func @transform_6(%arg0: i32) -> (i32, i32) {
    %c0_i32 = arith.constant 0 : i32
    %c0_i32_0 = arith.constant 0 : i32
    %c0_i32_1 = arith.constant 0 : i32
    return %c0_i32, %c0_i32_0 : i32, i32
  }
  func.func @transform_7(%arg0: i32) -> (i32, i32, i32) {
    %c0_i32 = arith.constant 0 : i32
    %c0_i32_0 = arith.constant 0 : i32
    %c0_i32_1 = arith.constant 0 : i32
    %c0_i32_2 = arith.constant 0 : i32
    return %c0_i32, %c0_i32_0, %c0_i32_1 : i32, i32, i32
  }
  func.func @transform_8(%arg0: i32) -> (i32, i32, i32) {
    %c0_i32 = arith.constant 0 : i32
    %c0_i32_0 = arith.constant 0 : i32
    %c0_i32_1 = arith.constant 0 : i32
    %c0_i32_2 = arith.constant 0 : i32
    return %c0_i32, %c0_i32_0, %c0_i32_1 : i32, i32, i32
  }
  func.func @transform_9(%arg0: i32) -> (i32, i32, i32) {
    %c0_i32 = arith.constant 0 : i32
    %c0_i32_0 = arith.constant 0 : i32
    %c0_i32_1 = arith.constant 0 : i32
    %c0_i32_2 = arith.constant 0 : i32
    return %c0_i32, %c0_i32_0, %c0_i32_1 : i32, i32, i32
  }
  func.func @transform_10(%arg0: i32) -> (i32, i32, i32) {
    %c0_i32 = arith.constant 0 : i32
    %c0_i32_0 = arith.constant 0 : i32
    %c0_i32_1 = arith.constant 0 : i32
    %c0_i32_2 = arith.constant 0 : i32
    return %c0_i32, %c0_i32_0, %c0_i32_1 : i32, i32, i32
  }
  func.func @transform_11(%arg0: i32) -> (i32, i32, i32) {
    %c0_i32 = arith.constant 0 : i32
    %c0_i32_0 = arith.constant 0 : i32
    %c0_i32_1 = arith.constant 0 : i32
    %c0_i32_2 = arith.constant 0 : i32
    return %c0_i32, %c0_i32_0, %c0_i32_1 : i32, i32, i32
  }
  func.func @transform_12(%arg0: i32) -> (i32, i32, i32) {
    %c0_i32 = arith.constant 0 : i32
    %c0_i32_0 = arith.constant 0 : i32
    %c0_i32_1 = arith.constant 0 : i32
    %c0_i32_2 = arith.constant 0 : i32
    return %c0_i32, %c0_i32_0, %c0_i32_1 : i32, i32, i32
  }
  func.func @transform_13(%arg0: i32) -> (i32, i32, i32) {
    %c0_i32 = arith.constant 0 : i32
    %c0_i32_0 = arith.constant 0 : i32
    %c0_i32_1 = arith.constant 0 : i32
    %c0_i32_2 = arith.constant 0 : i32
    return %c0_i32, %c0_i32_0, %c0_i32_1 : i32, i32, i32
  }
  func.func @transform_14(%arg0: i32) -> (i32, i32, i32) {
    %c0_i32 = arith.constant 0 : i32
    %c0_i32_0 = arith.constant 0 : i32
    %c0_i32_1 = arith.constant 0 : i32
    %c0_i32_2 = arith.constant 0 : i32
    return %c0_i32, %c0_i32_0, %c0_i32_1 : i32, i32, i32
  }
  func.func @transform_15(%arg0: i32) -> (i32, i32, i32) {
    %c0_i32 = arith.constant 0 : i32
    %c0_i32_0 = arith.constant 0 : i32
    %c0_i32_1 = arith.constant 0 : i32
    %c0_i32_2 = arith.constant 0 : i32
    return %c0_i32, %c0_i32_0, %c0_i32_1 : i32, i32, i32
  }
  func.func @transform_16(%arg0: i32) -> (i32, i32, i32) {
    %c0_i32 = arith.constant 0 : i32
    %c0_i32_0 = arith.constant 0 : i32
    %c0_i32_1 = arith.constant 0 : i32
    %c0_i32_2 = arith.constant 0 : i32
    return %c0_i32, %c0_i32_0, %c0_i32_1 : i32, i32, i32
  }
  func.func @transform_17(%arg0: i32) -> (i32, i32, i32) {
    %c0_i32 = arith.constant 0 : i32
    %c0_i32_0 = arith.constant 0 : i32
    %c0_i32_1 = arith.constant 0 : i32
    %c0_i32_2 = arith.constant 0 : i32
    return %c0_i32, %c0_i32_0, %c0_i32_1 : i32, i32, i32
  }
  func.func @transform_18(%arg0: i32) -> (i32, i32, i32) {
    %c0_i32 = arith.constant 0 : i32
    %c0_i32_0 = arith.constant 0 : i32
    %c0_i32_1 = arith.constant 0 : i32
    %c0_i32_2 = arith.constant 0 : i32
    return %c0_i32, %c0_i32_0, %c0_i32_1 : i32, i32, i32
  }
  func.func @transform_19(%arg0: i32) -> (i32, i32, i32) {
    %c0_i32 = arith.constant 0 : i32
    %c0_i32_0 = arith.constant 0 : i32
    %c0_i32_1 = arith.constant 0 : i32
    %c0_i32_2 = arith.constant 0 : i32
    return %c0_i32, %c0_i32_0, %c0_i32_1 : i32, i32, i32
  }
  func.func @transform_20(%arg0: i32) -> (i32, i32, i32) {
    %c0_i32 = arith.constant 0 : i32
    %c0_i32_0 = arith.constant 0 : i32
    %c0_i32_1 = arith.constant 0 : i32
    %c0_i32_2 = arith.constant 0 : i32
    return %c0_i32, %c0_i32_0, %c0_i32_1 : i32, i32, i32
  }
  func.func @transform_21(%arg0: i32) -> (i32, i32, i32) {
    %c0_i32 = arith.constant 0 : i32
    %c0_i32_0 = arith.constant 0 : i32
    %c0_i32_1 = arith.constant 0 : i32
    %c0_i32_2 = arith.constant 0 : i32
    return %c0_i32, %c0_i32_0, %c0_i32_1 : i32, i32, i32
  }
  func.func @transform_22(%arg0: i32) -> (i32, i32, i32) {
    %c0_i32 = arith.constant 0 : i32
    %c0_i32_0 = arith.constant 0 : i32
    %c0_i32_1 = arith.constant 0 : i32
    %c0_i32_2 = arith.constant 0 : i32
    return %c0_i32, %c0_i32_0, %c0_i32_1 : i32, i32, i32
  }
  func.func @transform_23(%arg0: i32) -> (i32, i32, i32) {
    %c0_i32 = arith.constant 0 : i32
    %c0_i32_0 = arith.constant 0 : i32
    %c0_i32_1 = arith.constant 0 : i32
    %c0_i32_2 = arith.constant 0 : i32
    return %c0_i32, %c0_i32_0, %c0_i32_1 : i32, i32, i32
  }
  func.func @transform_24(%arg0: i32) -> (i32, i32, i32) {
    %c0_i32 = arith.constant 0 : i32
    %c0_i32_0 = arith.constant 0 : i32
    %c0_i32_1 = arith.constant 0 : i32
    %c0_i32_2 = arith.constant 0 : i32
    return %c0_i32, %c0_i32_0, %c0_i32_1 : i32, i32, i32
  }
  func.func @transform_25(%arg0: i32) -> (i32, i32, i32) {
    %c0_i32 = arith.constant 0 : i32
    %c0_i32_0 = arith.constant 0 : i32
    %c0_i32_1 = arith.constant 0 : i32
    %c0_i32_2 = arith.constant 0 : i32
    return %c0_i32, %c0_i32_0, %c0_i32_1 : i32, i32, i32
  }
  func.func @transform_26(%arg0: i32) -> (i32, i32, i32) {
    %c0_i32 = arith.constant 0 : i32
    %c0_i32_0 = arith.constant 0 : i32
    %c0_i32_1 = arith.constant 0 : i32
    %c0_i32_2 = arith.constant 0 : i32
    return %c0_i32, %c0_i32_0, %c0_i32_1 : i32, i32, i32
  }
  func.func @transform_27(%arg0: i32) -> (i32, i32, i32) {
    %c0_i32 = arith.constant 0 : i32
    %c0_i32_0 = arith.constant 0 : i32
    %c0_i32_1 = arith.constant 0 : i32
    %c0_i32_2 = arith.constant 0 : i32
    return %c0_i32, %c0_i32_0, %c0_i32_1 : i32, i32, i32
  }
  func.func @transform_28(%arg0: i32) -> (i32, i32, i32) {
    %c0_i32 = arith.constant 0 : i32
    %c0_i32_0 = arith.constant 0 : i32
    %c0_i32_1 = arith.constant 0 : i32
    %c0_i32_2 = arith.constant 0 : i32
    return %c0_i32, %c0_i32_0, %c0_i32_1 : i32, i32, i32
  }
  func.func @transform_29(%arg0: i32) -> (i32, i32, i32) {
    %c0_i32 = arith.constant 0 : i32
    %c0_i32_0 = arith.constant 0 : i32
    %c0_i32_1 = arith.constant 0 : i32
    %c0_i32_2 = arith.constant 0 : i32
    return %c0_i32, %c0_i32_0, %c0_i32_1 : i32, i32, i32
  }
  func.func @transform_30(%arg0: i32) -> (i32, i32, i32) {
    %c0_i32 = arith.constant 0 : i32
    %c0_i32_0 = arith.constant 0 : i32
    %c0_i32_1 = arith.constant 0 : i32
    %c0_i32_2 = arith.constant 0 : i32
    return %c0_i32, %c0_i32_0, %c0_i32_1 : i32, i32, i32
  }
  func.func @transform_31(%arg0: i32) -> (i32, i32, i32) {
    %c0_i32 = arith.constant 0 : i32
    %c0_i32_0 = arith.constant 0 : i32
    %c0_i32_1 = arith.constant 0 : i32
    %c0_i32_2 = arith.constant 0 : i32
    return %c0_i32, %c0_i32_0, %c0_i32_1 : i32, i32, i32
  }
  func.func @transform_32(%arg0: i32) -> (i32, i32, i32) {
    %c0_i32 = arith.constant 0 : i32
    %c0_i32_0 = arith.constant 0 : i32
    %c0_i32_1 = arith.constant 0 : i32
    %c0_i32_2 = arith.constant 0 : i32
    return %c0_i32, %c0_i32_0, %c0_i32_1 : i32, i32, i32
  }
  func.func @transform_33(%arg0: i32) -> (i32, i32, i32) {
    %c0_i32 = arith.constant 0 : i32
    %c0_i32_0 = arith.constant 0 : i32
    %c0_i32_1 = arith.constant 0 : i32
    %c0_i32_2 = arith.constant 0 : i32
    return %c0_i32, %c0_i32_0, %c0_i32_1 : i32, i32, i32
  }
  func.func @transform_34(%arg0: i32) -> (i32, i32, i32) {
    %c0_i32 = arith.constant 0 : i32
    %c0_i32_0 = arith.constant 0 : i32
    %c0_i32_1 = arith.constant 0 : i32
    %c0_i32_2 = arith.constant 0 : i32
    return %c0_i32, %c0_i32_0, %c0_i32_1 : i32, i32, i32
  }
  func.func @transform_35(%arg0: i32) -> (i32, i32, i32) {
    %c0_i32 = arith.constant 0 : i32
    %c0_i32_0 = arith.constant 0 : i32
    %c0_i32_1 = arith.constant 0 : i32
    %c0_i32_2 = arith.constant 0 : i32
    return %c0_i32, %c0_i32_0, %c0_i32_1 : i32, i32, i32
  }
  func.func @transform_36(%arg0: i32) -> (i32, i32, i32) {
    %c0_i32 = arith.constant 0 : i32
    %c0_i32_0 = arith.constant 0 : i32
    %c0_i32_1 = arith.constant 0 : i32
    %c0_i32_2 = arith.constant 0 : i32
    return %c0_i32, %c0_i32_0, %c0_i32_1 : i32, i32, i32
  }
  func.func @transform_37(%arg0: i32) -> (i32, i32, i32) {
    %c0_i32 = arith.constant 0 : i32
    %c0_i32_0 = arith.constant 0 : i32
    %c0_i32_1 = arith.constant 0 : i32
    %c0_i32_2 = arith.constant 0 : i32
    return %c0_i32, %c0_i32_0, %c0_i32_1 : i32, i32, i32
  }
  func.func @transform_38(%arg0: i32) -> (i32, i32, i32) {
    %c0_i32 = arith.constant 0 : i32
    %c0_i32_0 = arith.constant 0 : i32
    %c0_i32_1 = arith.constant 0 : i32
    %c0_i32_2 = arith.constant 0 : i32
    return %c0_i32, %c0_i32_0, %c0_i32_1 : i32, i32, i32
  }
  func.func @transform_39(%arg0: i32) -> (i32, i32) {
    %c0_i32 = arith.constant 0 : i32
    %c0_i32_0 = arith.constant 0 : i32
    %c0_i32_1 = arith.constant 0 : i32
    return %c0_i32, %c0_i32_0 : i32, i32
  }
  func.func @transform_40(%arg0: i32) -> (i32, i32) {
    %c0_i32 = arith.constant 0 : i32
    %c0_i32_0 = arith.constant 0 : i32
    %c0_i32_1 = arith.constant 0 : i32
    return %c0_i32, %c0_i32_0 : i32, i32
  }
  func.func @transform_41(%arg0: i32) -> (i32, i32, i32) {
    %c0_i32 = arith.constant 0 : i32
    %c0_i32_0 = arith.constant 0 : i32
    %c0_i32_1 = arith.constant 0 : i32
    return %arg0, %c0_i32, %c0_i32_0 : i32, i32, i32
  }
}

</mosaic_0001>

<llo_original>
// kernel: transformer_forward.1
$region0: #{transformer_forward.1}
  #allocation0 [shape = 'u32[]', space=smem, size = 0x4, offset = 0x4, fixed_abs, tag = 'smem constant byte address 0x4 - core index']
  #allocation1 [shape = 'u32[72,128]{1,0:T(1,128)}', space=vmem, size = 0x9000, scoped, tag = 'internal scratch']
  %s0 = inlined_call_operand.smem [shape: u32[42], index: -1, kind: input, shape index: {}]
  %s1 = sld [smem:[%s0]]
  %s2 = scalar_lea.smem %s0, 1
  %s3 = sld [smem:[%s2]]
  %s4 = scalar_lea.smem %s0, 2
  %s5 = sld [smem:[%s4]]
  %s6 = scalar_lea.smem %s0, 3
  %s7 = sld [smem:[%s6]]
  %s8 = scalar_lea.smem %s0, 4
  %s9 = sld [smem:[%s8]]
  %s10 = scalar_lea.smem %s0, 5
  %s11 = sld [smem:[%s10]]
  %s12 = scalar_lea.smem %s0, 6
  %s13 = sld [smem:[%s12]]
  %s14 = scalar_lea.smem %s0, 7
  %s15 = sld [smem:[%s14]]
  %s16 = scalar_lea.smem %s0, 8
  %s17 = sld [smem:[%s16]]
  %s18 = scalar_lea.smem %s0, 9
  %s19 = sld [smem:[%s18]]
  %s20 = scalar_lea.smem %s0, 10
  %s21 = sld [smem:[%s20]]
  %s22 = scalar_lea.smem %s0, 11
  %s23 = sld [smem:[%s22]]
  %s24 = scalar_lea.smem %s0, 12
  %s25 = sld [smem:[%s24]]
  %s26 = scalar_lea.smem %s0, 13
  %s27 = sld [smem:[%s26]]
  %s28 = scalar_lea.smem %s0, 14
  %s29 = sld [smem:[%s28]]
  %s30 = scalar_lea.smem %s0, 15
  %s31 = sld [smem:[%s30]]
  %s32 = scalar_lea.smem %s0, 16
  %s33 = sld [smem:[%s32]]
  %s34 = scalar_lea.smem %s0, 17
  %s35 = sld [smem:[%s34]]
  %s36 = scalar_lea.smem %s0, 18
  %s37 = sld [smem:[%s36]]
  %s38 = scalar_lea.smem %s0, 19
  %s39 = sld [smem:[%s38]]
  %s40 = scalar_lea.smem %s0, 20
  %s41 = sld [smem:[%s40]]
  %s42 = scalar_lea.smem %s0, 21
  %s43 = sld [smem:[%s42]]
  %s44 = scalar_lea.smem %s0, 22
  %s45 = sld [smem:[%s44]]
  %s46 = scalar_lea.smem %s0, 23
  %s47 = sld [smem:[%s46]]
  %s48 = scalar_lea.smem %s0, 24
  %s49 = sld [smem:[%s48]]
  %s50 = scalar_lea.smem %s0, 25
  %s51 = sld [smem:[%s50]]
  %s52 = scalar_lea.smem %s0, 26
  %s53 = sld [smem:[%s52]]
  %s54 = scalar_lea.smem %s0, 27
  %s55 = sld [smem:[%s54]]
  %s56 = scalar_lea.smem %s0, 28
  %s57 = sld [smem:[%s56]]
  %s58 = scalar_lea.smem %s0, 29
  %s59 = sld [smem:[%s58]]
  %s60 = scalar_lea.smem %s0, 30
  %s61 = sld [smem:[%s60]]
  %s62 = scalar_lea.smem %s0, 31
  %s63 = sld [smem:[%s62]]
  %s64 = scalar_lea.smem %s0, 32
  %s65 = sld [smem:[%s64]]
  %s66 = scalar_lea.smem %s0, 33
  %s67 = sld [smem:[%s66]]
  %s68 = scalar_lea.smem %s0, 34
  %s69 = sld [smem:[%s68]]
  %s70 = scalar_lea.smem %s0, 35
  %s71 = sld [smem:[%s70]]
  %s72 = scalar_lea.smem %s0, 36
  %s73 = sld [smem:[%s72]]
  %s74 = scalar_lea.smem %s0, 37
  %s75 = sld [smem:[%s74]]
  %s76 = scalar_lea.smem %s0, 38
  %s77 = sld [smem:[%s76]]
  %s78 = scalar_lea.smem %s0, 39
  %s79 = sld [smem:[%s78]]
  %s80 = scalar_lea.smem %s0, 40
  %s81 = sld [smem:[%s80]]
  %s82 = scalar_lea.smem %s0, 41
  %s83 = sld [smem:[%s82]]
  %s84 = sld [smem:[#allocation0]]
  $region197: #{transformer_forward.1} parent=0
    _
  %s86 = ssub.s32 1, %s84
  %s87 = scalar_select 0, %s86, %s84
  $region1: #{transformer_forward.1} parent=0
    #allocation2 [shape = 'u8[8192]{0}', space=vmem, size = 0x2000, scoped, tag = 'output window, operand 0']
    #allocation3 [shape = 's32[2]{0}', space=sflag, size = 0x8, scoped, tag = 'scoped memory for transformer_forward.1']
    %88 = vsyncpa [#allocation3], 0
    %s89 = scalar_lea.sflag [#allocation3], 1
    %90 = vsyncpa %s89, 0
    loop: start=0, step=1, limit=4
    $region2: #{transformer_forward.1} parent=1 // loop_pre_header
      _
    $region3: #{transformer_forward.1} parent=1 // loop_header
      %s92 = sphi 0, %s96
      %p93 = scmp.ge.s32.totalorder %s92, 4
      %s102 = sphi 0, %s104
      %s105 = sphi 0, %s102
      %s106 = sphi 0, %s105
      %s122 = sphi 0, %s106
      %s128 = sphi 0, %s130
      %s131 = sphi 0, %s128
      %s132 = sphi 0, %s131
      %s148 = sphi 0, %s132
      %s154 = sphi 0, %s156
      %s157 = sphi 0, %s154
      %s158 = sphi 0, %s157
      %s174 = sphi 0, %s158
      %s178 = sphi 0, %s178
      %s180 = sphi 0, %s178
      %s181 = sphi 0, %s180
      %s195 = sphi 0, %s181
      %s199 = sphi 0, %s199
      %s201 = sphi 0, %s199
      %s202 = sphi 0, %s201
      %s216 = sphi 0, %s202
      %s220 = sphi 0, %s220
      %s222 = sphi 0, %s220
      %s223 = sphi 0, %s222
      %s237 = sphi 0, %s223
      %s241 = sphi 0, %s241
      %s243 = sphi 0, %s241
      %s244 = sphi 0, %s243
      %s258 = sphi 0, %s244
      %s262 = sphi 0, %s262
      %s264 = sphi 0, %s262
      %s265 = sphi 0, %s264
      %s279 = sphi 0, %s265
      %s283 = sphi 0, %s283
      %s285 = sphi 0, %s283
      %s286 = sphi 0, %s285
      %s300 = sphi 0, %s286
      %s304 = sphi 0, %s304
      %s306 = sphi 0, %s304
      %s307 = sphi 0, %s306
      %s321 = sphi 0, %s307
      %s325 = sphi 0, %s325
      %s327 = sphi 0, %s325
      %s328 = sphi 0, %s327
      %s342 = sphi 0, %s328
      %s346 = sphi 0, %s346
      %s348 = sphi 0, %s346
      %s349 = sphi 0, %s348
      %s363 = sphi 0, %s349
      %s367 = sphi 0, %s367
      %s369 = sphi 0, %s367
      %s370 = sphi 0, %s369
      %s384 = sphi 0, %s370
      %s388 = sphi 0, %s388
      %s390 = sphi 0, %s388
      %s391 = sphi 0, %s390
      %s405 = sphi 0, %s391
      %s409 = sphi 0, %s409
      %s411 = sphi 0, %s409
      %s412 = sphi 0, %s411
      %s426 = sphi 0, %s412
      %s430 = sphi 0, %s430
      %s432 = sphi 0, %s430
      %s433 = sphi 0, %s432
      %s447 = sphi 0, %s433
      %s451 = sphi 0, %s451
      %s453 = sphi 0, %s451
      %s454 = sphi 0, %s453
      %s468 = sphi 0, %s454
      %s472 = sphi 0, %s472
      %s474 = sphi 0, %s472
      %s475 = sphi 0, %s474
      %s489 = sphi 0, %s475
      %s493 = sphi 0, %s493
      %s495 = sphi 0, %s493
      %s496 = sphi 0, %s495
      %s510 = sphi 0, %s496
      %s514 = sphi 0, %s514
      %s516 = sphi 0, %s514
      %s517 = sphi 0, %s516
      %s531 = sphi 0, %s517
      %s535 = sphi 0, %s535
      %s537 = sphi 0, %s535
      %s538 = sphi 0, %s537
      %s552 = sphi 0, %s538
      %s556 = sphi 0, %s556
      %s558 = sphi 0, %s556
      %s559 = sphi 0, %s558
      %s573 = sphi 0, %s559
      %s577 = sphi 0, %s577
      %s579 = sphi 0, %s577
      %s580 = sphi 0, %s579
      %s594 = sphi 0, %s580
      %s598 = sphi 0, %s598
      %s600 = sphi 0, %s598
      %s601 = sphi 0, %s600
      %s615 = sphi 0, %s601
      %s619 = sphi 0, %s619
      %s621 = sphi 0, %s619
      %s622 = sphi 0, %s621
      %s636 = sphi 0, %s622
      %s640 = sphi 0, %s640
      %s642 = sphi 0, %s640
      %s643 = sphi 0, %s642
      %s657 = sphi 0, %s643
      %s661 = sphi 0, %s661
      %s663 = sphi 0, %s661
      %s664 = sphi 0, %s663
      %s678 = sphi 0, %s664
      %s682 = sphi 0, %s682
      %s684 = sphi 0, %s682
      %s685 = sphi 0, %s684
      %s699 = sphi 0, %s685
      %s703 = sphi 0, %s703
      %s705 = sphi 0, %s703
      %s706 = sphi 0, %s705
      %s720 = sphi 0, %s706
      %s724 = sphi 0, %s724
      %s726 = sphi 0, %s724
      %s727 = sphi 0, %s726
      %s741 = sphi 0, %s727
      %s745 = sphi 0, %s745
      %s747 = sphi 0, %s745
      %s748 = sphi 0, %s747
      %s762 = sphi 0, %s748
      %s766 = sphi 0, %s766
      %s768 = sphi 0, %s766
      %s769 = sphi 0, %s768
      %s783 = sphi 0, %s769
      %s787 = sphi 0, %s787
      %s789 = sphi 0, %s787
      %s790 = sphi 0, %s789
      %s804 = sphi 0, %s790
      %s808 = sphi 0, %s808
      %s810 = sphi 0, %s808
      %s811 = sphi 0, %s810
      %s825 = sphi 0, %s811
      %s829 = sphi 0, %s829
      %s831 = sphi 0, %s829
      %s832 = sphi 0, %s831
      %s846 = sphi 0, %s832
      %s850 = sphi 0, %s850
      %s852 = sphi 0, %s850
      %s853 = sphi 0, %s852
      %s867 = sphi 0, %s853
      %s871 = sphi 0, %s871
      %s873 = sphi 0, %s871
      %s874 = sphi 0, %s873
      %s888 = sphi 0, %s874
      %s892 = sphi 0, %s892
      %s894 = sphi 0, %s892
      %s895 = sphi 0, %s894
      %s909 = sphi 0, %s895
      %s913 = sphi 0, %s913
      %s915 = sphi 0, %s913
      %s916 = sphi 0, %s915
      %s930 = sphi 0, %s916
      %s934 = sphi 0, %s934
      %s936 = sphi 0, %s934
      %s937 = sphi 0, %s936
      %s951 = sphi 0, %s937
      %s955 = sphi 0, %s955
      %s957 = sphi 0, %s955
      %s958 = sphi 0, %s957
      %s972 = sphi 0, %s958
      %s978 = sphi 0, %s980
      %s981 = sphi 0, %s978
      %s982 = sphi 0, %s981
      %s998 = sphi 0, %s982
    $region4: #{transformer_forward.1} parent=1 // loop_header_branch
      %95 = sbr.rel (%p93) target = $region8
    $region5: #{transformer_forward.1} parent=1 // loop_body
      %s97 = ssub.s32 %s92, 1
      %s98 = ssub.s32 %s92, 2
      %s99 = sadd.s32 %s92, 1
      %s100 = ssub.s32 %s92, %s99
      %p101 = scmp.eq.s32.totalorder %s100, 0
      %s103 = sadd.s32 %s102, 1
      %s104 = scalar_select %p101, %s102, %s103
      %p107 = pneg %p101
      %p108 = scmp.eq.s32.totalorder %s92, 1
      %p109 = por %p107, %p108
      %p110 = scmp.ne.s32.totalorder %s102, %s105
      %p111 = scmp.eq.s32.totalorder %s92, 0
      %p112 = por %p110, %p111
      %p113 = scmp.ne.s32.totalorder %s102, %s105
      %p114 = scmp.eq.s32.totalorder %s97, 1
      %p115 = por %p113, %p114
      %p116 = scmp.ne.s32.totalorder %s105, %s106
      %p117 = scmp.eq.s32.totalorder %s97, 0
      %p118 = por %p116, %p117
      %p119 = scmp.ne.s32.totalorder %s105, %s106
      %p120 = scmp.eq.s32.totalorder %s98, 1
      %p121 = por %p119, %p120
      %p123 = scmp.ne.s32.totalorder %s106, %s122
      %p124 = scmp.eq.s32.totalorder %s98, 0
      %p125 = por %p123, %p124
      %s126 = ssub.s32 %s92, %s99
      %p127 = scmp.eq.s32.totalorder %s126, 0
      %s129 = sadd.s32 %s128, 1
      %s130 = scalar_select %p127, %s128, %s129
      %p133 = pneg %p127
      %p134 = scmp.eq.s32.totalorder %s92, 1
      %p135 = por %p133, %p134
      %p136 = scmp.ne.s32.totalorder %s128, %s131
      %p137 = scmp.eq.s32.totalorder %s92, 0
      %p138 = por %p136, %p137
      %p139 = scmp.ne.s32.totalorder %s128, %s131
      %p140 = scmp.eq.s32.totalorder %s97, 1
      %p141 = por %p139, %p140
      %p142 = scmp.ne.s32.totalorder %s131, %s132
      %p143 = scmp.eq.s32.totalorder %s97, 0
      %p144 = por %p142, %p143
      %p145 = scmp.ne.s32.totalorder %s131, %s132
      %p146 = scmp.eq.s32.totalorder %s98, 1
      %p147 = por %p145, %p146
      %p149 = scmp.ne.s32.totalorder %s132, %s148
      %p150 = scmp.eq.s32.totalorder %s98, 0
      %p151 = por %p149, %p150
      %s152 = ssub.s32 %s92, %s99
      %p153 = scmp.eq.s32.totalorder %s152, 0
      %s155 = sadd.s32 %s154, 1
      %s156 = scalar_select %p153, %s154, %s155
      %p159 = pneg %p153
      %p160 = scmp.eq.s32.totalorder %s92, 1
      %p161 = por %p159, %p160
      %p162 = scmp.ne.s32.totalorder %s154, %s157
      %p163 = scmp.eq.s32.totalorder %s92, 0
      %p164 = por %p162, %p163
      %p165 = scmp.ne.s32.totalorder %s154, %s157
      %p166 = scmp.eq.s32.totalorder %s97, 1
      %p167 = por %p165, %p166
      %p168 = scmp.ne.s32.totalorder %s157, %s158
      %p169 = scmp.eq.s32.totalorder %s97, 0
      %p170 = por %p168, %p169
      %p171 = scmp.ne.s32.totalorder %s157, %s158
      %p172 = scmp.eq.s32.totalorder %s98, 1
      %p173 = por %p171, %p172
      %p175 = scmp.ne.s32.totalorder %s158, %s174
      %p176 = scmp.eq.s32.totalorder %s98, 0
      %p177 = por %p175, %p176
      %s179 = sadd.s32 %s178, 1
      %p182 = scmp.eq.s32.totalorder %s92, 1
      %p183 = scmp.ne.s32.totalorder %s178, %s180
      %p184 = scmp.eq.s32.totalorder %s92, 0
      %p185 = por %p183, %p184
      %p186 = scmp.ne.s32.totalorder %s178, %s180
      %p187 = scmp.eq.s32.totalorder %s97, 1
      %p188 = por %p186, %p187
      %p189 = scmp.ne.s32.totalorder %s180, %s181
      %p190 = scmp.eq.s32.totalorder %s97, 0
      %p191 = por %p189, %p190
      %p192 = scmp.ne.s32.totalorder %s180, %s181
      %p193 = scmp.eq.s32.totalorder %s98, 1
      %p194 = por %p192, %p193
      %p196 = scmp.ne.s32.totalorder %s181, %s195
      %p197 = scmp.eq.s32.totalorder %s98, 0
      %p198 = por %p196, %p197
      %s200 = sadd.s32 %s199, 1
      %p203 = scmp.eq.s32.totalorder %s92, 1
      %p204 = scmp.ne.s32.totalorder %s199, %s201
      %p205 = scmp.eq.s32.totalorder %s92, 0
      %p206 = por %p204, %p205
      %p207 = scmp.ne.s32.totalorder %s199, %s201
      %p208 = scmp.eq.s32.totalorder %s97, 1
      %p209 = por %p207, %p208
      %p210 = scmp.ne.s32.totalorder %s201, %s202
      %p211 = scmp.eq.s32.totalorder %s97, 0
      %p212 = por %p210, %p211
      %p213 = scmp.ne.s32.totalorder %s201, %s202
      %p214 = scmp.eq.s32.totalorder %s98, 1
      %p215 = por %p213, %p214
      %p217 = scmp.ne.s32.totalorder %s202, %s216
      %p218 = scmp.eq.s32.totalorder %s98, 0
      %p219 = por %p217, %p218
      %s221 = sadd.s32 %s220, 1
      %p224 = scmp.eq.s32.totalorder %s92, 1
      %p225 = scmp.ne.s32.totalorder %s220, %s222
      %p226 = scmp.eq.s32.totalorder %s92, 0
      %p227 = por %p225, %p226
      %p228 = scmp.ne.s32.totalorder %s220, %s222
      %p229 = scmp.eq.s32.totalorder %s97, 1
      %p230 = por %p228, %p229
      %p231 = scmp.ne.s32.totalorder %s222, %s223
      %p232 = scmp.eq.s32.totalorder %s97, 0
      %p233 = por %p231, %p232
      %p234 = scmp.ne.s32.totalorder %s222, %s223
      %p235 = scmp.eq.s32.totalorder %s98, 1
      %p236 = por %p234, %p235
      %p238 = scmp.ne.s32.totalorder %s223, %s237
      %p239 = scmp.eq.s32.totalorder %s98, 0
      %p240 = por %p238, %p239
      %s242 = sadd.s32 %s241, 1
      %p245 = scmp.eq.s32.totalorder %s92, 1
      %p246 = scmp.ne.s32.totalorder %s241, %s243
      %p247 = scmp.eq.s32.totalorder %s92, 0
      %p248 = por %p246, %p247
      %p249 = scmp.ne.s32.totalorder %s241, %s243
      %p250 = scmp.eq.s32.totalorder %s97, 1
      %p251 = por %p249, %p250
      %p252 = scmp.ne.s32.totalorder %s243, %s244
      %p253 = scmp.eq.s32.totalorder %s97, 0
      %p254 = por %p252, %p253
      %p255 = scmp.ne.s32.totalorder %s243, %s244
      %p256 = scmp.eq.s32.totalorder %s98, 1
      %p257 = por %p255, %p256
      %p259 = scmp.ne.s32.totalorder %s244, %s258
      %p260 = scmp.eq.s32.totalorder %s98, 0
      %p261 = por %p259, %p260
      %s263 = sadd.s32 %s262, 1
      %p266 = scmp.eq.s32.totalorder %s92, 1
      %p267 = scmp.ne.s32.totalorder %s262, %s264
      %p268 = scmp.eq.s32.totalorder %s92, 0
      %p269 = por %p267, %p268
      %p270 = scmp.ne.s32.totalorder %s262, %s264
      %p271 = scmp.eq.s32.totalorder %s97, 1
      %p272 = por %p270, %p271
      %p273 = scmp.ne.s32.totalorder %s264, %s265
      %p274 = scmp.eq.s32.totalorder %s97, 0
      %p275 = por %p273, %p274
      %p276 = scmp.ne.s32.totalorder %s264, %s265
      %p277 = scmp.eq.s32.totalorder %s98, 1
      %p278 = por %p276, %p277
      %p280 = scmp.ne.s32.totalorder %s265, %s279
      %p281 = scmp.eq.s32.totalorder %s98, 0
      %p282 = por %p280, %p281
      %s284 = sadd.s32 %s283, 1
      %p287 = scmp.eq.s32.totalorder %s92, 1
      %p288 = scmp.ne.s32.totalorder %s283, %s285
      %p289 = scmp.eq.s32.totalorder %s92, 0
      %p290 = por %p288, %p289
      %p291 = scmp.ne.s32.totalorder %s283, %s285
      %p292 = scmp.eq.s32.totalorder %s97, 1
      %p293 = por %p291, %p292
      %p294 = scmp.ne.s32.totalorder %s285, %s286
      %p295 = scmp.eq.s32.totalorder %s97, 0
      %p296 = por %p294, %p295
      %p297 = scmp.ne.s32.totalorder %s285, %s286
      %p298 = scmp.eq.s32.totalorder %s98, 1
      %p299 = por %p297, %p298
      %p301 = scmp.ne.s32.totalorder %s286, %s300
      %p302 = scmp.eq.s32.totalorder %s98, 0
      %p303 = por %p301, %p302
      %s305 = sadd.s32 %s304, 1
      %p308 = scmp.eq.s32.totalorder %s92, 1
      %p309 = scmp.ne.s32.totalorder %s304, %s306
      %p310 = scmp.eq.s32.totalorder %s92, 0
      %p311 = por %p309, %p310
      %p312 = scmp.ne.s32.totalorder %s304, %s306
      %p313 = scmp.eq.s32.totalorder %s97, 1
      %p314 = por %p312, %p313
      %p315 = scmp.ne.s32.totalorder %s306, %s307
      %p316 = scmp.eq.s32.totalorder %s97, 0
      %p317 = por %p315, %p316
      %p318 = scmp.ne.s32.totalorder %s306, %s307
      %p319 = scmp.eq.s32.totalorder %s98, 1
      %p320 = por %p318, %p319
      %p322 = scmp.ne.s32.totalorder %s307, %s321
      %p323 = scmp.eq.s32.totalorder %s98, 0
      %p324 = por %p322, %p323
      %s326 = sadd.s32 %s325, 1
      %p329 = scmp.eq.s32.totalorder %s92, 1
      %p330 = scmp.ne.s32.totalorder %s325, %s327
      %p331 = scmp.eq.s32.totalorder %s92, 0
      %p332 = por %p330, %p331
      %p333 = scmp.ne.s32.totalorder %s325, %s327
      %p334 = scmp.eq.s32.totalorder %s97, 1
      %p335 = por %p333, %p334
      %p336 = scmp.ne.s32.totalorder %s327, %s328
      %p337 = scmp.eq.s32.totalorder %s97, 0
      %p338 = por %p336, %p337
      %p339 = scmp.ne.s32.totalorder %s327, %s328
      %p340 = scmp.eq.s32.totalorder %s98, 1
      %p341 = por %p339, %p340
      %p343 = scmp.ne.s32.totalorder %s328, %s342
      %p344 = scmp.eq.s32.totalorder %s98, 0
      %p345 = por %p343, %p344
      %s347 = sadd.s32 %s346, 1
      %p350 = scmp.eq.s32.totalorder %s92, 1
      %p351 = scmp.ne.s32.totalorder %s346, %s348
      %p352 = scmp.eq.s32.totalorder %s92, 0
      %p353 = por %p351, %p352
      %p354 = scmp.ne.s32.totalorder %s346, %s348
      %p355 = scmp.eq.s32.totalorder %s97, 1
      %p356 = por %p354, %p355
      %p357 = scmp.ne.s32.totalorder %s348, %s349
      %p358 = scmp.eq.s32.totalorder %s97, 0
      %p359 = por %p357, %p358
      %p360 = scmp.ne.s32.totalorder %s348, %s349
      %p361 = scmp.eq.s32.totalorder %s98, 1
      %p362 = por %p360, %p361
      %p364 = scmp.ne.s32.totalorder %s349, %s363
      %p365 = scmp.eq.s32.totalorder %s98, 0
      %p366 = por %p364, %p365
      %s368 = sadd.s32 %s367, 1
      %p371 = scmp.eq.s32.totalorder %s92, 1
      %p372 = scmp.ne.s32.totalorder %s367, %s369
      %p373 = scmp.eq.s32.totalorder %s92, 0
      %p374 = por %p372, %p373
      %p375 = scmp.ne.s32.totalorder %s367, %s369
      %p376 = scmp.eq.s32.totalorder %s97, 1
      %p377 = por %p375, %p376
      %p378 = scmp.ne.s32.totalorder %s369, %s370
      %p379 = scmp.eq.s32.totalorder %s97, 0
      %p380 = por %p378, %p379
      %p381 = scmp.ne.s32.totalorder %s369, %s370
      %p382 = scmp.eq.s32.totalorder %s98, 1
      %p383 = por %p381, %p382
      %p385 = scmp.ne.s32.totalorder %s370, %s384
      %p386 = scmp.eq.s32.totalorder %s98, 0
      %p387 = por %p385, %p386
      %s389 = sadd.s32 %s388, 1
      %p392 = scmp.eq.s32.totalorder %s92, 1
      %p393 = scmp.ne.s32.totalorder %s388, %s390
      %p394 = scmp.eq.s32.totalorder %s92, 0
      %p395 = por %p393, %p394
      %p396 = scmp.ne.s32.totalorder %s388, %s390
      %p397 = scmp.eq.s32.totalorder %s97, 1
      %p398 = por %p396, %p397
      %p399 = scmp.ne.s32.totalorder %s390, %s391
      %p400 = scmp.eq.s32.totalorder %s97, 0
      %p401 = por %p399, %p400
      %p402 = scmp.ne.s32.totalorder %s390, %s391
      %p403 = scmp.eq.s32.totalorder %s98, 1
      %p404 = por %p402, %p403
      %p406 = scmp.ne.s32.totalorder %s391, %s405
      %p407 = scmp.eq.s32.totalorder %s98, 0
      %p408 = por %p406, %p407
      %s410 = sadd.s32 %s409, 1
      %p413 = scmp.eq.s32.totalorder %s92, 1
      %p414 = scmp.ne.s32.totalorder %s409, %s411
      %p415 = scmp.eq.s32.totalorder %s92, 0
      %p416 = por %p414, %p415
      %p417 = scmp.ne.s32.totalorder %s409, %s411
      %p418 = scmp.eq.s32.totalorder %s97, 1
      %p419 = por %p417, %p418
      %p420 = scmp.ne.s32.totalorder %s411, %s412
      %p421 = scmp.eq.s32.totalorder %s97, 0
      %p422 = por %p420, %p421
      %p423 = scmp.ne.s32.totalorder %s411, %s412
      %p424 = scmp.eq.s32.totalorder %s98, 1
      %p425 = por %p423, %p424
      %p427 = scmp.ne.s32.totalorder %s412, %s426
      %p428 = scmp.eq.s32.totalorder %s98, 0
      %p429 = por %p427, %p428
      %s431 = sadd.s32 %s430, 1
      %p434 = scmp.eq.s32.totalorder %s92, 1
      %p435 = scmp.ne.s32.totalorder %s430, %s432
      %p436 = scmp.eq.s32.totalorder %s92, 0
      %p437 = por %p435, %p436
      %p438 = scmp.ne.s32.totalorder %s430, %s432
      %p439 = scmp.eq.s32.totalorder %s97, 1
      %p440 = por %p438, %p439
      %p441 = scmp.ne.s32.totalorder %s432, %s433
      %p442 = scmp.eq.s32.totalorder %s97, 0
      %p443 = por %p441, %p442
      %p444 = scmp.ne.s32.totalorder %s432, %s433
      %p445 = scmp.eq.s32.totalorder %s98, 1
      %p446 = por %p444, %p445
      %p448 = scmp.ne.s32.totalorder %s433, %s447
      %p449 = scmp.eq.s32.totalorder %s98, 0
      %p450 = por %p448, %p449
      %s452 = sadd.s32 %s451, 1
      %p455 = scmp.eq.s32.totalorder %s92, 1
      %p456 = scmp.ne.s32.totalorder %s451, %s453
      %p457 = scmp.eq.s32.totalorder %s92, 0
      %p458 = por %p456, %p457
      %p459 = scmp.ne.s32.totalorder %s451, %s453
      %p460 = scmp.eq.s32.totalorder %s97, 1
      %p461 = por %p459, %p460
      %p462 = scmp.ne.s32.totalorder %s453, %s454
      %p463 = scmp.eq.s32.totalorder %s97, 0
      %p464 = por %p462, %p463
      %p465 = scmp.ne.s32.totalorder %s453, %s454
      %p466 = scmp.eq.s32.totalorder %s98, 1
      %p467 = por %p465, %p466
      %p469 = scmp.ne.s32.totalorder %s454, %s468
      %p470 = scmp.eq.s32.totalorder %s98, 0
      %p471 = por %p469, %p470
      %s473 = sadd.s32 %s472, 1
      %p476 = scmp.eq.s32.totalorder %s92, 1
      %p477 = scmp.ne.s32.totalorder %s472, %s474
      %p478 = scmp.eq.s32.totalorder %s92, 0
      %p479 = por %p477, %p478
      %p480 = scmp.ne.s32.totalorder %s472, %s474
      %p481 = scmp.eq.s32.totalorder %s97, 1
      %p482 = por %p480, %p481
      %p483 = scmp.ne.s32.totalorder %s474, %s475
      %p484 = scmp.eq.s32.totalorder %s97, 0
      %p485 = por %p483, %p484
      %p486 = scmp.ne.s32.totalorder %s474, %s475
      %p487 = scmp.eq.s32.totalorder %s98, 1
      %p488 = por %p486, %p487
      %p490 = scmp.ne.s32.totalorder %s475, %s489
      %p491 = scmp.eq.s32.totalorder %s98, 0
      %p492 = por %p490, %p491
      %s494 = sadd.s32 %s493, 1
      %p497 = scmp.eq.s32.totalorder %s92, 1
      %p498 = scmp.ne.s32.totalorder %s493, %s495
      %p499 = scmp.eq.s32.totalorder %s92, 0
      %p500 = por %p498, %p499
      %p501 = scmp.ne.s32.totalorder %s493, %s495
      %p502 = scmp.eq.s32.totalorder %s97, 1
      %p503 = por %p501, %p502
      %p504 = scmp.ne.s32.totalorder %s495, %s496
      %p505 = scmp.eq.s32.totalorder %s97, 0
      %p506 = por %p504, %p505
      %p507 = scmp.ne.s32.totalorder %s495, %s496
      %p508 = scmp.eq.s32.totalorder %s98, 1
      %p509 = por %p507, %p508
      %p511 = scmp.ne.s32.totalorder %s496, %s510
      %p512 = scmp.eq.s32.totalorder %s98, 0
      %p513 = por %p511, %p512
      %s515 = sadd.s32 %s514, 1
      %p518 = scmp.eq.s32.totalorder %s92, 1
      %p519 = scmp.ne.s32.totalorder %s514, %s516
      %p520 = scmp.eq.s32.totalorder %s92, 0
      %p521 = por %p519, %p520
      %p522 = scmp.ne.s32.totalorder %s514, %s516
      %p523 = scmp.eq.s32.totalorder %s97, 1
      %p524 = por %p522, %p523
      %p525 = scmp.ne.s32.totalorder %s516, %s517
      %p526 = scmp.eq.s32.totalorder %s97, 0
      %p527 = por %p525, %p526
      %p528 = scmp.ne.s32.totalorder %s516, %s517
      %p529 = scmp.eq.s32.totalorder %s98, 1
      %p530 = por %p528, %p529
      %p532 = scmp.ne.s32.totalorder %s517, %s531
      %p533 = scmp.eq.s32.totalorder %s98, 0
      %p534 = por %p532, %p533
      %s536 = sadd.s32 %s535, 1
      %p539 = scmp.eq.s32.totalorder %s92, 1
      %p540 = scmp.ne.s32.totalorder %s535, %s537
      %p541 = scmp.eq.s32.totalorder %s92, 0
      %p542 = por %p540, %p541
      %p543 = scmp.ne.s32.totalorder %s535, %s537
      %p544 = scmp.eq.s32.totalorder %s97, 1
      %p545 = por %p543, %p544
      %p546 = scmp.ne.s32.totalorder %s537, %s538
      %p547 = scmp.eq.s32.totalorder %s97, 0
      %p548 = por %p546, %p547
      %p549 = scmp.ne.s32.totalorder %s537, %s538
      %p550 = scmp.eq.s32.totalorder %s98, 1
      %p551 = por %p549, %p550
      %p553 = scmp.ne.s32.totalorder %s538, %s552
      %p554 = scmp.eq.s32.totalorder %s98, 0
      %p555 = por %p553, %p554
      %s557 = sadd.s32 %s556, 1
      %p560 = scmp.eq.s32.totalorder %s92, 1
      %p561 = scmp.ne.s32.totalorder %s556, %s558
      %p562 = scmp.eq.s32.totalorder %s92, 0
      %p563 = por %p561, %p562
      %p564 = scmp.ne.s32.totalorder %s556, %s558
      %p565 = scmp.eq.s32.totalorder %s97, 1
      %p566 = por %p564, %p565
      %p567 = scmp.ne.s32.totalorder %s558, %s559
      %p568 = scmp.eq.s32.totalorder %s97, 0
      %p569 = por %p567, %p568
      %p570 = scmp.ne.s32.totalorder %s558, %s559
      %p571 = scmp.eq.s32.totalorder %s98, 1
      %p572 = por %p570, %p571
      %p574 = scmp.ne.s32.totalorder %s559, %s573
      %p575 = scmp.eq.s32.totalorder %s98, 0
      %p576 = por %p574, %p575
      %s578 = sadd.s32 %s577, 1
      %p581 = scmp.eq.s32.totalorder %s92, 1
      %p582 = scmp.ne.s32.totalorder %s577, %s579
      %p583 = scmp.eq.s32.totalorder %s92, 0
      %p584 = por %p582, %p583
      %p585 = scmp.ne.s32.totalorder %s577, %s579
      %p586 = scmp.eq.s32.totalorder %s97, 1
      %p587 = por %p585, %p586
      %p588 = scmp.ne.s32.totalorder %s579, %s580
      %p589 = scmp.eq.s32.totalorder %s97, 0
      %p590 = por %p588, %p589
      %p591 = scmp.ne.s32.totalorder %s579, %s580
      %p592 = scmp.eq.s32.totalorder %s98, 1
      %p593 = por %p591, %p592
      %p595 = scmp.ne.s32.totalorder %s580, %s594
      %p596 = scmp.eq.s32.totalorder %s98, 0
      %p597 = por %p595, %p596
      %s599 = sadd.s32 %s598, 1
      %p602 = scmp.eq.s32.totalorder %s92, 1
      %p603 = scmp.ne.s32.totalorder %s598, %s600
      %p604 = scmp.eq.s32.totalorder %s92, 0
      %p605 = por %p603, %p604
      %p606 = scmp.ne.s32.totalorder %s598, %s600
      %p607 = scmp.eq.s32.totalorder %s97, 1
      %p608 = por %p606, %p607
      %p609 = scmp.ne.s32.totalorder %s600, %s601
      %p610 = scmp.eq.s32.totalorder %s97, 0
      %p611 = por %p609, %p610
      %p612 = scmp.ne.s32.totalorder %s600, %s601
      %p613 = scmp.eq.s32.totalorder %s98, 1
      %p614 = por %p612, %p613
      %p616 = scmp.ne.s32.totalorder %s601, %s615
      %p617 = scmp.eq.s32.totalorder %s98, 0
      %p618 = por %p616, %p617
      %s620 = sadd.s32 %s619, 1
      %p623 = scmp.eq.s32.totalorder %s92, 1
      %p624 = scmp.ne.s32.totalorder %s619, %s621
      %p625 = scmp.eq.s32.totalorder %s92, 0
      %p626 = por %p624, %p625
      %p627 = scmp.ne.s32.totalorder %s619, %s621
      %p628 = scmp.eq.s32.totalorder %s97, 1
      %p629 = por %p627, %p628
      %p630 = scmp.ne.s32.totalorder %s621, %s622
      %p631 = scmp.eq.s32.totalorder %s97, 0
      %p632 = por %p630, %p631
      %p633 = scmp.ne.s32.totalorder %s621, %s622
      %p634 = scmp.eq.s32.totalorder %s98, 1
      %p635 = por %p633, %p634
      %p637 = scmp.ne.s32.totalorder %s622, %s636
      %p638 = scmp.eq.s32.totalorder %s98, 0
      %p639 = por %p637, %p638
      %s641 = sadd.s32 %s640, 1
      %p644 = scmp.eq.s32.totalorder %s92, 1
      %p645 = scmp.ne.s32.totalorder %s640, %s642
      %p646 = scmp.eq.s32.totalorder %s92, 0
      %p647 = por %p645, %p646
      %p648 = scmp.ne.s32.totalorder %s640, %s642
      %p649 = scmp.eq.s32.totalorder %s97, 1
      %p650 = por %p648, %p649
      %p651 = scmp.ne.s32.totalorder %s642, %s643
      %p652 = scmp.eq.s32.totalorder %s97, 0
      %p653 = por %p651, %p652
      %p654 = scmp.ne.s32.totalorder %s642, %s643
      %p655 = scmp.eq.s32.totalorder %s98, 1
      %p656 = por %p654, %p655
      %p658 = scmp.ne.s32.totalorder %s643, %s657
      %p659 = scmp.eq.s32.totalorder %s98, 0
      %p660 = por %p658, %p659
      %s662 = sadd.s32 %s661, 1
      %p665 = scmp.eq.s32.totalorder %s92, 1
      %p666 = scmp.ne.s32.totalorder %s661, %s663
      %p667 = scmp.eq.s32.totalorder %s92, 0
      %p668 = por %p666, %p667
      %p669 = scmp.ne.s32.totalorder %s661, %s663
      %p670 = scmp.eq.s32.totalorder %s97, 1
      %p671 = por %p669, %p670
      %p672 = scmp.ne.s32.totalorder %s663, %s664
      %p673 = scmp.eq.s32.totalorder %s97, 0
      %p674 = por %p672, %p673
      %p675 = scmp.ne.s32.totalorder %s663, %s664
      %p676 = scmp.eq.s32.totalorder %s98, 1
      %p677 = por %p675, %p676
      %p679 = scmp.ne.s32.totalorder %s664, %s678
      %p680 = scmp.eq.s32.totalorder %s98, 0
      %p681 = por %p679, %p680
      %s683 = sadd.s32 %s682, 1
      %p686 = scmp.eq.s32.totalorder %s92, 1
      %p687 = scmp.ne.s32.totalorder %s682, %s684
      %p688 = scmp.eq.s32.totalorder %s92, 0
      %p689 = por %p687, %p688
      %p690 = scmp.ne.s32.totalorder %s682, %s684
      %p691 = scmp.eq.s32.totalorder %s97, 1
      %p692 = por %p690, %p691
      %p693 = scmp.ne.s32.totalorder %s684, %s685
      %p694 = scmp.eq.s32.totalorder %s97, 0
      %p695 = por %p693, %p694
      %p696 = scmp.ne.s32.totalorder %s684, %s685
      %p697 = scmp.eq.s32.totalorder %s98, 1
      %p698 = por %p696, %p697
      %p700 = scmp.ne.s32.totalorder %s685, %s699
      %p701 = scmp.eq.s32.totalorder %s98, 0
      %p702 = por %p700, %p701
      %s704 = sadd.s32 %s703, 1
      %p707 = scmp.eq.s32.totalorder %s92, 1
      %p708 = scmp.ne.s32.totalorder %s703, %s705
      %p709 = scmp.eq.s32.totalorder %s92, 0
      %p710 = por %p708, %p709
      %p711 = scmp.ne.s32.totalorder %s703, %s705
      %p712 = scmp.eq.s32.totalorder %s97, 1
      %p713 = por %p711, %p712
      %p714 = scmp.ne.s32.totalorder %s705, %s706
      %p715 = scmp.eq.s32.totalorder %s97, 0
      %p716 = por %p714, %p715
      %p717 = scmp.ne.s32.totalorder %s705, %s706
      %p718 = scmp.eq.s32.totalorder %s98, 1
      %p719 = por %p717, %p718
      %p721 = scmp.ne.s32.totalorder %s706, %s720
      %p722 = scmp.eq.s32.totalorder %s98, 0
      %p723 = por %p721, %p722
      %s725 = sadd.s32 %s724, 1
      %p728 = scmp.eq.s32.totalorder %s92, 1
      %p729 = scmp.ne.s32.totalorder %s724, %s726
      %p730 = scmp.eq.s32.totalorder %s92, 0
      %p731 = por %p729, %p730
      %p732 = scmp.ne.s32.totalorder %s724, %s726
      %p733 = scmp.eq.s32.totalorder %s97, 1
      %p734 = por %p732, %p733
      %p735 = scmp.ne.s32.totalorder %s726, %s727
      %p736 = scmp.eq.s32.totalorder %s97, 0
      %p737 = por %p735, %p736
      %p738 = scmp.ne.s32.totalorder %s726, %s727
      %p739 = scmp.eq.s32.totalorder %s98, 1
      %p740 = por %p738, %p739
      %p742 = scmp.ne.s32.totalorder %s727, %s741
      %p743 = scmp.eq.s32.totalorder %s98, 0
      %p744 = por %p742, %p743
      %s746 = sadd.s32 %s745, 1
      %p749 = scmp.eq.s32.totalorder %s92, 1
      %p750 = scmp.ne.s32.totalorder %s745, %s747
      %p751 = scmp.eq.s32.totalorder %s92, 0
      %p752 = por %p750, %p751
      %p753 = scmp.ne.s32.totalorder %s745, %s747
      %p754 = scmp.eq.s32.totalorder %s97, 1
      %p755 = por %p753, %p754
      %p756 = scmp.ne.s32.totalorder %s747, %s748
      %p757 = scmp.eq.s32.totalorder %s97, 0
      %p758 = por %p756, %p757
      %p759 = scmp.ne.s32.totalorder %s747, %s748
      %p760 = scmp.eq.s32.totalorder %s98, 1
      %p761 = por %p759, %p760
      %p763 = scmp.ne.s32.totalorder %s748, %s762
      %p764 = scmp.eq.s32.totalorder %s98, 0
      %p765 = por %p763, %p764
      %s767 = sadd.s32 %s766, 1
      %p770 = scmp.eq.s32.totalorder %s92, 1
      %p771 = scmp.ne.s32.totalorder %s766, %s768
      %p772 = scmp.eq.s32.totalorder %s92, 0
      %p773 = por %p771, %p772
      %p774 = scmp.ne.s32.totalorder %s766, %s768
      %p775 = scmp.eq.s32.totalorder %s97, 1
      %p776 = por %p774, %p775
      %p777 = scmp.ne.s32.totalorder %s768, %s769
      %p778 = scmp.eq.s32.totalorder %s97, 0
      %p779 = por %p777, %p778
      %p780 = scmp.ne.s32.totalorder %s768, %s769
      %p781 = scmp.eq.s32.totalorder %s98, 1
      %p782 = por %p780, %p781
      %p784 = scmp.ne.s32.totalorder %s769, %s783
      %p785 = scmp.eq.s32.totalorder %s98, 0
      %p786 = por %p784, %p785
      %s788 = sadd.s32 %s787, 1
      %p791 = scmp.eq.s32.totalorder %s92, 1
      %p792 = scmp.ne.s32.totalorder %s787, %s789
      %p793 = scmp.eq.s32.totalorder %s92, 0
      %p794 = por %p792, %p793
      %p795 = scmp.ne.s32.totalorder %s787, %s789
      %p796 = scmp.eq.s32.totalorder %s97, 1
      %p797 = por %p795, %p796
      %p798 = scmp.ne.s32.totalorder %s789, %s790
      %p799 = scmp.eq.s32.totalorder %s97, 0
      %p800 = por %p798, %p799
      %p801 = scmp.ne.s32.totalorder %s789, %s790
      %p802 = scmp.eq.s32.totalorder %s98, 1
      %p803 = por %p801, %p802
      %p805 = scmp.ne.s32.totalorder %s790, %s804
      %p806 = scmp.eq.s32.totalorder %s98, 0
      %p807 = por %p805, %p806
      %s809 = sadd.s32 %s808, 1
      %p812 = scmp.eq.s32.totalorder %s92, 1
      %p813 = scmp.ne.s32.totalorder %s808, %s810
      %p814 = scmp.eq.s32.totalorder %s92, 0
      %p815 = por %p813, %p814
      %p816 = scmp.ne.s32.totalorder %s808, %s810
      %p817 = scmp.eq.s32.totalorder %s97, 1
      %p818 = por %p816, %p817
      %p819 = scmp.ne.s32.totalorder %s810, %s811
      %p820 = scmp.eq.s32.totalorder %s97, 0
      %p821 = por %p819, %p820
      %p822 = scmp.ne.s32.totalorder %s810, %s811
      %p823 = scmp.eq.s32.totalorder %s98, 1
      %p824 = por %p822, %p823
      %p826 = scmp.ne.s32.totalorder %s811, %s825
      %p827 = scmp.eq.s32.totalorder %s98, 0
      %p828 = por %p826, %p827
      %s830 = sadd.s32 %s829, 1
      %p833 = scmp.eq.s32.totalorder %s92, 1
      %p834 = scmp.ne.s32.totalorder %s829, %s831
      %p835 = scmp.eq.s32.totalorder %s92, 0
      %p836 = por %p834, %p835
      %p837 = scmp.ne.s32.totalorder %s829, %s831
      %p838 = scmp.eq.s32.totalorder %s97, 1
      %p839 = por %p837, %p838
      %p840 = scmp.ne.s32.totalorder %s831, %s832
      %p841 = scmp.eq.s32.totalorder %s97, 0
      %p842 = por %p840, %p841
      %p843 = scmp.ne.s32.totalorder %s831, %s832
      %p844 = scmp.eq.s32.totalorder %s98, 1
      %p845 = por %p843, %p844
      %p847 = scmp.ne.s32.totalorder %s832, %s846
      %p848 = scmp.eq.s32.totalorder %s98, 0
      %p849 = por %p847, %p848
      %s851 = sadd.s32 %s850, 1
      %p854 = scmp.eq.s32.totalorder %s92, 1
      %p855 = scmp.ne.s32.totalorder %s850, %s852
      %p856 = scmp.eq.s32.totalorder %s92, 0
      %p857 = por %p855, %p856
      %p858 = scmp.ne.s32.totalorder %s850, %s852
      %p859 = scmp.eq.s32.totalorder %s97, 1
      %p860 = por %p858, %p859
      %p861 = scmp.ne.s32.totalorder %s852, %s853
      %p862 = scmp.eq.s32.totalorder %s97, 0
      %p863 = por %p861, %p862
      %p864 = scmp.ne.s32.totalorder %s852, %s853
      %p865 = scmp.eq.s32.totalorder %s98, 1
      %p866 = por %p864, %p865
      %p868 = scmp.ne.s32.totalorder %s853, %s867
      %p869 = scmp.eq.s32.totalorder %s98, 0
      %p870 = por %p868, %p869
      %s872 = sadd.s32 %s871, 1
      %p875 = scmp.eq.s32.totalorder %s92, 1
      %p876 = scmp.ne.s32.totalorder %s871, %s873
      %p877 = scmp.eq.s32.totalorder %s92, 0
      %p878 = por %p876, %p877
      %p879 = scmp.ne.s32.totalorder %s871, %s873
      %p880 = scmp.eq.s32.totalorder %s97, 1
      %p881 = por %p879, %p880
      %p882 = scmp.ne.s32.totalorder %s873, %s874
      %p883 = scmp.eq.s32.totalorder %s97, 0
      %p884 = por %p882, %p883
      %p885 = scmp.ne.s32.totalorder %s873, %s874
      %p886 = scmp.eq.s32.totalorder %s98, 1
      %p887 = por %p885, %p886
      %p889 = scmp.ne.s32.totalorder %s874, %s888
      %p890 = scmp.eq.s32.totalorder %s98, 0
      %p891 = por %p889, %p890
      %s893 = sadd.s32 %s892, 1
      %p896 = scmp.eq.s32.totalorder %s92, 1
      %p897 = scmp.ne.s32.totalorder %s892, %s894
      %p898 = scmp.eq.s32.totalorder %s92, 0
      %p899 = por %p897, %p898
      %p900 = scmp.ne.s32.totalorder %s892, %s894
      %p901 = scmp.eq.s32.totalorder %s97, 1
      %p902 = por %p900, %p901
      %p903 = scmp.ne.s32.totalorder %s894, %s895
      %p904 = scmp.eq.s32.totalorder %s97, 0
      %p905 = por %p903, %p904
      %p906 = scmp.ne.s32.totalorder %s894, %s895
      %p907 = scmp.eq.s32.totalorder %s98, 1
      %p908 = por %p906, %p907
      %p910 = scmp.ne.s32.totalorder %s895, %s909
      %p911 = scmp.eq.s32.totalorder %s98, 0
      %p912 = por %p910, %p911
      %s914 = sadd.s32 %s913, 1
      %p917 = scmp.eq.s32.totalorder %s92, 1
      %p918 = scmp.ne.s32.totalorder %s913, %s915
      %p919 = scmp.eq.s32.totalorder %s92, 0
      %p920 = por %p918, %p919
      %p921 = scmp.ne.s32.totalorder %s913, %s915
      %p922 = scmp.eq.s32.totalorder %s97, 1
      %p923 = por %p921, %p922
      %p924 = scmp.ne.s32.totalorder %s915, %s916
      %p925 = scmp.eq.s32.totalorder %s97, 0
      %p926 = por %p924, %p925
      %p927 = scmp.ne.s32.totalorder %s915, %s916
      %p928 = scmp.eq.s32.totalorder %s98, 1
      %p929 = por %p927, %p928
      %p931 = scmp.ne.s32.totalorder %s916, %s930
      %p932 = scmp.eq.s32.totalorder %s98, 0
      %p933 = por %p931, %p932
      %s935 = sadd.s32 %s934, 1
      %p938 = scmp.eq.s32.totalorder %s92, 1
      %p939 = scmp.ne.s32.totalorder %s934, %s936
      %p940 = scmp.eq.s32.totalorder %s92, 0
      %p941 = por %p939, %p940
      %p942 = scmp.ne.s32.totalorder %s934, %s936
      %p943 = scmp.eq.s32.totalorder %s97, 1
      %p944 = por %p942, %p943
      %p945 = scmp.ne.s32.totalorder %s936, %s937
      %p946 = scmp.eq.s32.totalorder %s97, 0
      %p947 = por %p945, %p946
      %p948 = scmp.ne.s32.totalorder %s936, %s937
      %p949 = scmp.eq.s32.totalorder %s98, 1
      %p950 = por %p948, %p949
      %p952 = scmp.ne.s32.totalorder %s937, %s951
      %p953 = scmp.eq.s32.totalorder %s98, 0
      %p954 = por %p952, %p953
      %s956 = sadd.s32 %s955, 1
      %p959 = scmp.eq.s32.totalorder %s92, 1
      %p960 = scmp.ne.s32.totalorder %s955, %s957
      %p961 = scmp.eq.s32.totalorder %s92, 0
      %p962 = por %p960, %p961
      %p963 = scmp.ne.s32.totalorder %s955, %s957
      %p964 = scmp.eq.s32.totalorder %s97, 1
      %p965 = por %p963, %p964
      %p966 = scmp.ne.s32.totalorder %s957, %s958
      %p967 = scmp.eq.s32.totalorder %s97, 0
      %p968 = por %p966, %p967
      %p969 = scmp.ne.s32.totalorder %s957, %s958
      %p970 = scmp.eq.s32.totalorder %s98, 1
      %p971 = por %p969, %p970
      %p973 = scmp.ne.s32.totalorder %s958, %s972
      %p974 = scmp.eq.s32.totalorder %s98, 0
      %p975 = por %p973, %p974
      %s976 = ssub.s32 %s92, %s99
      %p977 = scmp.eq.s32.totalorder %s976, 0
      %s979 = sadd.s32 %s978, 1
      %s980 = scalar_select %p977, %s978, %s979
      %p983 = pneg %p977
      %p984 = scmp.eq.s32.totalorder %s92, 1
      %p985 = por %p983, %p984
      %p986 = scmp.ne.s32.totalorder %s978, %s981
      %p987 = scmp.eq.s32.totalorder %s92, 0
      %p988 = por %p986, %p987
      %p989 = scmp.ne.s32.totalorder %s978, %s981
      %p990 = scmp.eq.s32.totalorder %s97, 1
      %p991 = por %p989, %p990
      %p992 = scmp.ne.s32.totalorder %s981, %s982
      %p993 = scmp.eq.s32.totalorder %s97, 0
      %p994 = por %p992, %p993
      %p995 = scmp.ne.s32.totalorder %s981, %s982
      %p996 = scmp.eq.s32.totalorder %s98, 1
      %p997 = por %p995, %p996
      %p999 = scmp.ne.s32.totalorder %s982, %s998
      %p1000 = scmp.eq.s32.totalorder %s98, 0
      %p1001 = por %p999, %p1000
      %p1002 = scmp.le.s32.totalorder 1, %s92
      %p1003 = scmp.lt.s32.totalorder %s92, 3
      %p1004 = pnand %p1002, %p1003
      %p1005 = pneg %p1004
      // Predicated region
      $region9: #{transformer_forward.1} parent=5 // pred_check
        _
      $region10: #{transformer_forward.1} parent=5 // pred_check_branch
        %1007 = sbr.rel (%p1004) target = $region12
      $region11: #{transformer_forward.1} parent=5 // pred_region
        %s1008 = ssub.s32 %s92, 1
        // Predicated region
        $region13: #{transformer_forward.1} parent=11 // pred_check
          %p1009 = pneg %p191
        $region14: #{transformer_forward.1} parent=11 // pred_check_branch
          %1011 = sbr.rel (%p1009) target = $region16
        $region15: #{transformer_forward.1} parent=11 // pred_region
          _
        $region16: #{transformer_forward.1} parent=11 // pred_fallthru
          _
        // Predicated region
        $region17: #{transformer_forward.1} parent=11 // pred_check
          %p1012 = pneg %p212
        $region18: #{transformer_forward.1} parent=11 // pred_check_branch
          %1014 = sbr.rel (%p1012) target = $region20
        $region19: #{transformer_forward.1} parent=11 // pred_region
          _
        $region20: #{transformer_forward.1} parent=11 // pred_fallthru
          _
        // Predicated region
        $region21: #{transformer_forward.1} parent=11 // pred_check
          %p1015 = pneg %p233
        $region22: #{transformer_forward.1} parent=11 // pred_check_branch
          %1017 = sbr.rel (%p1015) target = $region24
        $region23: #{transformer_forward.1} parent=11 // pred_region
          _
        $region24: #{transformer_forward.1} parent=11 // pred_fallthru
          _
        // Predicated region
        $region25: #{transformer_forward.1} parent=11 // pred_check
          %p1018 = pneg %p254
        $region26: #{transformer_forward.1} parent=11 // pred_check_branch
          %1020 = sbr.rel (%p1018) target = $region28
        $region27: #{transformer_forward.1} parent=11 // pred_region
          _
        $region28: #{transformer_forward.1} parent=11 // pred_fallthru
          _
        // Predicated region
        $region29: #{transformer_forward.1} parent=11 // pred_check
          %p1021 = pneg %p275
        $region30: #{transformer_forward.1} parent=11 // pred_check_branch
          %1023 = sbr.rel (%p1021) target = $region32
        $region31: #{transformer_forward.1} parent=11 // pred_region
          _
        $region32: #{transformer_forward.1} parent=11 // pred_fallthru
          _
        // Predicated region
        $region33: #{transformer_forward.1} parent=11 // pred_check
          %p1024 = pneg %p296
        $region34: #{transformer_forward.1} parent=11 // pred_check_branch
          %1026 = sbr.rel (%p1024) target = $region36
        $region35: #{transformer_forward.1} parent=11 // pred_region
          _
        $region36: #{transformer_forward.1} parent=11 // pred_fallthru
          _
        // Predicated region
        $region37: #{transformer_forward.1} parent=11 // pred_check
          %p1027 = pneg %p317
        $region38: #{transformer_forward.1} parent=11 // pred_check_branch
          %1029 = sbr.rel (%p1027) target = $region40
        $region39: #{transformer_forward.1} parent=11 // pred_region
          _
        $region40: #{transformer_forward.1} parent=11 // pred_fallthru
          _
        // Predicated region
        $region41: #{transformer_forward.1} parent=11 // pred_check
          %p1030 = pneg %p338
        $region42: #{transformer_forward.1} parent=11 // pred_check_branch
          %1032 = sbr.rel (%p1030) target = $region44
        $region43: #{transformer_forward.1} parent=11 // pred_region
          _
        $region44: #{transformer_forward.1} parent=11 // pred_fallthru
          _
        // Predicated region
        $region45: #{transformer_forward.1} parent=11 // pred_check
          %p1033 = pneg %p359
        $region46: #{transformer_forward.1} parent=11 // pred_check_branch
          %1035 = sbr.rel (%p1033) target = $region48
        $region47: #{transformer_forward.1} parent=11 // pred_region
          _
        $region48: #{transformer_forward.1} parent=11 // pred_fallthru
          _
        // Predicated region
        $region49: #{transformer_forward.1} parent=11 // pred_check
          %p1036 = pneg %p380
        $region50: #{transformer_forward.1} parent=11 // pred_check_branch
          %1038 = sbr.rel (%p1036) target = $region52
        $region51: #{transformer_forward.1} parent=11 // pred_region
          _
        $region52: #{transformer_forward.1} parent=11 // pred_fallthru
          _
        // Predicated region
        $region53: #{transformer_forward.1} parent=11 // pred_check
          %p1039 = pneg %p401
        $region54: #{transformer_forward.1} parent=11 // pred_check_branch
          %1041 = sbr.rel (%p1039) target = $region56
        $region55: #{transformer_forward.1} parent=11 // pred_region
          _
        $region56: #{transformer_forward.1} parent=11 // pred_fallthru
          _
        // Predicated region
        $region57: #{transformer_forward.1} parent=11 // pred_check
          %p1042 = pneg %p422
        $region58: #{transformer_forward.1} parent=11 // pred_check_branch
          %1044 = sbr.rel (%p1042) target = $region60
        $region59: #{transformer_forward.1} parent=11 // pred_region
          _
        $region60: #{transformer_forward.1} parent=11 // pred_fallthru
          _
        // Predicated region
        $region61: #{transformer_forward.1} parent=11 // pred_check
          %p1045 = pneg %p443
        $region62: #{transformer_forward.1} parent=11 // pred_check_branch
          %1047 = sbr.rel (%p1045) target = $region64
        $region63: #{transformer_forward.1} parent=11 // pred_region
          _
        $region64: #{transformer_forward.1} parent=11 // pred_fallthru
          _
        // Predicated region
        $region65: #{transformer_forward.1} parent=11 // pred_check
          %p1048 = pneg %p464
        $region66: #{transformer_forward.1} parent=11 // pred_check_branch
          %1050 = sbr.rel (%p1048) target = $region68
        $region67: #{transformer_forward.1} parent=11 // pred_region
          _
        $region68: #{transformer_forward.1} parent=11 // pred_fallthru
          _
        // Predicated region
        $region69: #{transformer_forward.1} parent=11 // pred_check
          %p1051 = pneg %p485
        $region70: #{transformer_forward.1} parent=11 // pred_check_branch
          %1053 = sbr.rel (%p1051) target = $region72
        $region71: #{transformer_forward.1} parent=11 // pred_region
          _
        $region72: #{transformer_forward.1} parent=11 // pred_fallthru
          _
        // Predicated region
        $region73: #{transformer_forward.1} parent=11 // pred_check
          %p1054 = pneg %p506
        $region74: #{transformer_forward.1} parent=11 // pred_check_branch
          %1056 = sbr.rel (%p1054) target = $region76
        $region75: #{transformer_forward.1} parent=11 // pred_region
          _
        $region76: #{transformer_forward.1} parent=11 // pred_fallthru
          _
        // Predicated region
        $region77: #{transformer_forward.1} parent=11 // pred_check
          %p1057 = pneg %p527
        $region78: #{transformer_forward.1} parent=11 // pred_check_branch
          %1059 = sbr.rel (%p1057) target = $region80
        $region79: #{transformer_forward.1} parent=11 // pred_region
          _
        $region80: #{transformer_forward.1} parent=11 // pred_fallthru
          _
        // Predicated region
        $region81: #{transformer_forward.1} parent=11 // pred_check
          %p1060 = pneg %p548
        $region82: #{transformer_forward.1} parent=11 // pred_check_branch
          %1062 = sbr.rel (%p1060) target = $region84
        $region83: #{transformer_forward.1} parent=11 // pred_region
          _
        $region84: #{transformer_forward.1} parent=11 // pred_fallthru
          _
        // Predicated region
        $region85: #{transformer_forward.1} parent=11 // pred_check
          %p1063 = pneg %p569
        $region86: #{transformer_forward.1} parent=11 // pred_check_branch
          %1065 = sbr.rel (%p1063) target = $region88
        $region87: #{transformer_forward.1} parent=11 // pred_region
          _
        $region88: #{transformer_forward.1} parent=11 // pred_fallthru
          _
        // Predicated region
        $region89: #{transformer_forward.1} parent=11 // pred_check
          %p1066 = pneg %p590
        $region90: #{transformer_forward.1} parent=11 // pred_check_branch
          %1068 = sbr.rel (%p1066) target = $region92
        $region91: #{transformer_forward.1} parent=11 // pred_region
          _
        $region92: #{transformer_forward.1} parent=11 // pred_fallthru
          _
        // Predicated region
        $region93: #{transformer_forward.1} parent=11 // pred_check
          %p1069 = pneg %p611
        $region94: #{transformer_forward.1} parent=11 // pred_check_branch
          %1071 = sbr.rel (%p1069) target = $region96
        $region95: #{transformer_forward.1} parent=11 // pred_region
          _
        $region96: #{transformer_forward.1} parent=11 // pred_fallthru
          _
        // Predicated region
        $region97: #{transformer_forward.1} parent=11 // pred_check
          %p1072 = pneg %p632
        $region98: #{transformer_forward.1} parent=11 // pred_check_branch
          %1074 = sbr.rel (%p1072) target = $region100
        $region99: #{transformer_forward.1} parent=11 // pred_region
          _
        $region100: #{transformer_forward.1} parent=11 // pred_fallthru
          _
        // Predicated region
        $region101: #{transformer_forward.1} parent=11 // pred_check
          %p1075 = pneg %p653
        $region102: #{transformer_forward.1} parent=11 // pred_check_branch
          %1077 = sbr.rel (%p1075) target = $region104
        $region103: #{transformer_forward.1} parent=11 // pred_region
          _
        $region104: #{transformer_forward.1} parent=11 // pred_fallthru
          _
        // Predicated region
        $region105: #{transformer_forward.1} parent=11 // pred_check
          %p1078 = pneg %p674
        $region106: #{transformer_forward.1} parent=11 // pred_check_branch
          %1080 = sbr.rel (%p1078) target = $region108
        $region107: #{transformer_forward.1} parent=11 // pred_region
          _
        $region108: #{transformer_forward.1} parent=11 // pred_fallthru
          _
        // Predicated region
        $region109: #{transformer_forward.1} parent=11 // pred_check
          %p1081 = pneg %p695
        $region110: #{transformer_forward.1} parent=11 // pred_check_branch
          %1083 = sbr.rel (%p1081) target = $region112
        $region111: #{transformer_forward.1} parent=11 // pred_region
          _
        $region112: #{transformer_forward.1} parent=11 // pred_fallthru
          _
        // Predicated region
        $region113: #{transformer_forward.1} parent=11 // pred_check
          %p1084 = pneg %p716
        $region114: #{transformer_forward.1} parent=11 // pred_check_branch
          %1086 = sbr.rel (%p1084) target = $region116
        $region115: #{transformer_forward.1} parent=11 // pred_region
          _
        $region116: #{transformer_forward.1} parent=11 // pred_fallthru
          _
        // Predicated region
        $region117: #{transformer_forward.1} parent=11 // pred_check
          %p1087 = pneg %p737
        $region118: #{transformer_forward.1} parent=11 // pred_check_branch
          %1089 = sbr.rel (%p1087) target = $region120
        $region119: #{transformer_forward.1} parent=11 // pred_region
          _
        $region120: #{transformer_forward.1} parent=11 // pred_fallthru
          _
        // Predicated region
        $region121: #{transformer_forward.1} parent=11 // pred_check
          %p1090 = pneg %p758
        $region122: #{transformer_forward.1} parent=11 // pred_check_branch
          %1092 = sbr.rel (%p1090) target = $region124
        $region123: #{transformer_forward.1} parent=11 // pred_region
          _
        $region124: #{transformer_forward.1} parent=11 // pred_fallthru
          _
        // Predicated region
        $region125: #{transformer_forward.1} parent=11 // pred_check
          %p1093 = pneg %p779
        $region126: #{transformer_forward.1} parent=11 // pred_check_branch
          %1095 = sbr.rel (%p1093) target = $region128
        $region127: #{transformer_forward.1} parent=11 // pred_region
          _
        $region128: #{transformer_forward.1} parent=11 // pred_fallthru
          _
        // Predicated region
        $region129: #{transformer_forward.1} parent=11 // pred_check
          %p1096 = pneg %p800
        $region130: #{transformer_forward.1} parent=11 // pred_check_branch
          %1098 = sbr.rel (%p1096) target = $region132
        $region131: #{transformer_forward.1} parent=11 // pred_region
          _
        $region132: #{transformer_forward.1} parent=11 // pred_fallthru
          _
        // Predicated region
        $region133: #{transformer_forward.1} parent=11 // pred_check
          %p1099 = pneg %p821
        $region134: #{transformer_forward.1} parent=11 // pred_check_branch
          %1101 = sbr.rel (%p1099) target = $region136
        $region135: #{transformer_forward.1} parent=11 // pred_region
          _
        $region136: #{transformer_forward.1} parent=11 // pred_fallthru
          _
        // Predicated region
        $region137: #{transformer_forward.1} parent=11 // pred_check
          %p1102 = pneg %p842
        $region138: #{transformer_forward.1} parent=11 // pred_check_branch
          %1104 = sbr.rel (%p1102) target = $region140
        $region139: #{transformer_forward.1} parent=11 // pred_region
          _
        $region140: #{transformer_forward.1} parent=11 // pred_fallthru
          _
        // Predicated region
        $region141: #{transformer_forward.1} parent=11 // pred_check
          %p1105 = pneg %p863
        $region142: #{transformer_forward.1} parent=11 // pred_check_branch
          %1107 = sbr.rel (%p1105) target = $region144
        $region143: #{transformer_forward.1} parent=11 // pred_region
          _
        $region144: #{transformer_forward.1} parent=11 // pred_fallthru
          _
        // Predicated region
        $region145: #{transformer_forward.1} parent=11 // pred_check
          %p1108 = pneg %p884
        $region146: #{transformer_forward.1} parent=11 // pred_check_branch
          %1110 = sbr.rel (%p1108) target = $region148
        $region147: #{transformer_forward.1} parent=11 // pred_region
          _
        $region148: #{transformer_forward.1} parent=11 // pred_fallthru
          _
        // Predicated region
        $region149: #{transformer_forward.1} parent=11 // pred_check
          %p1111 = pneg %p905
        $region150: #{transformer_forward.1} parent=11 // pred_check_branch
          %1113 = sbr.rel (%p1111) target = $region152
        $region151: #{transformer_forward.1} parent=11 // pred_region
          _
        $region152: #{transformer_forward.1} parent=11 // pred_fallthru
          _
        // Predicated region
        $region153: #{transformer_forward.1} parent=11 // pred_check
          %p1114 = pneg %p926
        $region154: #{transformer_forward.1} parent=11 // pred_check_branch
          %1116 = sbr.rel (%p1114) target = $region156
        $region155: #{transformer_forward.1} parent=11 // pred_region
          _
        $region156: #{transformer_forward.1} parent=11 // pred_fallthru
          _
        // Predicated region
        $region157: #{transformer_forward.1} parent=11 // pred_check
          %p1117 = pneg %p947
        $region158: #{transformer_forward.1} parent=11 // pred_check_branch
          %1119 = sbr.rel (%p1117) target = $region160
        $region159: #{transformer_forward.1} parent=11 // pred_region
          _
        $region160: #{transformer_forward.1} parent=11 // pred_fallthru
          _
        // Predicated region
        $region161: #{transformer_forward.1} parent=11 // pred_check
          %p1120 = pneg %p968
        $region162: #{transformer_forward.1} parent=11 // pred_check_branch
          %1122 = sbr.rel (%p1120) target = $region164
        $region163: #{transformer_forward.1} parent=11 // pred_region
          _
        $region164: #{transformer_forward.1} parent=11 // pred_fallthru
          _
      $region12: #{transformer_forward.1} parent=5 // pred_fallthru
        _
      %p1123 = scmp.lt.s32.totalorder %s92, 2
      // Predicated region
      $region165: #{transformer_forward.1} parent=5 // pred_check
        %p1124 = pneg %p1123
      $region166: #{transformer_forward.1} parent=5 // pred_check_branch
        %1126 = sbr.rel (%p1124) target = $region168
      $region167: #{transformer_forward.1} parent=5 // pred_region
        // Predicated region
        $region169: #{transformer_forward.1} parent=167 // pred_check
          %p1127 = pneg %p112
        $region170: #{transformer_forward.1} parent=167 // pred_check_branch
          %1129 = sbr.rel (%p1127) target = $region172
        $region171: #{transformer_forward.1} parent=167 // pred_region
          %p1130 = scmp.lt.s32.totalorder %s92, 1
          %s1131 = scalar_select %p1130, %s92, 1
          %s1132 = smul.addr %s1131, 8
          %s1133 = scalar_lea.vmem %s1, %s1132
        $region172: #{transformer_forward.1} parent=167 // pred_fallthru
          _
        // Predicated region
        $region173: #{transformer_forward.1} parent=167 // pred_check
          %p1134 = pneg %p138
        $region174: #{transformer_forward.1} parent=167 // pred_check_branch
          %1136 = sbr.rel (%p1134) target = $region176
        $region175: #{transformer_forward.1} parent=167 // pred_region
          %p1137 = scmp.lt.s32.totalorder %s92, 1
          %s1138 = scalar_select %p1137, %s92, 1
          %s1139 = smul.addr %s1138, 8
          %s1140 = scalar_lea.vmem %s3, %s1139
        $region176: #{transformer_forward.1} parent=167 // pred_fallthru
          _
        // Predicated region
        $region177: #{transformer_forward.1} parent=167 // pred_check
          %p1141 = pneg %p164
        $region178: #{transformer_forward.1} parent=167 // pred_check_branch
          %1143 = sbr.rel (%p1141) target = $region180
        $region179: #{transformer_forward.1} parent=167 // pred_region
          %p1144 = scmp.lt.s32.totalorder %s92, 599
          %s1145 = scalar_select %p1144, %s92, 599
          %s1146 = scalar_lea.vmem %s5, %s1145
        $region180: #{transformer_forward.1} parent=167 // pred_fallthru
          _
      $region168: #{transformer_forward.1} parent=5 // pred_fallthru
        _
      %p1147 = scmp.le.s32.totalorder 1, %s92
      %p1148 = scmp.lt.s32.totalorder %s92, 3
      %p1149 = pnand %p1147, %p1148
      %p1150 = pneg %p1149
      // Predicated region
      $region181: #{transformer_forward.1} parent=5 // pred_check
        _
      $region182: #{transformer_forward.1} parent=5 // pred_check_branch
        %1152 = sbr.rel (%p1149) target = $region184
      $region183: #{transformer_forward.1} parent=5 // pred_region
        %s1153 = ssub.s32 %s92, 1
        %p1154 = scmp.lt.s32.totalorder %s97, 1
        %s1155 = scalar_select %p1154, %s97, 1
        %s1156 = smul.addr %s1155, 8
        %s1157 = scalar_lea.vmem %s1, %s1156
        %p1158 = pneg %p118
        %p1159 = pneg %p115
        %p1160 = scmp.lt.s32.totalorder %s97, 1
        %s1161 = scalar_select %p1160, %s97, 1
        %s1162 = smul.addr %s1161, 8
        %s1163 = scalar_lea.vmem %s3, %s1162
        %p1164 = pneg %p144
        %p1165 = pneg %p141
        %p1166 = scmp.lt.s32.totalorder %s97, 599
        %s1167 = scalar_select %p1166, %s97, 599
        %s1168 = scalar_lea.vmem %s5, %s1167
        %p1169 = pneg %p170
        %p1170 = pneg %p167
        %p1171 = pneg %p191
        %p1172 = pneg %p188
        %p1173 = pneg %p212
        %p1174 = pneg %p209
        %p1175 = pneg %p233
        %p1176 = pneg %p230
        %p1177 = pneg %p254
        %p1178 = pneg %p251
        %p1179 = pneg %p275
        %p1180 = pneg %p272
        %p1181 = pneg %p296
        %p1182 = pneg %p293
        %p1183 = pneg %p317
        %p1184 = pneg %p314
        %p1185 = pneg %p338
        %p1186 = pneg %p335
        %p1187 = pneg %p359
        %p1188 = pneg %p356
        %p1189 = pneg %p380
        %p1190 = pneg %p377
        %p1191 = pneg %p401
        %p1192 = pneg %p398
        %p1193 = pneg %p422
        %p1194 = pneg %p419
        %p1195 = pneg %p443
        %p1196 = pneg %p440
        %p1197 = pneg %p464
        %p1198 = pneg %p461
        %p1199 = pneg %p485
        %p1200 = pneg %p482
        %p1201 = pneg %p506
        %p1202 = pneg %p503
        %p1203 = pneg %p527
        %p1204 = pneg %p524
        %p1205 = pneg %p548
        %p1206 = pneg %p545
        %p1207 = pneg %p569
        %p1208 = pneg %p566
        %p1209 = pneg %p590
        %p1210 = pneg %p587
        %p1211 = pneg %p611
        %p1212 = pneg %p608
        %p1213 = pneg %p632
        %p1214 = pneg %p629
        %p1215 = pneg %p653
        %p1216 = pneg %p650
        %p1217 = pneg %p674
        %p1218 = pneg %p671
        %p1219 = pneg %p695
        %p1220 = pneg %p692
        %p1221 = pneg %p716
        %p1222 = pneg %p713
        %p1223 = pneg %p737
        %p1224 = pneg %p734
        %p1225 = pneg %p758
        %p1226 = pneg %p755
        %p1227 = pneg %p779
        %p1228 = pneg %p776
        %p1229 = pneg %p800
        %p1230 = pneg %p797
        %p1231 = pneg %p821
        %p1232 = pneg %p818
        %p1233 = pneg %p842
        %p1234 = pneg %p839
        %p1235 = pneg %p863
        %p1236 = pneg %p860
        %p1237 = pneg %p884
        %p1238 = pneg %p881
        %p1239 = pneg %p905
        %p1240 = pneg %p902
        %p1241 = pneg %p926
        %p1242 = pneg %p923
        %p1243 = pneg %p947
        %p1244 = pneg %p944
        %p1245 = pneg %p968
        %p1246 = pneg %p965
        %p1247 = pneg %p994
        %p1248 = pneg %p991
        %s1249 = sand.u32 %s981, 1
        %s1250 = scalar_lea.sflag [#allocation3], %s1249
        %s1251 = sand.u32 %s981, 1
        %s1252 = smul.addr %s1251, 8
        %s1253 = scalar_lea.vmem [#allocation2], %s1252
        %p1254 = scmp.lt.s32.totalorder %s97, 1
        %s1255 = scalar_select %p1254, %s97, 1
        %s1256 = smul.addr %s1255, 8
        %s1257 = scalar_lea.vmem %s1, %s1256
        %p1258 = scmp.lt.s32.totalorder %s97, 1
        %s1259 = scalar_select %p1258, %s97, 1
        %s1260 = smul.addr %s1259, 8
        %s1261 = scalar_lea.vmem %s3, %s1260
        %p1262 = scmp.lt.s32.totalorder %s97, 599
        %s1263 = scalar_select %p1262, %s97, 599
        %s1264 = scalar_lea.vmem %s5, %s1263
        %v1266 = vld [vmem:[%s1264] sm:$0x1]
        %v1267 = vld [vmem:[%s1257] sm:$0xff]
        %v1268 = vld [vmem:[%s7] sm:$0xf]
        %v1269 = vld [vmem:[%s7 + $0x4] sm:$0xf]
        %v1270 = vld [vmem:[%s7 + $0x8] sm:$0x3]
        %v1271 = vpack.c.bf16 %v1267, %v1267
        %v1272 = vld [vmem:[%s9] sm:$0x1]
        %v1274 = vperm.slane %v1272, 0
        %v1279 = vunpack.c.l.b16 %v1268
        %v1280 = vunpack.c.l.b16 %v1269
        %v1281 = vunpack.c.l.b16 %v1270
        %v1282 = vpack.c.b16 %v1280, %v1279
        %v1283 = vpack.c.b16 %v1281, %v1281
        %vm1285 = vcmask 162816
        %v1287 = vsel %vm1285, %v1271, 0
        %vm1289 = vcmask 1041408
        %v1291 = vsel %vm1289, %v1283, 0
        %1293 = vmatpush.bf16.msra.mxu0 0
        %1294 = vmatpush.bf16.msra.mxu0 0
        %1295 = vmatpush.bf16.msra.mxu0 0
        %1296 = vmatpush.bf16.msra.mxu0 0
        %1297 = vmatpush.bf16.msra.mxu0 0
        %1298 = vmatpush.bf16.msra.mxu0 0
        %1299 = vmatpush.bf16.msra.mxu0 %v1291
        %1300 = vmatpush.bf16.msra.mxu0 %v1282
        %1301 = vmatmul.bf16.gmra.mxu0 %v1287
        %v1302 = vpop.f32.mrf.mxu0
        %v1303 = vadd.f32 %v1274, %v1302
        %v1304 = vpop.f32.mrf.mxu0
        %1305 = vdwg.mxu0
        %v1307 = vperm.slane %v1266, 0
        %v1309 = vadd.f32 %v1303, %v1307
        %v1310 = vld [vmem:[%s1261] sm:$0xff]
        %v1311 = vld [vmem:[%s11] sm:$0xf]
        %v1312 = vld [vmem:[%s11 + $0x4] sm:$0xf]
        %v1313 = vld [vmem:[%s11 + $0x8] sm:$0x3]
        %v1314 = vpack.c.bf16 %v1310, %v1310
        %v1315 = vld [vmem:[%s13] sm:$0x1]
        %v1317 = vperm.slane %v1315, 0
        %v1322 = vunpack.c.l.b16 %v1311
        %v1323 = vunpack.c.l.b16 %v1312
        %v1324 = vunpack.c.l.b16 %v1313
        %v1325 = vpack.c.b16 %v1323, %v1322
        %v1326 = vpack.c.b16 %v1324, %v1324
        %v1329 = vsel %vm1285, %v1314, 0
        %v1332 = vsel %vm1289, %v1326, 0
        %1334 = vmatpush.bf16.msra.mxu0 0
        %1335 = vmatpush.bf16.msra.mxu0 0
        %1336 = vmatpush.bf16.msra.mxu0 0
        %1337 = vmatpush.bf16.msra.mxu0 0
        %1338 = vmatpush.bf16.msra.mxu0 0
        %1339 = vmatpush.bf16.msra.mxu0 0
        %1340 = vmatpush.bf16.msra.mxu0 %v1332
        %1341 = vmatpush.bf16.msra.mxu0 %v1325
        %1342 = vmatmul.bf16.gmra.mxu0 %v1329
        %v1343 = vpop.f32.mrf.mxu0
        %v1344 = vadd.f32 %v1317, %v1343
        %v1345 = vpop.f32.mrf.mxu0
        %1346 = vdwg.mxu0
        %v1347 = vadd.f32 %v1344, %v1307
        %v1348 = vld [vmem:[%s15] sm:$0xf]
        %v1349 = vld [vmem:[%s15 + $0x4] sm:$0xf]
        %v1350 = vld [vmem:[%s15 + $0x8] sm:$0xf]
        %v1351 = vld [vmem:[%s15 + $0xc] sm:$0xf]
        %v1352 = vld [vmem:[%s17] sm:$0x1]
        %v1353 = vld [vmem:[%s19] sm:$0xf]
        %v1354 = vld [vmem:[%s19 + $0x4] sm:$0xf]
        %v1355 = vld [vmem:[%s19 + $0x8] sm:$0xf]
        %v1356 = vld [vmem:[%s19 + $0xc] sm:$0xf]
        %v1357 = vld [vmem:[%s21] sm:$0x1]
        %v1358 = vld [vmem:[%s23] sm:$0x1]
        %v1359 = vld [vmem:[%s25] sm:$0x1]
        %v1360 = vpack.c.bf16 %v1309, %v1309
        %v1362 = vperm.slane %v1352, 0
        %v1368 = vunpack.c.l.b16 %v1348
        %v1369 = vunpack.c.l.b16 %v1349
        %v1370 = vunpack.c.l.b16 %v1350
        %v1371 = vunpack.c.l.b16 %v1351
        %v1372 = vpack.c.b16 %v1369, %v1368
        %v1373 = vpack.c.b16 %v1371, %v1370
        %vm1376 = vcmask 261120
        %v1378 = vsel %vm1376, %v1360, 0
        %1380 = vmatpush.bf16.msra.mxu0 0
        %1381 = vmatpush.bf16.msra.mxu0 0
        %1382 = vmatpush.bf16.msra.mxu0 0
        %1383 = vmatpush.bf16.msra.mxu0 0
        %1384 = vmatpush.bf16.msra.mxu0 0
        %1385 = vmatpush.bf16.msra.mxu0 0
        %1386 = vmatpush.bf16.msra.mxu0 %v1373
        %1387 = vmatpush.bf16.msra.mxu0 %v1372
        %1388 = vmatmul.bf16.gmra.mxu0 %v1378
        %v1389 = vpop.f32.mrf.mxu0
        %v1390 = vadd.f32 %v1362, %v1389
        %v1391 = vpop.f32.mrf.mxu0
        %1392 = vdwg.mxu0
        %v1393 = vpack.c.bf16 %v1390, %v1390
        %1395 = vrot.lane.b32.xlu0 %v1393, 96
        %v1396 = vpop.permute.xlu0 %1395
        %vm1397 = vcmask 64512
        %v1399 = vsel %vm1397, %v1393, 0
        %v1402 = vsel %vm1397, %v1396, 0
        %1404 = vmatpush.bf16.xpose.msra.mxu0 0
        %1405 = vmatpush.bf16.xpose.msra.mxu0 0
        %1406 = vmatpush.bf16.xpose.msra.mxu0 0
        %1407 = vmatpush.bf16.xpose.msra.mxu0 0
        %1408 = vmatpush.bf16.xpose.msra.mxu0 0
        %1409 = vmatpush.bf16.xpose.msra.mxu0 0
        %1410 = vmatpush.bf16.xpose.msra.mxu0 0
        %1411 = vmatpush.bf16.xpose.msra.mxu0 %v1402
        %1412 = vmatmul.bf16.gmra.mxu0 %v1399
        %v1413 = vpop.f32.mrf.mxu0
        %v1414 = vadd.f32 0.0, %v1413
        %v1415 = vpop.f32.mrf.mxu0
        %1416 = vdwg.mxu0
        %v1417 = vsel %vm1397, %v1414, -inf
        %1418 = vmax.xlane.f32.xlu0 %v1417
        %v1419 = vpop.xlane.xlu0 %1418
        %v1420 = vsub.f32 %v1414, %v1419
        %v1421 = vmul.f32 %v1420, 1.442695
        %v1422 = vpow.pop %v1421
        %v1423 = vsel %vm1397, %v1422, 0.0
        %1424 = vadd.xlane.f32.xlu0 %v1423
        %v1425 = vpop.xlane.xlu0 %1424
        %v1426 = vrcp.pop %v1425
        %v1427 = vmul.f32 %v1422, %v1426
        %v1428 = vpack.c.bf16 %v1427, %v1427
        %1429 = vrot.lane.b32.xlu0 %v1393, 64
        %v1430 = vpop.permute.xlu0 %1429
        %v1432 = vsel %vm1397, %v1428, 0
        %vm1434 = vcmask 1043456
        %v1436 = vsel %vm1434, %v1430, 0
        %1438 = vmatpush.bf16.msra.mxu0 0
        %1439 = vmatpush.bf16.msra.mxu0 0
        %1440 = vmatpush.bf16.msra.mxu0 0
        %1441 = vmatpush.bf16.msra.mxu0 0
        %1442 = vmatpush.bf16.msra.mxu0 0
        %1443 = vmatpush.bf16.msra.mxu0 0
        %1444 = vmatpush.bf16.msra.mxu0 0
        %1445 = vmatpush.bf16.msra.mxu0 %v1436
        %1446 = vmatmul.bf16.gmra.mxu0 %v1432
        %v1447 = vpop.f32.mrf.mxu0
        %v1448 = vadd.f32 0.0, %v1447
        %v1449 = vpop.f32.mrf.mxu0
        %1450 = vdwg.mxu0
        %1451 = vrot.lane.b32.xlu0 %v1393, 120
        %v1452 = vpop.permute.xlu0 %1451
        %1453 = vrot.lane.b32.xlu0 %v1393, 88
        %v1454 = vpop.permute.xlu0 %1453
        %v1456 = vsel %vm1397, %v1452, 0
        %v1459 = vsel %vm1397, %v1454, 0
        %1461 = vmatpush.bf16.xpose.msra.mxu0 0
        %1462 = vmatpush.bf16.xpose.msra.mxu0 0
        %1463 = vmatpush.bf16.xpose.msra.mxu0 0
        %1464 = vmatpush.bf16.xpose.msra.mxu0 0
        %1465 = vmatpush.bf16.xpose.msra.mxu0 0
        %1466 = vmatpush.bf16.xpose.msra.mxu0 0
        %1467 = vmatpush.bf16.xpose.msra.mxu0 0
        %1468 = vmatpush.bf16.xpose.msra.mxu0 %v1459
        %1469 = vmatmul.bf16.gmra.mxu0 %v1456
        %v1470 = vpop.f32.mrf.mxu0
        %v1471 = vadd.f32 0.0, %v1470
        %v1472 = vpop.f32.mrf.mxu0
        %1473 = vdwg.mxu0
        %v1474 = vsel %vm1397, %v1471, -inf
        %1475 = vmax.xlane.f32.xlu0 %v1474
        %v1476 = vpop.xlane.xlu0 %1475
        %v1477 = vsub.f32 %v1471, %v1476
        %v1478 = vmul.f32 %v1477, 1.442695
        %v1479 = vpow.pop %v1478
        %v1480 = vsel %vm1397, %v1479, 0.0
        %1481 = vadd.xlane.f32.xlu0 %v1480
        %v1482 = vpop.xlane.xlu0 %1481
        %v1483 = vrcp.pop %v1482
        %v1484 = vmul.f32 %v1479, %v1483
        %v1485 = vpack.c.bf16 %v1484, %v1484
        %1486 = vrot.lane.b32.xlu0 %v1393, 56
        %v1487 = vpop.permute.xlu0 %1486
        %v1489 = vsel %vm1397, %v1485, 0
        %v1492 = vsel %vm1434, %v1487, 0
        %1494 = vmatpush.bf16.msra.mxu0 0
        %1495 = vmatpush.bf16.msra.mxu0 0
        %1496 = vmatpush.bf16.msra.mxu0 0
        %1497 = vmatpush.bf16.msra.mxu0 0
        %1498 = vmatpush.bf16.msra.mxu0 0
        %1499 = vmatpush.bf16.msra.mxu0 0
        %1500 = vmatpush.bf16.msra.mxu0 0
        %1501 = vmatpush.bf16.msra.mxu0 %v1492
        %1502 = vmatmul.bf16.gmra.mxu0 %v1489
        %v1503 = vpop.f32.mrf.mxu0
        %v1504 = vadd.f32 0.0, %v1503
        %v1505 = vpop.f32.mrf.mxu0
        %1506 = vdwg.mxu0
        %1507 = vrot.lane.b32.xlu0 %v1393, 112
        %v1508 = vpop.permute.xlu0 %1507
        %1509 = vrot.lane.b32.xlu0 %v1393, 80
        %v1510 = vpop.permute.xlu0 %1509
        %v1512 = vsel %vm1397, %v1508, 0
        %v1515 = vsel %vm1397, %v1510, 0
        %1517 = vmatpush.bf16.xpose.msra.mxu0 0
        %1518 = vmatpush.bf16.xpose.msra.mxu0 0
        %1519 = vmatpush.bf16.xpose.msra.mxu0 0
        %1520 = vmatpush.bf16.xpose.msra.mxu0 0
        %1521 = vmatpush.bf16.xpose.msra.mxu0 0
        %1522 = vmatpush.bf16.xpose.msra.mxu0 0
        %1523 = vmatpush.bf16.xpose.msra.mxu0 0
        %1524 = vmatpush.bf16.xpose.msra.mxu0 %v1515
        %1525 = vmatmul.bf16.gmra.mxu0 %v1512
        %v1526 = vpop.f32.mrf.mxu0
        %v1527 = vadd.f32 0.0, %v1526
        %v1528 = vpop.f32.mrf.mxu0
        %1529 = vdwg.mxu0
        %v1530 = vsel %vm1397, %v1527, -inf
        %1531 = vmax.xlane.f32.xlu0 %v1530
        %v1532 = vpop.xlane.xlu0 %1531
        %v1533 = vsub.f32 %v1527, %v1532
        %v1534 = vmul.f32 %v1533, 1.442695
        %v1535 = vpow.pop %v1534
        %v1536 = vsel %vm1397, %v1535, 0.0
        %1537 = vadd.xlane.f32.xlu0 %v1536
        %v1538 = vpop.xlane.xlu0 %1537
        %v1539 = vrcp.pop %v1538
        %v1540 = vmul.f32 %v1535, %v1539
        %v1541 = vpack.c.bf16 %v1540, %v1540
        %1542 = vrot.lane.b32.xlu0 %v1393, 48
        %v1543 = vpop.permute.xlu0 %1542
        %v1545 = vsel %vm1397, %v1541, 0
        %v1548 = vsel %vm1434, %v1543, 0
        %1550 = vmatpush.bf16.msra.mxu0 0
        %1551 = vmatpush.bf16.msra.mxu0 0
        %1552 = vmatpush.bf16.msra.mxu0 0
        %1553 = vmatpush.bf16.msra.mxu0 0
        %1554 = vmatpush.bf16.msra.mxu0 0
        %1555 = vmatpush.bf16.msra.mxu0 0
        %1556 = vmatpush.bf16.msra.mxu0 0
        %1557 = vmatpush.bf16.msra.mxu0 %v1548
        %1558 = vmatmul.bf16.gmra.mxu0 %v1545
        %v1559 = vpop.f32.mrf.mxu0
        %v1560 = vadd.f32 0.0, %v1559
        %v1561 = vpop.f32.mrf.mxu0
        %1562 = vdwg.mxu0
        %1563 = vrot.lane.b32.xlu0 %v1393, 104
        %v1564 = vpop.permute.xlu0 %1563
        %1565 = vrot.lane.b32.xlu0 %v1393, 72
        %v1566 = vpop.permute.xlu0 %1565
        %v1568 = vsel %vm1397, %v1564, 0
        %v1571 = vsel %vm1397, %v1566, 0
        %1573 = vmatpush.bf16.xpose.msra.mxu0 0
        %1574 = vmatpush.bf16.xpose.msra.mxu0 0
        %1575 = vmatpush.bf16.xpose.msra.mxu0 0
        %1576 = vmatpush.bf16.xpose.msra.mxu0 0
        %1577 = vmatpush.bf16.xpose.msra.mxu0 0
        %1578 = vmatpush.bf16.xpose.msra.mxu0 0
        %1579 = vmatpush.bf16.xpose.msra.mxu0 0
        %1580 = vmatpush.bf16.xpose.msra.mxu0 %v1571
        %1581 = vmatmul.bf16.gmra.mxu0 %v1568
        %v1582 = vpop.f32.mrf.mxu0
        %v1583 = vadd.f32 0.0, %v1582
        %v1584 = vpop.f32.mrf.mxu0
        %1585 = vdwg.mxu0
        %v1586 = vsel %vm1397, %v1583, -inf
        %1587 = vmax.xlane.f32.xlu0 %v1586
        %v1588 = vpop.xlane.xlu0 %1587
        %v1589 = vsub.f32 %v1583, %v1588
        %v1590 = vmul.f32 %v1589, 1.442695
        %v1591 = vpow.pop %v1590
        %v1592 = vsel %vm1397, %v1591, 0.0
        %1593 = vadd.xlane.f32.xlu0 %v1592
        %v1594 = vpop.xlane.xlu0 %1593
        %v1595 = vrcp.pop %v1594
        %v1596 = vmul.f32 %v1591, %v1595
        %v1597 = vpack.c.bf16 %v1596, %v1596
        %1598 = vrot.lane.b32.xlu0 %v1393, 40
        %v1599 = vpop.permute.xlu0 %1598
        %v1601 = vsel %vm1397, %v1597, 0
        %v1604 = vsel %vm1434, %v1599, 0
        %1606 = vmatpush.bf16.msra.mxu0 0
        %1607 = vmatpush.bf16.msra.mxu0 0
        %1608 = vmatpush.bf16.msra.mxu0 0
        %1609 = vmatpush.bf16.msra.mxu0 0
        %1610 = vmatpush.bf16.msra.mxu0 0
        %1611 = vmatpush.bf16.msra.mxu0 0
        %1612 = vmatpush.bf16.msra.mxu0 0
        %1613 = vmatpush.bf16.msra.mxu0 %v1604
        %1614 = vmatmul.bf16.gmra.mxu0 %v1601
        %v1615 = vpop.f32.mrf.mxu0
        %v1616 = vadd.f32 0.0, %v1615
        %v1617 = vpop.f32.mrf.mxu0
        %1618 = vdwg.mxu0
        %1620 = vrot.lane.b32.xlu0 %v1504, 8
        %v1621 = vpop.permute.xlu0 %1620
        %1624 = vrot.lane.b32.xlu0 %v1560, 16
        %v1625 = vpop.permute.xlu0 %1624
        %1628 = vrot.lane.b32.xlu0 %v1616, 24
        %v1629 = vpop.permute.xlu0 %1628
        %v1631 = vsel %vm1397, %v1448, %v1621
        %vm1632 = vcmask 130048
        %v1633 = vsel %vm1632, %v1631, %v1625
        %vm1634 = vcmask 195584
        %v1635 = vsel %vm1634, %v1633, %v1629
        %v1636 = vpack.c.bf16 %v1635, %v1635
        %v1638 = vperm.slane %v1357, 0
        %v1644 = vunpack.c.l.b16 %v1353
        %v1645 = vunpack.c.l.b16 %v1354
        %v1646 = vunpack.c.l.b16 %v1355
        %v1647 = vunpack.c.l.b16 %v1356
        %v1648 = vpack.c.b16 %v1645, %v1644
        %v1649 = vpack.c.b16 %v1647, %v1646
        %v1653 = vsel %vm1376, %v1636, 0
        %1655 = vmatpush.bf16.msra.mxu0 0
        %1656 = vmatpush.bf16.msra.mxu0 0
        %1657 = vmatpush.bf16.msra.mxu0 0
        %1658 = vmatpush.bf16.msra.mxu0 0
        %1659 = vmatpush.bf16.msra.mxu0 0
        %1660 = vmatpush.bf16.msra.mxu0 0
        %1661 = vmatpush.bf16.msra.mxu0 %v1649
        %1662 = vmatpush.bf16.msra.mxu0 %v1648
        %1663 = vmatmul.bf16.gmra.mxu0 %v1653
        %v1664 = vpop.f32.mrf.mxu0
        %v1665 = vadd.f32 %v1638, %v1664
        %v1666 = vpop.f32.mrf.mxu0
        %1667 = vdwg.mxu0
        %v1668 = vadd.f32 %v1309, %v1665
        %v1669 = vsel %vm1376, %v1668, 0.0
        %1670 = vadd.xlane.f32.xlu0 %v1669
        %v1671 = vpop.xlane.xlu0 %1670
        %v1672 = vrcp.pop 32.0
        %v1673 = vmul.f32 32.0, %v1672
        %v1674 = vsub.f32 1.0, %v1673
        %v1675 = vmul.f32 %v1672, %v1674
        %v1676 = vadd.f32 %v1672, %v1675
        %vm1677 = vweird.f32 %v1672
        %v1678 = vsel %vm1677, %v1672, %v1676
        %v1679 = vmul.f32 %v1671, %v1678
        %v1680 = vsub.f32 %v1668, %v1679
        %v1681 = vmul.f32 %v1680, %v1680
        %v1682 = vsel %vm1376, %v1681, 0.0
        %1683 = vadd.xlane.f32.xlu0 %v1682
        %v1684 = vpop.xlane.xlu0 %1683
        %v1685 = vmul.f32 %v1684, %v1678
        %v1686 = vadd.f32 %v1685, 1e-05
        %v1687 = vrsqrt.pop %v1686
        %v1688 = vmul.f32 %v1687, %v1686
        %v1689 = vmul.f32 %v1688, %v1687
        %v1690 = vmul.f32 0.5, %v1689
        %v1691 = vsub.f32 1.5, %v1690
        %v1692 = vmul.f32 %v1687, %v1691
        %vm1693 = vweird.f32 %v1686
        %vm1694 = vweird.f32 %v1687
        %vm1695 = vmor %vm1693, %vm1694
        %v1696 = vsel %vm1695, %v1687, %v1692
        %v1697 = vmul.f32 %v1680, %v1696
        %v1699 = vperm.slane %v1358, 0
        %v1701 = vmul.f32 %v1697, %v1699
        %v1703 = vperm.slane %v1359, 0
        %v1705 = vadd.f32 %v1701, %v1703
        %v1706 = vld [vmem:[%s27] sm:$0xf]
        %v1707 = vld [vmem:[%s27 + $0x4] sm:$0xf]
        %v1708 = vld [vmem:[%s27 + $0x8] sm:$0xf]
        %v1709 = vld [vmem:[%s27 + $0xc] sm:$0xf]
        %v1710 = vld [vmem:[%s29] sm:$0x1]
        %v1711 = vld [vmem:[%s31] sm:$0xf]
        %v1712 = vld [vmem:[%s31 + $0x4] sm:$0xf]
        %v1713 = vld [vmem:[%s31 + $0x8] sm:$0xf]
        %v1714 = vld [vmem:[%s31 + $0xc] sm:$0xf]
        %v1715 = vld [vmem:[%s31 + $0x10] sm:$0xf]
        %v1716 = vld [vmem:[%s31 + $0x14] sm:$0xf]
        %v1717 = vld [vmem:[%s31 + $0x18] sm:$0xf]
        %v1718 = vld [vmem:[%s31 + $0x1c] sm:$0xf]
        %v1719 = vld [vmem:[%s33] sm:$0x1]
        %v1720 = vld [vmem:[%s35] sm:$0x1]
        %v1721 = vld [vmem:[%s37] sm:$0x1]
        %v1722 = vpack.c.bf16 %v1705, %v1705
        %v1724 = vperm.slane %v1710, 0
        %v1730 = vunpack.c.l.b16 %v1706
        %v1731 = vunpack.c.l.b16 %v1707
        %v1732 = vunpack.c.l.b16 %v1708
        %v1733 = vunpack.c.l.b16 %v1709
        %v1734 = vpack.c.b16 %v1731, %v1730
        %v1735 = vpack.c.b16 %v1733, %v1732
        %v1739 = vsel %vm1376, %v1722, 0
        %1741 = vmatpush.bf16.msra.mxu0 0
        %1742 = vmatpush.bf16.msra.mxu0 0
        %1743 = vmatpush.bf16.msra.mxu0 0
        %1744 = vmatpush.bf16.msra.mxu0 0
        %1745 = vmatpush.bf16.msra.mxu0 0
        %1746 = vmatpush.bf16.msra.mxu0 0
        %1747 = vmatpush.bf16.msra.mxu0 %v1735
        %1748 = vmatpush.bf16.msra.mxu0 %v1734
        %1749 = vmatmul.bf16.gmra.mxu0 %v1739
        %v1750 = vpop.f32.mrf.mxu0
        %v1751 = vadd.f32 %v1724, %v1750
        %v1752 = vpop.f32.mrf.mxu0
        %1753 = vdwg.mxu0
        %v1754 = vmax.f32 %v1751, 0.0
        %v1755 = vpack.c.bf16 %v1754, %v1754
        %v1764 = vunpack.c.l.b16 %v1711
        %v1765 = vunpack.c.l.b16 %v1712
        %v1766 = vunpack.c.l.b16 %v1713
        %v1767 = vunpack.c.l.b16 %v1714
        %v1768 = vunpack.c.l.b16 %v1715
        %v1769 = vunpack.c.l.b16 %v1716
        %v1770 = vunpack.c.l.b16 %v1717
        %v1771 = vunpack.c.l.b16 %v1718
        %v1772 = vpack.c.b16 %v1765, %v1764
        %v1773 = vpack.c.b16 %v1767, %v1766
        %v1774 = vpack.c.b16 %v1769, %v1768
        %v1775 = vpack.c.b16 %v1771, %v1770
        %vm1780 = vcmask 523264
        %v1782 = vsel %vm1780, %v1755, 0
        %1784 = vmatpush.bf16.msra.mxu0 0
        %1785 = vmatpush.bf16.msra.mxu0 0
        %1786 = vmatpush.bf16.msra.mxu0 0
        %1787 = vmatpush.bf16.msra.mxu0 0
        %1788 = vmatpush.bf16.msra.mxu0 %v1775
        %1789 = vmatpush.bf16.msra.mxu0 %v1774
        %1790 = vmatpush.bf16.msra.mxu0 %v1773
        %1791 = vmatpush.bf16.msra.mxu0 %v1772
        %1792 = vmatmul.bf16.gmra.mxu0 %v1782
        %v1793 = vpop.f32.mrf.mxu0
        %v1794 = vadd.f32 0.0, %v1793
        %v1795 = vpop.f32.mrf.mxu0
        %1796 = vdwg.mxu0
        %v1797 = vadd.f32 %v1705, %v1794
        %v1799 = vperm.slane %v1719, 0
        %v1801 = vadd.f32 %v1797, %v1799
        %v1802 = vsel %vm1376, %v1801, 0.0
        %1803 = vadd.xlane.f32.xlu0 %v1802
        %v1804 = vpop.xlane.xlu0 %1803
        %v1805 = vmul.f32 %v1804, %v1678
        %v1806 = vsub.f32 %v1801, %v1805
        %v1807 = vmul.f32 %v1806, %v1806
        %v1808 = vsel %vm1376, %v1807, 0.0
        %1809 = vadd.xlane.f32.xlu0 %v1808
        %v1810 = vpop.xlane.xlu0 %1809
        %v1811 = vmul.f32 %v1810, %v1678
        %v1812 = vadd.f32 %v1811, 1e-05
        %v1813 = vrsqrt.pop %v1812
        %v1814 = vmul.f32 %v1813, %v1812
        %v1815 = vmul.f32 %v1814, %v1813
        %v1816 = vmul.f32 0.5, %v1815
        %v1817 = vsub.f32 1.5, %v1816
        %v1818 = vmul.f32 %v1813, %v1817
        %vm1819 = vweird.f32 %v1812
        %vm1820 = vweird.f32 %v1813
        %vm1821 = vmor %vm1819, %vm1820
        %v1822 = vsel %vm1821, %v1813, %v1818
        %v1823 = vmul.f32 %v1806, %v1822
        %v1825 = vperm.slane %v1720, 0
        %v1827 = vmul.f32 %v1823, %v1825
        %v1829 = vperm.slane %v1721, 0
        %v1831 = vadd.f32 %v1827, %v1829
        %s1832 = scalar_lea.vmem %s15, 16
        %v1833 = vld [vmem:[%s1832] sm:$0xf]
        %v1834 = vld [vmem:[%s1832 + $0x4] sm:$0xf]
        %v1835 = vld [vmem:[%s1832 + $0x8] sm:$0xf]
        %v1836 = vld [vmem:[%s1832 + $0xc] sm:$0xf]
        %s1837 = scalar_lea.vmem %s17, 1
        %v1838 = vld [vmem:[%s1837] sm:$0x1]
        %s1839 = scalar_lea.vmem %s19, 16
        %v1840 = vld [vmem:[%s1839] sm:$0xf]
        %v1841 = vld [vmem:[%s1839 + $0x4] sm:$0xf]
        %v1842 = vld [vmem:[%s1839 + $0x8] sm:$0xf]
        %v1843 = vld [vmem:[%s1839 + $0xc] sm:$0xf]
        %s1844 = scalar_lea.vmem %s21, 1
        %v1845 = vld [vmem:[%s1844] sm:$0x1]
        %s1846 = scalar_lea.vmem %s23, 1
        %v1847 = vld [vmem:[%s1846] sm:$0x1]
        %s1848 = scalar_lea.vmem %s25, 1
        %v1849 = vld [vmem:[%s1848] sm:$0x1]
        %v1850 = vpack.c.bf16 %v1831, %v1831
        %v1852 = vperm.slane %v1838, 0
        %v1858 = vunpack.c.l.b16 %v1833
        %v1859 = vunpack.c.l.b16 %v1834
        %v1860 = vunpack.c.l.b16 %v1835
        %v1861 = vunpack.c.l.b16 %v1836
        %v1862 = vpack.c.b16 %v1859, %v1858
        %v1863 = vpack.c.b16 %v1861, %v1860
        %v1867 = vsel %vm1376, %v1850, 0
        %1869 = vmatpush.bf16.msra.mxu0 0
        %1870 = vmatpush.bf16.msra.mxu0 0
        %1871 = vmatpush.bf16.msra.mxu0 0
        %1872 = vmatpush.bf16.msra.mxu0 0
        %1873 = vmatpush.bf16.msra.mxu0 0
        %1874 = vmatpush.bf16.msra.mxu0 0
        %1875 = vmatpush.bf16.msra.mxu0 %v1863
        %1876 = vmatpush.bf16.msra.mxu0 %v1862
        %1877 = vmatmul.bf16.gmra.mxu0 %v1867
        %v1878 = vpop.f32.mrf.mxu0
        %v1879 = vadd.f32 %v1852, %v1878
        %v1880 = vpop.f32.mrf.mxu0
        %1881 = vdwg.mxu0
        %v1882 = vpack.c.bf16 %v1879, %v1879
        %1884 = vrot.lane.b32.xlu0 %v1882, 96
        %v1885 = vpop.permute.xlu0 %1884
        %v1887 = vsel %vm1397, %v1882, 0
        %v1890 = vsel %vm1397, %v1885, 0
        %1892 = vmatpush.bf16.xpose.msra.mxu0 0
        %1893 = vmatpush.bf16.xpose.msra.mxu0 0
        %1894 = vmatpush.bf16.xpose.msra.mxu0 0
        %1895 = vmatpush.bf16.xpose.msra.mxu0 0
        %1896 = vmatpush.bf16.xpose.msra.mxu0 0
        %1897 = vmatpush.bf16.xpose.msra.mxu0 0
        %1898 = vmatpush.bf16.xpose.msra.mxu0 0
        %1899 = vmatpush.bf16.xpose.msra.mxu0 %v1890
        %1900 = vmatmul.bf16.gmra.mxu0 %v1887
        %v1901 = vpop.f32.mrf.mxu0
        %v1902 = vadd.f32 0.0, %v1901
        %v1903 = vpop.f32.mrf.mxu0
        %1904 = vdwg.mxu0
        %v1905 = vsel %vm1397, %v1902, -inf
        %1906 = vmax.xlane.f32.xlu0 %v1905
        %v1907 = vpop.xlane.xlu0 %1906
        %v1908 = vsub.f32 %v1902, %v1907
        %v1909 = vmul.f32 %v1908, 1.442695
        %v1910 = vpow.pop %v1909
        %v1911 = vsel %vm1397, %v1910, 0.0
        %1912 = vadd.xlane.f32.xlu0 %v1911
        %v1913 = vpop.xlane.xlu0 %1912
        %v1914 = vrcp.pop %v1913
        %v1915 = vmul.f32 %v1910, %v1914
        %v1916 = vpack.c.bf16 %v1915, %v1915
        %1917 = vrot.lane.b32.xlu0 %v1882, 64
        %v1918 = vpop.permute.xlu0 %1917
        %v1920 = vsel %vm1397, %v1916, 0
        %v1923 = vsel %vm1434, %v1918, 0
        %1925 = vmatpush.bf16.msra.mxu0 0
        %1926 = vmatpush.bf16.msra.mxu0 0
        %1927 = vmatpush.bf16.msra.mxu0 0
        %1928 = vmatpush.bf16.msra.mxu0 0
        %1929 = vmatpush.bf16.msra.mxu0 0
        %1930 = vmatpush.bf16.msra.mxu0 0
        %1931 = vmatpush.bf16.msra.mxu0 0
        %1932 = vmatpush.bf16.msra.mxu0 %v1923
        %1933 = vmatmul.bf16.gmra.mxu0 %v1920
        %v1934 = vpop.f32.mrf.mxu0
        %v1935 = vadd.f32 0.0, %v1934
        %v1936 = vpop.f32.mrf.mxu0
        %1937 = vdwg.mxu0
        %1938 = vrot.lane.b32.xlu0 %v1882, 120
        %v1939 = vpop.permute.xlu0 %1938
        %1940 = vrot.lane.b32.xlu0 %v1882, 88
        %v1941 = vpop.permute.xlu0 %1940
        %v1943 = vsel %vm1397, %v1939, 0
        %v1946 = vsel %vm1397, %v1941, 0
        %1948 = vmatpush.bf16.xpose.msra.mxu0 0
        %1949 = vmatpush.bf16.xpose.msra.mxu0 0
        %1950 = vmatpush.bf16.xpose.msra.mxu0 0
        %1951 = vmatpush.bf16.xpose.msra.mxu0 0
        %1952 = vmatpush.bf16.xpose.msra.mxu0 0
        %1953 = vmatpush.bf16.xpose.msra.mxu0 0
        %1954 = vmatpush.bf16.xpose.msra.mxu0 0
        %1955 = vmatpush.bf16.xpose.msra.mxu0 %v1946
        %1956 = vmatmul.bf16.gmra.mxu0 %v1943
        %v1957 = vpop.f32.mrf.mxu0
        %v1958 = vadd.f32 0.0, %v1957
        %v1959 = vpop.f32.mrf.mxu0
        %1960 = vdwg.mxu0
        %v1961 = vsel %vm1397, %v1958, -inf
        %1962 = vmax.xlane.f32.xlu0 %v1961
        %v1963 = vpop.xlane.xlu0 %1962
        %v1964 = vsub.f32 %v1958, %v1963
        %v1965 = vmul.f32 %v1964, 1.442695
        %v1966 = vpow.pop %v1965
        %v1967 = vsel %vm1397, %v1966, 0.0
        %1968 = vadd.xlane.f32.xlu0 %v1967
        %v1969 = vpop.xlane.xlu0 %1968
        %v1970 = vrcp.pop %v1969
        %v1971 = vmul.f32 %v1966, %v1970
        %v1972 = vpack.c.bf16 %v1971, %v1971
        %1973 = vrot.lane.b32.xlu0 %v1882, 56
        %v1974 = vpop.permute.xlu0 %1973
        %v1976 = vsel %vm1397, %v1972, 0
        %v1979 = vsel %vm1434, %v1974, 0
        %1981 = vmatpush.bf16.msra.mxu0 0
        %1982 = vmatpush.bf16.msra.mxu0 0
        %1983 = vmatpush.bf16.msra.mxu0 0
        %1984 = vmatpush.bf16.msra.mxu0 0
        %1985 = vmatpush.bf16.msra.mxu0 0
        %1986 = vmatpush.bf16.msra.mxu0 0
        %1987 = vmatpush.bf16.msra.mxu0 0
        %1988 = vmatpush.bf16.msra.mxu0 %v1979
        %1989 = vmatmul.bf16.gmra.mxu0 %v1976
        %v1990 = vpop.f32.mrf.mxu0
        %v1991 = vadd.f32 0.0, %v1990
        %v1992 = vpop.f32.mrf.mxu0
        %1993 = vdwg.mxu0
        %1994 = vrot.lane.b32.xlu0 %v1882, 112
        %v1995 = vpop.permute.xlu0 %1994
        %1996 = vrot.lane.b32.xlu0 %v1882, 80
        %v1997 = vpop.permute.xlu0 %1996
        %v1999 = vsel %vm1397, %v1995, 0
        %v2002 = vsel %vm1397, %v1997, 0
        %2004 = vmatpush.bf16.xpose.msra.mxu0 0
        %2005 = vmatpush.bf16.xpose.msra.mxu0 0
        %2006 = vmatpush.bf16.xpose.msra.mxu0 0
        %2007 = vmatpush.bf16.xpose.msra.mxu0 0
        %2008 = vmatpush.bf16.xpose.msra.mxu0 0
        %2009 = vmatpush.bf16.xpose.msra.mxu0 0
        %2010 = vmatpush.bf16.xpose.msra.mxu0 0
        %2011 = vmatpush.bf16.xpose.msra.mxu0 %v2002
        %2012 = vmatmul.bf16.gmra.mxu0 %v1999
        %v2013 = vpop.f32.mrf.mxu0
        %v2014 = vadd.f32 0.0, %v2013
        %v2015 = vpop.f32.mrf.mxu0
        %2016 = vdwg.mxu0
        %v2017 = vsel %vm1397, %v2014, -inf
        %2018 = vmax.xlane.f32.xlu0 %v2017
        %v2019 = vpop.xlane.xlu0 %2018
        %v2020 = vsub.f32 %v2014, %v2019
        %v2021 = vmul.f32 %v2020, 1.442695
        %v2022 = vpow.pop %v2021
        %v2023 = vsel %vm1397, %v2022, 0.0
        %2024 = vadd.xlane.f32.xlu0 %v2023
        %v2025 = vpop.xlane.xlu0 %2024
        %v2026 = vrcp.pop %v2025
        %v2027 = vmul.f32 %v2022, %v2026
        %v2028 = vpack.c.bf16 %v2027, %v2027
        %2029 = vrot.lane.b32.xlu0 %v1882, 48
        %v2030 = vpop.permute.xlu0 %2029
        %v2032 = vsel %vm1397, %v2028, 0
        %v2035 = vsel %vm1434, %v2030, 0
        %2037 = vmatpush.bf16.msra.mxu0 0
        %2038 = vmatpush.bf16.msra.mxu0 0
        %2039 = vmatpush.bf16.msra.mxu0 0
        %2040 = vmatpush.bf16.msra.mxu0 0
        %2041 = vmatpush.bf16.msra.mxu0 0
        %2042 = vmatpush.bf16.msra.mxu0 0
        %2043 = vmatpush.bf16.msra.mxu0 0
        %2044 = vmatpush.bf16.msra.mxu0 %v2035
        %2045 = vmatmul.bf16.gmra.mxu0 %v2032
        %v2046 = vpop.f32.mrf.mxu0
        %v2047 = vadd.f32 0.0, %v2046
        %v2048 = vpop.f32.mrf.mxu0
        %2049 = vdwg.mxu0
        %2050 = vrot.lane.b32.xlu0 %v1882, 104
        %v2051 = vpop.permute.xlu0 %2050
        %2052 = vrot.lane.b32.xlu0 %v1882, 72
        %v2053 = vpop.permute.xlu0 %2052
        %v2055 = vsel %vm1397, %v2051, 0
        %v2058 = vsel %vm1397, %v2053, 0
        %2060 = vmatpush.bf16.xpose.msra.mxu0 0
        %2061 = vmatpush.bf16.xpose.msra.mxu0 0
        %2062 = vmatpush.bf16.xpose.msra.mxu0 0
        %2063 = vmatpush.bf16.xpose.msra.mxu0 0
        %2064 = vmatpush.bf16.xpose.msra.mxu0 0
        %2065 = vmatpush.bf16.xpose.msra.mxu0 0
        %2066 = vmatpush.bf16.xpose.msra.mxu0 0
        %2067 = vmatpush.bf16.xpose.msra.mxu0 %v2058
        %2068 = vmatmul.bf16.gmra.mxu0 %v2055
        %v2069 = vpop.f32.mrf.mxu0
        %v2070 = vadd.f32 0.0, %v2069
        %v2071 = vpop.f32.mrf.mxu0
        %2072 = vdwg.mxu0
        %v2073 = vsel %vm1397, %v2070, -inf
        %2074 = vmax.xlane.f32.xlu0 %v2073
        %v2075 = vpop.xlane.xlu0 %2074
        %v2076 = vsub.f32 %v2070, %v2075
        %v2077 = vmul.f32 %v2076, 1.442695
        %v2078 = vpow.pop %v2077
        %v2079 = vsel %vm1397, %v2078, 0.0
        %2080 = vadd.xlane.f32.xlu0 %v2079
        %v2081 = vpop.xlane.xlu0 %2080
        %v2082 = vrcp.pop %v2081
        %v2083 = vmul.f32 %v2078, %v2082
        %v2084 = vpack.c.bf16 %v2083, %v2083
        %2085 = vrot.lane.b32.xlu0 %v1882, 40
        %v2086 = vpop.permute.xlu0 %2085
        %v2088 = vsel %vm1397, %v2084, 0
        %v2091 = vsel %vm1434, %v2086, 0
        %2093 = vmatpush.bf16.msra.mxu0 0
        %2094 = vmatpush.bf16.msra.mxu0 0
        %2095 = vmatpush.bf16.msra.mxu0 0
        %2096 = vmatpush.bf16.msra.mxu0 0
        %2097 = vmatpush.bf16.msra.mxu0 0
        %2098 = vmatpush.bf16.msra.mxu0 0
        %2099 = vmatpush.bf16.msra.mxu0 0
        %2100 = vmatpush.bf16.msra.mxu0 %v2091
        %2101 = vmatmul.bf16.gmra.mxu0 %v2088
        %v2102 = vpop.f32.mrf.mxu0
        %v2103 = vadd.f32 0.0, %v2102
        %v2104 = vpop.f32.mrf.mxu0
        %2105 = vdwg.mxu0
        %2107 = vrot.lane.b32.xlu0 %v1991, 8
        %v2108 = vpop.permute.xlu0 %2107
        %2111 = vrot.lane.b32.xlu0 %v2047, 16
        %v2112 = vpop.permute.xlu0 %2111
        %2115 = vrot.lane.b32.xlu0 %v2103, 24
        %v2116 = vpop.permute.xlu0 %2115
        %v2118 = vsel %vm1397, %v1935, %v2108
        %v2119 = vsel %vm1632, %v2118, %v2112
        %v2120 = vsel %vm1634, %v2119, %v2116
        %v2121 = vpack.c.bf16 %v2120, %v2120
        %v2123 = vperm.slane %v1845, 0
        %v2129 = vunpack.c.l.b16 %v1840
        %v2130 = vunpack.c.l.b16 %v1841
        %v2131 = vunpack.c.l.b16 %v1842
        %v2132 = vunpack.c.l.b16 %v1843
        %v2133 = vpack.c.b16 %v2130, %v2129
        %v2134 = vpack.c.b16 %v2132, %v2131
        %v2138 = vsel %vm1376, %v2121, 0
        %2140 = vmatpush.bf16.msra.mxu0 0
        %2141 = vmatpush.bf16.msra.mxu0 0
        %2142 = vmatpush.bf16.msra.mxu0 0
        %2143 = vmatpush.bf16.msra.mxu0 0
        %2144 = vmatpush.bf16.msra.mxu0 0
        %2145 = vmatpush.bf16.msra.mxu0 0
        %2146 = vmatpush.bf16.msra.mxu0 %v2134
        %2147 = vmatpush.bf16.msra.mxu0 %v2133
        %2148 = vmatmul.bf16.gmra.mxu0 %v2138
        %v2149 = vpop.f32.mrf.mxu0
        %v2150 = vadd.f32 %v2123, %v2149
        %v2151 = vpop.f32.mrf.mxu0
        %2152 = vdwg.mxu0
        %v2153 = vadd.f32 %v1831, %v2150
        %v2154 = vsel %vm1376, %v2153, 0.0
        %2155 = vadd.xlane.f32.xlu0 %v2154
        %v2156 = vpop.xlane.xlu0 %2155
        %v2157 = vmul.f32 %v2156, %v1678
        %v2158 = vsub.f32 %v2153, %v2157
        %v2159 = vmul.f32 %v2158, %v2158
        %v2160 = vsel %vm1376, %v2159, 0.0
        %2161 = vadd.xlane.f32.xlu0 %v2160
        %v2162 = vpop.xlane.xlu0 %2161
        %v2163 = vmul.f32 %v2162, %v1678
        %v2164 = vadd.f32 %v2163, 1e-05
        %v2165 = vrsqrt.pop %v2164
        %v2166 = vmul.f32 %v2165, %v2164
        %v2167 = vmul.f32 %v2166, %v2165
        %v2168 = vmul.f32 0.5, %v2167
        %v2169 = vsub.f32 1.5, %v2168
        %v2170 = vmul.f32 %v2165, %v2169
        %vm2171 = vweird.f32 %v2164
        %vm2172 = vweird.f32 %v2165
        %vm2173 = vmor %vm2171, %vm2172
        %v2174 = vsel %vm2173, %v2165, %v2170
        %v2175 = vmul.f32 %v2158, %v2174
        %v2177 = vperm.slane %v1847, 0
        %v2179 = vmul.f32 %v2175, %v2177
        %v2181 = vperm.slane %v1849, 0
        %v2183 = vadd.f32 %v2179, %v2181
        %s2184 = scalar_lea.vmem %s27, 16
        %v2185 = vld [vmem:[%s2184] sm:$0xf]
        %v2186 = vld [vmem:[%s2184 + $0x4] sm:$0xf]
        %v2187 = vld [vmem:[%s2184 + $0x8] sm:$0xf]
        %v2188 = vld [vmem:[%s2184 + $0xc] sm:$0xf]
        %s2189 = scalar_lea.vmem %s29, 1
        %v2190 = vld [vmem:[%s2189] sm:$0x1]
        %s2191 = scalar_lea.vmem %s31, 32
        %v2192 = vld [vmem:[%s2191] sm:$0xf]
        %v2193 = vld [vmem:[%s2191 + $0x4] sm:$0xf]
        %v2194 = vld [vmem:[%s2191 + $0x8] sm:$0xf]
        %v2195 = vld [vmem:[%s2191 + $0xc] sm:$0xf]
        %v2196 = vld [vmem:[%s2191 + $0x10] sm:$0xf]
        %v2197 = vld [vmem:[%s2191 + $0x14] sm:$0xf]
        %v2198 = vld [vmem:[%s2191 + $0x18] sm:$0xf]
        %v2199 = vld [vmem:[%s2191 + $0x1c] sm:$0xf]
        %s2200 = scalar_lea.vmem %s33, 1
        %v2201 = vld [vmem:[%s2200] sm:$0x1]
        %s2202 = scalar_lea.vmem %s35, 1
        %v2203 = vld [vmem:[%s2202] sm:$0x1]
        %s2204 = scalar_lea.vmem %s37, 1
        %v2205 = vld [vmem:[%s2204] sm:$0x1]
        %v2206 = vpack.c.bf16 %v2183, %v2183
        %v2208 = vperm.slane %v2190, 0
        %v2214 = vunpack.c.l.b16 %v2185
        %v2215 = vunpack.c.l.b16 %v2186
        %v2216 = vunpack.c.l.b16 %v2187
        %v2217 = vunpack.c.l.b16 %v2188
        %v2218 = vpack.c.b16 %v2215, %v2214
        %v2219 = vpack.c.b16 %v2217, %v2216
        %v2223 = vsel %vm1376, %v2206, 0
        %2225 = vmatpush.bf16.msra.mxu0 0
        %2226 = vmatpush.bf16.msra.mxu0 0
        %2227 = vmatpush.bf16.msra.mxu0 0
        %2228 = vmatpush.bf16.msra.mxu0 0
        %2229 = vmatpush.bf16.msra.mxu0 0
        %2230 = vmatpush.bf16.msra.mxu0 0
        %2231 = vmatpush.bf16.msra.mxu0 %v2219
        %2232 = vmatpush.bf16.msra.mxu0 %v2218
        %2233 = vmatmul.bf16.gmra.mxu0 %v2223
        %v2234 = vpop.f32.mrf.mxu0
        %v2235 = vadd.f32 %v2208, %v2234
        %v2236 = vpop.f32.mrf.mxu0
        %2237 = vdwg.mxu0
        %v2238 = vmax.f32 %v2235, 0.0
        %v2239 = vpack.c.bf16 %v2238, %v2238
        %v2248 = vunpack.c.l.b16 %v2192
        %v2249 = vunpack.c.l.b16 %v2193
        %v2250 = vunpack.c.l.b16 %v2194
        %v2251 = vunpack.c.l.b16 %v2195
        %v2252 = vunpack.c.l.b16 %v2196
        %v2253 = vunpack.c.l.b16 %v2197
        %v2254 = vunpack.c.l.b16 %v2198
        %v2255 = vunpack.c.l.b16 %v2199
        %v2256 = vpack.c.b16 %v2249, %v2248
        %v2257 = vpack.c.b16 %v2251, %v2250
        %v2258 = vpack.c.b16 %v2253, %v2252
        %v2259 = vpack.c.b16 %v2255, %v2254
        %v2265 = vsel %vm1780, %v2239, 0
        %2267 = vmatpush.bf16.msra.mxu0 0
        %2268 = vmatpush.bf16.msra.mxu0 0
        %2269 = vmatpush.bf16.msra.mxu0 0
        %2270 = vmatpush.bf16.msra.mxu0 0
        %2271 = vmatpush.bf16.msra.mxu0 %v2259
        %2272 = vmatpush.bf16.msra.mxu0 %v2258
        %2273 = vmatpush.bf16.msra.mxu0 %v2257
        %2274 = vmatpush.bf16.msra.mxu0 %v2256
        %2275 = vmatmul.bf16.gmra.mxu0 %v2265
        %v2276 = vpop.f32.mrf.mxu0
        %v2277 = vadd.f32 0.0, %v2276
        %v2278 = vpop.f32.mrf.mxu0
        %2279 = vdwg.mxu0
        %v2280 = vadd.f32 %v2183, %v2277
        %v2282 = vperm.slane %v2201, 0
        %v2284 = vadd.f32 %v2280, %v2282
        %v2285 = vsel %vm1376, %v2284, 0.0
        %2286 = vadd.xlane.f32.xlu0 %v2285
        %v2287 = vpop.xlane.xlu0 %2286
        %v2288 = vmul.f32 %v2287, %v1678
        %v2289 = vsub.f32 %v2284, %v2288
        %v2290 = vmul.f32 %v2289, %v2289
        %v2291 = vsel %vm1376, %v2290, 0.0
        %2292 = vadd.xlane.f32.xlu0 %v2291
        %v2293 = vpop.xlane.xlu0 %2292
        %v2294 = vmul.f32 %v2293, %v1678
        %v2295 = vadd.f32 %v2294, 1e-05
        %v2296 = vrsqrt.pop %v2295
        %v2297 = vmul.f32 %v2296, %v2295
        %v2298 = vmul.f32 %v2297, %v2296
        %v2299 = vmul.f32 0.5, %v2298
        %v2300 = vsub.f32 1.5, %v2299
        %v2301 = vmul.f32 %v2296, %v2300
        %vm2302 = vweird.f32 %v2295
        %vm2303 = vweird.f32 %v2296
        %vm2304 = vmor %vm2302, %vm2303
        %v2305 = vsel %vm2304, %v2296, %v2301
        %v2306 = vmul.f32 %v2289, %v2305
        %v2308 = vperm.slane %v2203, 0
        %v2310 = vmul.f32 %v2306, %v2308
        %v2312 = vperm.slane %v2205, 0
        %v2314 = vadd.f32 %v2310, %v2312
        %v2315 = vld [vmem:[%s39] sm:$0xf]
        %v2316 = vld [vmem:[%s39 + $0x4] sm:$0xf]
        %v2317 = vld [vmem:[%s39 + $0x8] sm:$0xf]
        %v2318 = vld [vmem:[%s39 + $0xc] sm:$0xf]
        %v2319 = vld [vmem:[%s41] sm:$0x1]
        %v2320 = vld [vmem:[%s43] sm:$0xf]
        %v2321 = vld [vmem:[%s43 + $0x4] sm:$0xf]
        %v2322 = vld [vmem:[%s43 + $0x8] sm:$0xf]
        %v2323 = vld [vmem:[%s43 + $0xc] sm:$0xf]
        %v2324 = vld [vmem:[%s45] sm:$0x1]
        %v2325 = vld [vmem:[%s47] sm:$0x1]
        %v2326 = vld [vmem:[%s49] sm:$0x1]
        %v2327 = vpack.c.bf16 %v1347, %v1347
        %v2329 = vperm.slane %v2319, 0
        %v2335 = vunpack.c.l.b16 %v2315
        %v2336 = vunpack.c.l.b16 %v2316
        %v2337 = vunpack.c.l.b16 %v2317
        %v2338 = vunpack.c.l.b16 %v2318
        %v2339 = vpack.c.b16 %v2336, %v2335
        %v2340 = vpack.c.b16 %v2338, %v2337
        %v2344 = vsel %vm1376, %v2327, 0
        %2346 = vmatpush.bf16.msra.mxu0 0
        %2347 = vmatpush.bf16.msra.mxu0 0
        %2348 = vmatpush.bf16.msra.mxu0 0
        %2349 = vmatpush.bf16.msra.mxu0 0
        %2350 = vmatpush.bf16.msra.mxu0 0
        %2351 = vmatpush.bf16.msra.mxu0 0
        %2352 = vmatpush.bf16.msra.mxu0 %v2340
        %2353 = vmatpush.bf16.msra.mxu0 %v2339
        %2354 = vmatmul.bf16.gmra.mxu0 %v2344
        %v2355 = vpop.f32.mrf.mxu0
        %v2356 = vadd.f32 %v2329, %v2355
        %v2357 = vpop.f32.mrf.mxu0
        %2358 = vdwg.mxu0
        %v2359 = vpack.c.bf16 %v2356, %v2356
        %2361 = vrot.lane.b32.xlu0 %v2359, 96
        %v2362 = vpop.permute.xlu0 %2361
        %v2364 = vsel %vm1397, %v2359, 0
        %v2367 = vsel %vm1397, %v2362, 0
        %2369 = vmatpush.bf16.xpose.msra.mxu0 0
        %2370 = vmatpush.bf16.xpose.msra.mxu0 0
        %2371 = vmatpush.bf16.xpose.msra.mxu0 0
        %2372 = vmatpush.bf16.xpose.msra.mxu0 0
        %2373 = vmatpush.bf16.xpose.msra.mxu0 0
        %2374 = vmatpush.bf16.xpose.msra.mxu0 0
        %2375 = vmatpush.bf16.xpose.msra.mxu0 0
        %2376 = vmatpush.bf16.xpose.msra.mxu0 %v2367
        %2377 = vmatmul.bf16.gmra.mxu0 %v2364
        %v2378 = vpop.f32.mrf.mxu0
        %v2379 = vadd.f32 0.0, %v2378
        %v2380 = vpop.f32.mrf.mxu0
        %2381 = vdwg.mxu0
        %v2382 = vsel %vm1397, %v2379, -inf
        %2383 = vmax.xlane.f32.xlu0 %v2382
        %v2384 = vpop.xlane.xlu0 %2383
        %v2385 = vsub.f32 %v2379, %v2384
        %v2386 = vmul.f32 %v2385, 1.442695
        %v2387 = vpow.pop %v2386
        %v2388 = vsel %vm1397, %v2387, 0.0
        %2389 = vadd.xlane.f32.xlu0 %v2388
        %v2390 = vpop.xlane.xlu0 %2389
        %v2391 = vrcp.pop %v2390
        %v2392 = vmul.f32 %v2387, %v2391
        %v2393 = vpack.c.bf16 %v2392, %v2392
        %2394 = vrot.lane.b32.xlu0 %v2359, 64
        %v2395 = vpop.permute.xlu0 %2394
        %v2397 = vsel %vm1397, %v2393, 0
        %v2400 = vsel %vm1434, %v2395, 0
        %2402 = vmatpush.bf16.msra.mxu0 0
        %2403 = vmatpush.bf16.msra.mxu0 0
        %2404 = vmatpush.bf16.msra.mxu0 0
        %2405 = vmatpush.bf16.msra.mxu0 0
        %2406 = vmatpush.bf16.msra.mxu0 0
        %2407 = vmatpush.bf16.msra.mxu0 0
        %2408 = vmatpush.bf16.msra.mxu0 0
        %2409 = vmatpush.bf16.msra.mxu0 %v2400
        %2410 = vmatmul.bf16.gmra.mxu0 %v2397
        %v2411 = vpop.f32.mrf.mxu0
        %v2412 = vadd.f32 0.0, %v2411
        %v2413 = vpop.f32.mrf.mxu0
        %2414 = vdwg.mxu0
        %2415 = vrot.lane.b32.xlu0 %v2359, 120
        %v2416 = vpop.permute.xlu0 %2415
        %2417 = vrot.lane.b32.xlu0 %v2359, 88
        %v2418 = vpop.permute.xlu0 %2417
        %v2420 = vsel %vm1397, %v2416, 0
        %v2423 = vsel %vm1397, %v2418, 0
        %2425 = vmatpush.bf16.xpose.msra.mxu0 0
        %2426 = vmatpush.bf16.xpose.msra.mxu0 0
        %2427 = vmatpush.bf16.xpose.msra.mxu0 0
        %2428 = vmatpush.bf16.xpose.msra.mxu0 0
        %2429 = vmatpush.bf16.xpose.msra.mxu0 0
        %2430 = vmatpush.bf16.xpose.msra.mxu0 0
        %2431 = vmatpush.bf16.xpose.msra.mxu0 0
        %2432 = vmatpush.bf16.xpose.msra.mxu0 %v2423
        %2433 = vmatmul.bf16.gmra.mxu0 %v2420
        %v2434 = vpop.f32.mrf.mxu0
        %v2435 = vadd.f32 0.0, %v2434
        %v2436 = vpop.f32.mrf.mxu0
        %2437 = vdwg.mxu0
        %v2438 = vsel %vm1397, %v2435, -inf
        %2439 = vmax.xlane.f32.xlu0 %v2438
        %v2440 = vpop.xlane.xlu0 %2439
        %v2441 = vsub.f32 %v2435, %v2440
        %v2442 = vmul.f32 %v2441, 1.442695
        %v2443 = vpow.pop %v2442
        %v2444 = vsel %vm1397, %v2443, 0.0
        %2445 = vadd.xlane.f32.xlu0 %v2444
        %v2446 = vpop.xlane.xlu0 %2445
        %v2447 = vrcp.pop %v2446
        %v2448 = vmul.f32 %v2443, %v2447
        %v2449 = vpack.c.bf16 %v2448, %v2448
        %2450 = vrot.lane.b32.xlu0 %v2359, 56
        %v2451 = vpop.permute.xlu0 %2450
        %v2453 = vsel %vm1397, %v2449, 0
        %v2456 = vsel %vm1434, %v2451, 0
        %2458 = vmatpush.bf16.msra.mxu0 0
        %2459 = vmatpush.bf16.msra.mxu0 0
        %2460 = vmatpush.bf16.msra.mxu0 0
        %2461 = vmatpush.bf16.msra.mxu0 0
        %2462 = vmatpush.bf16.msra.mxu0 0
        %2463 = vmatpush.bf16.msra.mxu0 0
        %2464 = vmatpush.bf16.msra.mxu0 0
        %2465 = vmatpush.bf16.msra.mxu0 %v2456
        %2466 = vmatmul.bf16.gmra.mxu0 %v2453
        %v2467 = vpop.f32.mrf.mxu0
        %v2468 = vadd.f32 0.0, %v2467
        %v2469 = vpop.f32.mrf.mxu0
        %2470 = vdwg.mxu0
        %2471 = vrot.lane.b32.xlu0 %v2359, 112
        %v2472 = vpop.permute.xlu0 %2471
        %2473 = vrot.lane.b32.xlu0 %v2359, 80
        %v2474 = vpop.permute.xlu0 %2473
        %v2476 = vsel %vm1397, %v2472, 0
        %v2479 = vsel %vm1397, %v2474, 0
        %2481 = vmatpush.bf16.xpose.msra.mxu0 0
        %2482 = vmatpush.bf16.xpose.msra.mxu0 0
        %2483 = vmatpush.bf16.xpose.msra.mxu0 0
        %2484 = vmatpush.bf16.xpose.msra.mxu0 0
        %2485 = vmatpush.bf16.xpose.msra.mxu0 0
        %2486 = vmatpush.bf16.xpose.msra.mxu0 0
        %2487 = vmatpush.bf16.xpose.msra.mxu0 0
        %2488 = vmatpush.bf16.xpose.msra.mxu0 %v2479
        %2489 = vmatmul.bf16.gmra.mxu0 %v2476
        %v2490 = vpop.f32.mrf.mxu0
        %v2491 = vadd.f32 0.0, %v2490
        %v2492 = vpop.f32.mrf.mxu0
        %2493 = vdwg.mxu0
        %v2494 = vsel %vm1397, %v2491, -inf
        %2495 = vmax.xlane.f32.xlu0 %v2494
        %v2496 = vpop.xlane.xlu0 %2495
        %v2497 = vsub.f32 %v2491, %v2496
        %v2498 = vmul.f32 %v2497, 1.442695
        %v2499 = vpow.pop %v2498
        %v2500 = vsel %vm1397, %v2499, 0.0
        %2501 = vadd.xlane.f32.xlu0 %v2500
        %v2502 = vpop.xlane.xlu0 %2501
        %v2503 = vrcp.pop %v2502
        %v2504 = vmul.f32 %v2499, %v2503
        %v2505 = vpack.c.bf16 %v2504, %v2504
        %2506 = vrot.lane.b32.xlu0 %v2359, 48
        %v2507 = vpop.permute.xlu0 %2506
        %v2509 = vsel %vm1397, %v2505, 0
        %v2512 = vsel %vm1434, %v2507, 0
        %2514 = vmatpush.bf16.msra.mxu0 0
        %2515 = vmatpush.bf16.msra.mxu0 0
        %2516 = vmatpush.bf16.msra.mxu0 0
        %2517 = vmatpush.bf16.msra.mxu0 0
        %2518 = vmatpush.bf16.msra.mxu0 0
        %2519 = vmatpush.bf16.msra.mxu0 0
        %2520 = vmatpush.bf16.msra.mxu0 0
        %2521 = vmatpush.bf16.msra.mxu0 %v2512
        %2522 = vmatmul.bf16.gmra.mxu0 %v2509
        %v2523 = vpop.f32.mrf.mxu0
        %v2524 = vadd.f32 0.0, %v2523
        %v2525 = vpop.f32.mrf.mxu0
        %2526 = vdwg.mxu0
        %2527 = vrot.lane.b32.xlu0 %v2359, 104
        %v2528 = vpop.permute.xlu0 %2527
        %2529 = vrot.lane.b32.xlu0 %v2359, 72
        %v2530 = vpop.permute.xlu0 %2529
        %v2532 = vsel %vm1397, %v2528, 0
        %v2535 = vsel %vm1397, %v2530, 0
        %2537 = vmatpush.bf16.xpose.msra.mxu0 0
        %2538 = vmatpush.bf16.xpose.msra.mxu0 0
        %2539 = vmatpush.bf16.xpose.msra.mxu0 0
        %2540 = vmatpush.bf16.xpose.msra.mxu0 0
        %2541 = vmatpush.bf16.xpose.msra.mxu0 0
        %2542 = vmatpush.bf16.xpose.msra.mxu0 0
        %2543 = vmatpush.bf16.xpose.msra.mxu0 0
        %2544 = vmatpush.bf16.xpose.msra.mxu0 %v2535
        %2545 = vmatmul.bf16.gmra.mxu0 %v2532
        %v2546 = vpop.f32.mrf.mxu0
        %v2547 = vadd.f32 0.0, %v2546
        %v2548 = vpop.f32.mrf.mxu0
        %2549 = vdwg.mxu0
        %v2550 = vsel %vm1397, %v2547, -inf
        %2551 = vmax.xlane.f32.xlu0 %v2550
        %v2552 = vpop.xlane.xlu0 %2551
        %v2553 = vsub.f32 %v2547, %v2552
        %v2554 = vmul.f32 %v2553, 1.442695
        %v2555 = vpow.pop %v2554
        %v2556 = vsel %vm1397, %v2555, 0.0
        %2557 = vadd.xlane.f32.xlu0 %v2556
        %v2558 = vpop.xlane.xlu0 %2557
        %v2559 = vrcp.pop %v2558
        %v2560 = vmul.f32 %v2555, %v2559
        %v2561 = vpack.c.bf16 %v2560, %v2560
        %2562 = vrot.lane.b32.xlu0 %v2359, 40
        %v2563 = vpop.permute.xlu0 %2562
        %v2565 = vsel %vm1397, %v2561, 0
        %v2568 = vsel %vm1434, %v2563, 0
        %2570 = vmatpush.bf16.msra.mxu0 0
        %2571 = vmatpush.bf16.msra.mxu0 0
        %2572 = vmatpush.bf16.msra.mxu0 0
        %2573 = vmatpush.bf16.msra.mxu0 0
        %2574 = vmatpush.bf16.msra.mxu0 0
        %2575 = vmatpush.bf16.msra.mxu0 0
        %2576 = vmatpush.bf16.msra.mxu0 0
        %2577 = vmatpush.bf16.msra.mxu0 %v2568
        %2578 = vmatmul.bf16.gmra.mxu0 %v2565
        %v2579 = vpop.f32.mrf.mxu0
        %v2580 = vadd.f32 0.0, %v2579
        %v2581 = vpop.f32.mrf.mxu0
        %2582 = vdwg.mxu0
        %2584 = vrot.lane.b32.xlu0 %v2468, 8
        %v2585 = vpop.permute.xlu0 %2584
        %2588 = vrot.lane.b32.xlu0 %v2524, 16
        %v2589 = vpop.permute.xlu0 %2588
        %2592 = vrot.lane.b32.xlu0 %v2580, 24
        %v2593 = vpop.permute.xlu0 %2592
        %v2595 = vsel %vm1397, %v2412, %v2585
        %v2596 = vsel %vm1632, %v2595, %v2589
        %v2597 = vsel %vm1634, %v2596, %v2593
        %v2598 = vpack.c.bf16 %v2597, %v2597
        %v2600 = vperm.slane %v2324, 0
        %v2606 = vunpack.c.l.b16 %v2320
        %v2607 = vunpack.c.l.b16 %v2321
        %v2608 = vunpack.c.l.b16 %v2322
        %v2609 = vunpack.c.l.b16 %v2323
        %v2610 = vpack.c.b16 %v2607, %v2606
        %v2611 = vpack.c.b16 %v2609, %v2608
        %v2615 = vsel %vm1376, %v2598, 0
        %2617 = vmatpush.bf16.msra.mxu0 0
        %2618 = vmatpush.bf16.msra.mxu0 0
        %2619 = vmatpush.bf16.msra.mxu0 0
        %2620 = vmatpush.bf16.msra.mxu0 0
        %2621 = vmatpush.bf16.msra.mxu0 0
        %2622 = vmatpush.bf16.msra.mxu0 0
        %2623 = vmatpush.bf16.msra.mxu0 %v2611
        %2624 = vmatpush.bf16.msra.mxu0 %v2610
        %2625 = vmatmul.bf16.gmra.mxu0 %v2615
        %v2626 = vpop.f32.mrf.mxu0
        %v2627 = vadd.f32 %v2600, %v2626
        %v2628 = vpop.f32.mrf.mxu0
        %2629 = vdwg.mxu0
        %v2630 = vadd.f32 %v1347, %v2627
        %v2631 = vsel %vm1376, %v2630, 0.0
        %2632 = vadd.xlane.f32.xlu0 %v2631
        %v2633 = vpop.xlane.xlu0 %2632
        %v2634 = vmul.f32 %v2633, %v1678
        %v2635 = vsub.f32 %v2630, %v2634
        %v2636 = vmul.f32 %v2635, %v2635
        %v2637 = vsel %vm1376, %v2636, 0.0
        %2638 = vadd.xlane.f32.xlu0 %v2637
        %v2639 = vpop.xlane.xlu0 %2638
        %v2640 = vmul.f32 %v2639, %v1678
        %v2641 = vadd.f32 %v2640, 1e-05
        %v2642 = vrsqrt.pop %v2641
        %v2643 = vmul.f32 %v2642, %v2641
        %v2644 = vmul.f32 %v2643, %v2642
        %v2645 = vmul.f32 0.5, %v2644
        %v2646 = vsub.f32 1.5, %v2645
        %v2647 = vmul.f32 %v2642, %v2646
        %vm2648 = vweird.f32 %v2641
        %vm2649 = vweird.f32 %v2642
        %vm2650 = vmor %vm2648, %vm2649
        %v2651 = vsel %vm2650, %v2642, %v2647
        %v2652 = vmul.f32 %v2635, %v2651
        %v2654 = vperm.slane %v2325, 0
        %v2656 = vmul.f32 %v2652, %v2654
        %v2658 = vperm.slane %v2326, 0
        %v2660 = vadd.f32 %v2656, %v2658
        %v2661 = vld [vmem:[%s51] sm:$0xf]
        %v2662 = vld [vmem:[%s51 + $0x4] sm:$0xf]
        %v2663 = vld [vmem:[%s51 + $0x8] sm:$0xf]
        %v2664 = vld [vmem:[%s51 + $0xc] sm:$0xf]
        %v2665 = vld [vmem:[%s53] sm:$0x1]
        %v2666 = vld [vmem:[%s55] sm:$0xf]
        %v2667 = vld [vmem:[%s55 + $0x4] sm:$0xf]
        %v2668 = vld [vmem:[%s55 + $0x8] sm:$0xf]
        %v2669 = vld [vmem:[%s55 + $0xc] sm:$0xf]
        %v2670 = vld [vmem:[%s57] sm:$0x1]
        %v2671 = vld [vmem:[%s59] sm:$0xf]
        %v2672 = vld [vmem:[%s59 + $0x4] sm:$0xf]
        %v2673 = vld [vmem:[%s59 + $0x8] sm:$0xf]
        %v2674 = vld [vmem:[%s59 + $0xc] sm:$0xf]
        %v2675 = vld [vmem:[%s61] sm:$0x1]
        %v2676 = vld [vmem:[%s63] sm:$0x1]
        %v2677 = vld [vmem:[%s65] sm:$0x1]
        %v2678 = vpack.c.bf16 %v2660, %v2660
        %v2680 = vperm.slane %v2665, 0
        %v2686 = vunpack.c.l.b16 %v2661
        %v2687 = vunpack.c.l.b16 %v2662
        %v2688 = vunpack.c.l.b16 %v2663
        %v2689 = vunpack.c.l.b16 %v2664
        %v2690 = vpack.c.b16 %v2687, %v2686
        %v2691 = vpack.c.b16 %v2689, %v2688
        %v2695 = vsel %vm1376, %v2678, 0
        %2697 = vmatpush.bf16.msra.mxu0 0
        %2698 = vmatpush.bf16.msra.mxu0 0
        %2699 = vmatpush.bf16.msra.mxu0 0
        %2700 = vmatpush.bf16.msra.mxu0 0
        %2701 = vmatpush.bf16.msra.mxu0 0
        %2702 = vmatpush.bf16.msra.mxu0 0
        %2703 = vmatpush.bf16.msra.mxu0 %v2691
        %2704 = vmatpush.bf16.msra.mxu0 %v2690
        %2705 = vmatmul.bf16.gmra.mxu0 %v2695
        %v2706 = vpop.f32.mrf.mxu0
        %v2707 = vadd.f32 %v2680, %v2706
        %v2708 = vpop.f32.mrf.mxu0
        %2709 = vdwg.mxu0
        %v2710 = vpack.c.bf16 %v2314, %v2314
        %v2712 = vperm.slane %v2670, 0
        %v2718 = vunpack.c.l.b16 %v2666
        %v2719 = vunpack.c.l.b16 %v2667
        %v2720 = vunpack.c.l.b16 %v2668
        %v2721 = vunpack.c.l.b16 %v2669
        %v2722 = vpack.c.b16 %v2719, %v2718
        %v2723 = vpack.c.b16 %v2721, %v2720
        %v2727 = vsel %vm1376, %v2710, 0
        %2729 = vmatpush.bf16.msra.mxu0 0
        %2730 = vmatpush.bf16.msra.mxu0 0
        %2731 = vmatpush.bf16.msra.mxu0 0
        %2732 = vmatpush.bf16.msra.mxu0 0
        %2733 = vmatpush.bf16.msra.mxu0 0
        %2734 = vmatpush.bf16.msra.mxu0 0
        %2735 = vmatpush.bf16.msra.mxu0 %v2723
        %2736 = vmatpush.bf16.msra.mxu0 %v2722
        %2737 = vmatmul.bf16.gmra.mxu0 %v2727
        %v2738 = vpop.f32.mrf.mxu0
        %v2739 = vadd.f32 %v2712, %v2738
        %v2740 = vpop.f32.mrf.mxu0
        %2741 = vdwg.mxu0
        %v2742 = vpack.c.bf16 %v2707, %v2707
        %v2743 = vpack.c.bf16 %v2739, %v2739
        %v2745 = vsel %vm1397, %v2742, 0
        %v2748 = vsel %vm1397, %v2743, 0
        %2750 = vmatpush.bf16.xpose.msra.mxu0 0
        %2751 = vmatpush.bf16.xpose.msra.mxu0 0
        %2752 = vmatpush.bf16.xpose.msra.mxu0 0
        %2753 = vmatpush.bf16.xpose.msra.mxu0 0
        %2754 = vmatpush.bf16.xpose.msra.mxu0 0
        %2755 = vmatpush.bf16.xpose.msra.mxu0 0
        %2756 = vmatpush.bf16.xpose.msra.mxu0 0
        %2757 = vmatpush.bf16.xpose.msra.mxu0 %v2748
        %2758 = vmatmul.bf16.gmra.mxu0 %v2745
        %v2759 = vpop.f32.mrf.mxu0
        %v2760 = vadd.f32 0.0, %v2759
        %v2761 = vpop.f32.mrf.mxu0
        %2762 = vdwg.mxu0
        %v2763 = vsel %vm1397, %v2760, -inf
        %2764 = vmax.xlane.f32.xlu0 %v2763
        %v2765 = vpop.xlane.xlu0 %2764
        %v2766 = vsub.f32 %v2760, %v2765
        %v2767 = vmul.f32 %v2766, 1.442695
        %v2768 = vpow.pop %v2767
        %v2769 = vsel %vm1397, %v2768, 0.0
        %2770 = vadd.xlane.f32.xlu0 %v2769
        %v2771 = vpop.xlane.xlu0 %2770
        %v2772 = vrcp.pop %v2771
        %v2773 = vmul.f32 %v2768, %v2772
        %v2774 = vpack.c.bf16 %v2773, %v2773
        %2776 = vrot.lane.b32.xlu0 %v2743, 96
        %v2777 = vpop.permute.xlu0 %2776
        %v2779 = vsel %vm1397, %v2774, 0
        %v2782 = vsel %vm1434, %v2777, 0
        %2784 = vmatpush.bf16.msra.mxu0 0
        %2785 = vmatpush.bf16.msra.mxu0 0
        %2786 = vmatpush.bf16.msra.mxu0 0
        %2787 = vmatpush.bf16.msra.mxu0 0
        %2788 = vmatpush.bf16.msra.mxu0 0
        %2789 = vmatpush.bf16.msra.mxu0 0
        %2790 = vmatpush.bf16.msra.mxu0 0
        %2791 = vmatpush.bf16.msra.mxu0 %v2782
        %2792 = vmatmul.bf16.gmra.mxu0 %v2779
        %v2793 = vpop.f32.mrf.mxu0
        %v2794 = vadd.f32 0.0, %v2793
        %v2795 = vpop.f32.mrf.mxu0
        %2796 = vdwg.mxu0
        %2798 = vrot.lane.b32.xlu0 %v2742, 120
        %v2799 = vpop.permute.xlu0 %2798
        %2800 = vrot.lane.b32.xlu0 %v2743, 120
        %v2801 = vpop.permute.xlu0 %2800
        %v2803 = vsel %vm1397, %v2799, 0
        %v2806 = vsel %vm1397, %v2801, 0
        %2808 = vmatpush.bf16.xpose.msra.mxu0 0
        %2809 = vmatpush.bf16.xpose.msra.mxu0 0
        %2810 = vmatpush.bf16.xpose.msra.mxu0 0
        %2811 = vmatpush.bf16.xpose.msra.mxu0 0
        %2812 = vmatpush.bf16.xpose.msra.mxu0 0
        %2813 = vmatpush.bf16.xpose.msra.mxu0 0
        %2814 = vmatpush.bf16.xpose.msra.mxu0 0
        %2815 = vmatpush.bf16.xpose.msra.mxu0 %v2806
        %2816 = vmatmul.bf16.gmra.mxu0 %v2803
        %v2817 = vpop.f32.mrf.mxu0
        %v2818 = vadd.f32 0.0, %v2817
        %v2819 = vpop.f32.mrf.mxu0
        %2820 = vdwg.mxu0
        %v2821 = vsel %vm1397, %v2818, -inf
        %2822 = vmax.xlane.f32.xlu0 %v2821
        %v2823 = vpop.xlane.xlu0 %2822
        %v2824 = vsub.f32 %v2818, %v2823
        %v2825 = vmul.f32 %v2824, 1.442695
        %v2826 = vpow.pop %v2825
        %v2827 = vsel %vm1397, %v2826, 0.0
        %2828 = vadd.xlane.f32.xlu0 %v2827
        %v2829 = vpop.xlane.xlu0 %2828
        %v2830 = vrcp.pop %v2829
        %v2831 = vmul.f32 %v2826, %v2830
        %v2832 = vpack.c.bf16 %v2831, %v2831
        %2833 = vrot.lane.b32.xlu0 %v2743, 88
        %v2834 = vpop.permute.xlu0 %2833
        %v2836 = vsel %vm1397, %v2832, 0
        %v2839 = vsel %vm1434, %v2834, 0
        %2841 = vmatpush.bf16.msra.mxu0 0
        %2842 = vmatpush.bf16.msra.mxu0 0
        %2843 = vmatpush.bf16.msra.mxu0 0
        %2844 = vmatpush.bf16.msra.mxu0 0
        %2845 = vmatpush.bf16.msra.mxu0 0
        %2846 = vmatpush.bf16.msra.mxu0 0
        %2847 = vmatpush.bf16.msra.mxu0 0
        %2848 = vmatpush.bf16.msra.mxu0 %v2839
        %2849 = vmatmul.bf16.gmra.mxu0 %v2836
        %v2850 = vpop.f32.mrf.mxu0
        %v2851 = vadd.f32 0.0, %v2850
        %v2852 = vpop.f32.mrf.mxu0
        %2853 = vdwg.mxu0
        %2854 = vrot.lane.b32.xlu0 %v2742, 112
        %v2855 = vpop.permute.xlu0 %2854
        %2856 = vrot.lane.b32.xlu0 %v2743, 112
        %v2857 = vpop.permute.xlu0 %2856
        %v2859 = vsel %vm1397, %v2855, 0
        %v2862 = vsel %vm1397, %v2857, 0
        %2864 = vmatpush.bf16.xpose.msra.mxu0 0
        %2865 = vmatpush.bf16.xpose.msra.mxu0 0
        %2866 = vmatpush.bf16.xpose.msra.mxu0 0
        %2867 = vmatpush.bf16.xpose.msra.mxu0 0
        %2868 = vmatpush.bf16.xpose.msra.mxu0 0
        %2869 = vmatpush.bf16.xpose.msra.mxu0 0
        %2870 = vmatpush.bf16.xpose.msra.mxu0 0
        %2871 = vmatpush.bf16.xpose.msra.mxu0 %v2862
        %2872 = vmatmul.bf16.gmra.mxu0 %v2859
        %v2873 = vpop.f32.mrf.mxu0
        %v2874 = vadd.f32 0.0, %v2873
        %v2875 = vpop.f32.mrf.mxu0
        %2876 = vdwg.mxu0
        %v2877 = vsel %vm1397, %v2874, -inf
        %2878 = vmax.xlane.f32.xlu0 %v2877
        %v2879 = vpop.xlane.xlu0 %2878
        %v2880 = vsub.f32 %v2874, %v2879
        %v2881 = vmul.f32 %v2880, 1.442695
        %v2882 = vpow.pop %v2881
        %v2883 = vsel %vm1397, %v2882, 0.0
        %2884 = vadd.xlane.f32.xlu0 %v2883
        %v2885 = vpop.xlane.xlu0 %2884
        %v2886 = vrcp.pop %v2885
        %v2887 = vmul.f32 %v2882, %v2886
        %v2888 = vpack.c.bf16 %v2887, %v2887
        %2889 = vrot.lane.b32.xlu0 %v2743, 80
        %v2890 = vpop.permute.xlu0 %2889
        %v2892 = vsel %vm1397, %v2888, 0
        %v2895 = vsel %vm1434, %v2890, 0
        %2897 = vmatpush.bf16.msra.mxu0 0
        %2898 = vmatpush.bf16.msra.mxu0 0
        %2899 = vmatpush.bf16.msra.mxu0 0
        %2900 = vmatpush.bf16.msra.mxu0 0
        %2901 = vmatpush.bf16.msra.mxu0 0
        %2902 = vmatpush.bf16.msra.mxu0 0
        %2903 = vmatpush.bf16.msra.mxu0 0
        %2904 = vmatpush.bf16.msra.mxu0 %v2895
        %2905 = vmatmul.bf16.gmra.mxu0 %v2892
        %v2906 = vpop.f32.mrf.mxu0
        %v2907 = vadd.f32 0.0, %v2906
        %v2908 = vpop.f32.mrf.mxu0
        %2909 = vdwg.mxu0
        %2910 = vrot.lane.b32.xlu0 %v2742, 104
        %v2911 = vpop.permute.xlu0 %2910
        %2912 = vrot.lane.b32.xlu0 %v2743, 104
        %v2913 = vpop.permute.xlu0 %2912
        %v2915 = vsel %vm1397, %v2911, 0
        %v2918 = vsel %vm1397, %v2913, 0
        %2920 = vmatpush.bf16.xpose.msra.mxu0 0
        %2921 = vmatpush.bf16.xpose.msra.mxu0 0
        %2922 = vmatpush.bf16.xpose.msra.mxu0 0
        %2923 = vmatpush.bf16.xpose.msra.mxu0 0
        %2924 = vmatpush.bf16.xpose.msra.mxu0 0
        %2925 = vmatpush.bf16.xpose.msra.mxu0 0
        %2926 = vmatpush.bf16.xpose.msra.mxu0 0
        %2927 = vmatpush.bf16.xpose.msra.mxu0 %v2918
        %2928 = vmatmul.bf16.gmra.mxu0 %v2915
        %v2929 = vpop.f32.mrf.mxu0
        %v2930 = vadd.f32 0.0, %v2929
        %v2931 = vpop.f32.mrf.mxu0
        %2932 = vdwg.mxu0
        %v2933 = vsel %vm1397, %v2930, -inf
        %2934 = vmax.xlane.f32.xlu0 %v2933
        %v2935 = vpop.xlane.xlu0 %2934
        %v2936 = vsub.f32 %v2930, %v2935
        %v2937 = vmul.f32 %v2936, 1.442695
        %v2938 = vpow.pop %v2937
        %v2939 = vsel %vm1397, %v2938, 0.0
        %2940 = vadd.xlane.f32.xlu0 %v2939
        %v2941 = vpop.xlane.xlu0 %2940
        %v2942 = vrcp.pop %v2941
        %v2943 = vmul.f32 %v2938, %v2942
        %v2944 = vpack.c.bf16 %v2943, %v2943
        %2945 = vrot.lane.b32.xlu0 %v2743, 72
        %v2946 = vpop.permute.xlu0 %2945
        %v2948 = vsel %vm1397, %v2944, 0
        %v2951 = vsel %vm1434, %v2946, 0
        %2953 = vmatpush.bf16.msra.mxu0 0
        %2954 = vmatpush.bf16.msra.mxu0 0
        %2955 = vmatpush.bf16.msra.mxu0 0
        %2956 = vmatpush.bf16.msra.mxu0 0
        %2957 = vmatpush.bf16.msra.mxu0 0
        %2958 = vmatpush.bf16.msra.mxu0 0
        %2959 = vmatpush.bf16.msra.mxu0 0
        %2960 = vmatpush.bf16.msra.mxu0 %v2951
        %2961 = vmatmul.bf16.gmra.mxu0 %v2948
        %v2962 = vpop.f32.mrf.mxu0
        %v2963 = vadd.f32 0.0, %v2962
        %v2964 = vpop.f32.mrf.mxu0
        %2965 = vdwg.mxu0
        %2967 = vrot.lane.b32.xlu0 %v2851, 8
        %v2968 = vpop.permute.xlu0 %2967
        %2971 = vrot.lane.b32.xlu0 %v2907, 16
        %v2972 = vpop.permute.xlu0 %2971
        %2975 = vrot.lane.b32.xlu0 %v2963, 24
        %v2976 = vpop.permute.xlu0 %2975
        %v2978 = vsel %vm1397, %v2794, %v2968
        %v2979 = vsel %vm1632, %v2978, %v2972
        %v2980 = vsel %vm1634, %v2979, %v2976
        %v2981 = vpack.c.bf16 %v2980, %v2980
        %v2983 = vperm.slane %v2675, 0
        %v2989 = vunpack.c.l.b16 %v2671
        %v2990 = vunpack.c.l.b16 %v2672
        %v2991 = vunpack.c.l.b16 %v2673
        %v2992 = vunpack.c.l.b16 %v2674
        %v2993 = vpack.c.b16 %v2990, %v2989
        %v2994 = vpack.c.b16 %v2992, %v2991
        %v2998 = vsel %vm1376, %v2981, 0
        %3000 = vmatpush.bf16.msra.mxu0 0
        %3001 = vmatpush.bf16.msra.mxu0 0
        %3002 = vmatpush.bf16.msra.mxu0 0
        %3003 = vmatpush.bf16.msra.mxu0 0
        %3004 = vmatpush.bf16.msra.mxu0 0
        %3005 = vmatpush.bf16.msra.mxu0 0
        %3006 = vmatpush.bf16.msra.mxu0 %v2994
        %3007 = vmatpush.bf16.msra.mxu0 %v2993
        %3008 = vmatmul.bf16.gmra.mxu0 %v2998
        %v3009 = vpop.f32.mrf.mxu0
        %v3010 = vadd.f32 %v2983, %v3009
        %v3011 = vpop.f32.mrf.mxu0
        %3012 = vdwg.mxu0
        %v3013 = vadd.f32 %v2660, %v3010
        %v3014 = vsel %vm1376, %v3013, 0.0
        %3015 = vadd.xlane.f32.xlu0 %v3014
        %v3016 = vpop.xlane.xlu0 %3015
        %v3017 = vmul.f32 %v3016, %v1678
        %v3018 = vsub.f32 %v3013, %v3017
        %v3019 = vmul.f32 %v3018, %v3018
        %v3020 = vsel %vm1376, %v3019, 0.0
        %3021 = vadd.xlane.f32.xlu0 %v3020
        %v3022 = vpop.xlane.xlu0 %3021
        %v3023 = vmul.f32 %v3022, %v1678
        %v3024 = vadd.f32 %v3023, 1e-05
        %v3025 = vrsqrt.pop %v3024
        %v3026 = vmul.f32 %v3025, %v3024
        %v3027 = vmul.f32 %v3026, %v3025
        %v3028 = vmul.f32 0.5, %v3027
        %v3029 = vsub.f32 1.5, %v3028
        %v3030 = vmul.f32 %v3025, %v3029
        %vm3031 = vweird.f32 %v3024
        %vm3032 = vweird.f32 %v3025
        %vm3033 = vmor %vm3031, %vm3032
        %v3034 = vsel %vm3033, %v3025, %v3030
        %v3035 = vmul.f32 %v3018, %v3034
        %v3037 = vperm.slane %v2676, 0
        %v3039 = vmul.f32 %v3035, %v3037
        %v3041 = vperm.slane %v2677, 0
        %v3043 = vadd.f32 %v3039, %v3041
        %v3044 = vld [vmem:[%s67] sm:$0xf]
        %v3045 = vld [vmem:[%s67 + $0x4] sm:$0xf]
        %v3046 = vld [vmem:[%s67 + $0x8] sm:$0xf]
        %v3047 = vld [vmem:[%s67 + $0xc] sm:$0xf]
        %v3048 = vld [vmem:[%s69] sm:$0x1]
        %v3049 = vld [vmem:[%s71] sm:$0xf]
        %v3050 = vld [vmem:[%s71 + $0x4] sm:$0xf]
        %v3051 = vld [vmem:[%s71 + $0x8] sm:$0xf]
        %v3052 = vld [vmem:[%s71 + $0xc] sm:$0xf]
        %v3053 = vld [vmem:[%s71 + $0x10] sm:$0xf]
        %v3054 = vld [vmem:[%s71 + $0x14] sm:$0xf]
        %v3055 = vld [vmem:[%s71 + $0x18] sm:$0xf]
        %v3056 = vld [vmem:[%s71 + $0x1c] sm:$0xf]
        %v3057 = vld [vmem:[%s73] sm:$0x1]
        %v3058 = vld [vmem:[%s75] sm:$0x1]
        %v3059 = vld [vmem:[%s77] sm:$0x1]
        %v3060 = vpack.c.bf16 %v3043, %v3043
        %v3062 = vperm.slane %v3048, 0
        %v3068 = vunpack.c.l.b16 %v3044
        %v3069 = vunpack.c.l.b16 %v3045
        %v3070 = vunpack.c.l.b16 %v3046
        %v3071 = vunpack.c.l.b16 %v3047
        %v3072 = vpack.c.b16 %v3069, %v3068
        %v3073 = vpack.c.b16 %v3071, %v3070
        %v3077 = vsel %vm1376, %v3060, 0
        %3079 = vmatpush.bf16.msra.mxu0 0
        %3080 = vmatpush.bf16.msra.mxu0 0
        %3081 = vmatpush.bf16.msra.mxu0 0
        %3082 = vmatpush.bf16.msra.mxu0 0
        %3083 = vmatpush.bf16.msra.mxu0 0
        %3084 = vmatpush.bf16.msra.mxu0 0
        %3085 = vmatpush.bf16.msra.mxu0 %v3073
        %3086 = vmatpush.bf16.msra.mxu0 %v3072
        %3087 = vmatmul.bf16.gmra.mxu0 %v3077
        %v3088 = vpop.f32.mrf.mxu0
        %v3089 = vadd.f32 %v3062, %v3088
        %v3090 = vpop.f32.mrf.mxu0
        %3091 = vdwg.mxu0
        %v3092 = vmax.f32 %v3089, 0.0
        %v3093 = vpack.c.bf16 %v3092, %v3092
        %v3102 = vunpack.c.l.b16 %v3049
        %v3103 = vunpack.c.l.b16 %v3050
        %v3104 = vunpack.c.l.b16 %v3051
        %v3105 = vunpack.c.l.b16 %v3052
        %v3106 = vunpack.c.l.b16 %v3053
        %v3107 = vunpack.c.l.b16 %v3054
        %v3108 = vunpack.c.l.b16 %v3055
        %v3109 = vunpack.c.l.b16 %v3056
        %v3110 = vpack.c.b16 %v3103, %v3102
        %v3111 = vpack.c.b16 %v3105, %v3104
        %v3112 = vpack.c.b16 %v3107, %v3106
        %v3113 = vpack.c.b16 %v3109, %v3108
        %v3119 = vsel %vm1780, %v3093, 0
        %3121 = vmatpush.bf16.msra.mxu0 0
        %3122 = vmatpush.bf16.msra.mxu0 0
        %3123 = vmatpush.bf16.msra.mxu0 0
        %3124 = vmatpush.bf16.msra.mxu0 0
        %3125 = vmatpush.bf16.msra.mxu0 %v3113
        %3126 = vmatpush.bf16.msra.mxu0 %v3112
        %3127 = vmatpush.bf16.msra.mxu0 %v3111
        %3128 = vmatpush.bf16.msra.mxu0 %v3110
        %3129 = vmatmul.bf16.gmra.mxu0 %v3119
        %v3130 = vpop.f32.mrf.mxu0
        %v3131 = vadd.f32 0.0, %v3130
        %v3132 = vpop.f32.mrf.mxu0
        %3133 = vdwg.mxu0
        %v3134 = vadd.f32 %v3043, %v3131
        %v3136 = vperm.slane %v3057, 0
        %v3138 = vadd.f32 %v3134, %v3136
        %v3139 = vsel %vm1376, %v3138, 0.0
        %3140 = vadd.xlane.f32.xlu0 %v3139
        %v3141 = vpop.xlane.xlu0 %3140
        %v3142 = vmul.f32 %v3141, %v1678
        %v3143 = vsub.f32 %v3138, %v3142
        %v3144 = vmul.f32 %v3143, %v3143
        %v3145 = vsel %vm1376, %v3144, 0.0
        %3146 = vadd.xlane.f32.xlu0 %v3145
        %v3147 = vpop.xlane.xlu0 %3146
        %v3148 = vmul.f32 %v3147, %v1678
        %v3149 = vadd.f32 %v3148, 1e-05
        %v3150 = vrsqrt.pop %v3149
        %v3151 = vmul.f32 %v3150, %v3149
        %v3152 = vmul.f32 %v3151, %v3150
        %v3153 = vmul.f32 0.5, %v3152
        %v3154 = vsub.f32 1.5, %v3153
        %v3155 = vmul.f32 %v3150, %v3154
        %vm3156 = vweird.f32 %v3149
        %vm3157 = vweird.f32 %v3150
        %vm3158 = vmor %vm3156, %vm3157
        %v3159 = vsel %vm3158, %v3150, %v3155
        %v3160 = vmul.f32 %v3143, %v3159
        %v3162 = vperm.slane %v3058, 0
        %v3164 = vmul.f32 %v3160, %v3162
        %v3166 = vperm.slane %v3059, 0
        %v3168 = vadd.f32 %v3164, %v3166
        %s3169 = scalar_lea.vmem %s39, 16
        %v3170 = vld [vmem:[%s3169] sm:$0xf]
        %v3171 = vld [vmem:[%s3169 + $0x4] sm:$0xf]
        %v3172 = vld [vmem:[%s3169 + $0x8] sm:$0xf]
        %v3173 = vld [vmem:[%s3169 + $0xc] sm:$0xf]
        %s3174 = scalar_lea.vmem %s41, 1
        %v3175 = vld [vmem:[%s3174] sm:$0x1]
        %s3176 = scalar_lea.vmem %s43, 16
        %v3177 = vld [vmem:[%s3176] sm:$0xf]
        %v3178 = vld [vmem:[%s3176 + $0x4] sm:$0xf]
        %v3179 = vld [vmem:[%s3176 + $0x8] sm:$0xf]
        %v3180 = vld [vmem:[%s3176 + $0xc] sm:$0xf]
        %s3181 = scalar_lea.vmem %s45, 1
        %v3182 = vld [vmem:[%s3181] sm:$0x1]
        %s3183 = scalar_lea.vmem %s47, 1
        %v3184 = vld [vmem:[%s3183] sm:$0x1]
        %s3185 = scalar_lea.vmem %s49, 1
        %v3186 = vld [vmem:[%s3185] sm:$0x1]
        %v3187 = vpack.c.bf16 %v3168, %v3168
        %v3189 = vperm.slane %v3175, 0
        %v3195 = vunpack.c.l.b16 %v3170
        %v3196 = vunpack.c.l.b16 %v3171
        %v3197 = vunpack.c.l.b16 %v3172
        %v3198 = vunpack.c.l.b16 %v3173
        %v3199 = vpack.c.b16 %v3196, %v3195
        %v3200 = vpack.c.b16 %v3198, %v3197
        %v3204 = vsel %vm1376, %v3187, 0
        %3206 = vmatpush.bf16.msra.mxu0 0
        %3207 = vmatpush.bf16.msra.mxu0 0
        %3208 = vmatpush.bf16.msra.mxu0 0
        %3209 = vmatpush.bf16.msra.mxu0 0
        %3210 = vmatpush.bf16.msra.mxu0 0
        %3211 = vmatpush.bf16.msra.mxu0 0
        %3212 = vmatpush.bf16.msra.mxu0 %v3200
        %3213 = vmatpush.bf16.msra.mxu0 %v3199
        %3214 = vmatmul.bf16.gmra.mxu0 %v3204
        %v3215 = vpop.f32.mrf.mxu0
        %v3216 = vadd.f32 %v3189, %v3215
        %v3217 = vpop.f32.mrf.mxu0
        %3218 = vdwg.mxu0
        %v3219 = vpack.c.bf16 %v3216, %v3216
        %3221 = vrot.lane.b32.xlu0 %v3219, 96
        %v3222 = vpop.permute.xlu0 %3221
        %v3224 = vsel %vm1397, %v3219, 0
        %v3227 = vsel %vm1397, %v3222, 0
        %3229 = vmatpush.bf16.xpose.msra.mxu0 0
        %3230 = vmatpush.bf16.xpose.msra.mxu0 0
        %3231 = vmatpush.bf16.xpose.msra.mxu0 0
        %3232 = vmatpush.bf16.xpose.msra.mxu0 0
        %3233 = vmatpush.bf16.xpose.msra.mxu0 0
        %3234 = vmatpush.bf16.xpose.msra.mxu0 0
        %3235 = vmatpush.bf16.xpose.msra.mxu0 0
        %3236 = vmatpush.bf16.xpose.msra.mxu0 %v3227
        %3237 = vmatmul.bf16.gmra.mxu0 %v3224
        %v3238 = vpop.f32.mrf.mxu0
        %v3239 = vadd.f32 0.0, %v3238
        %v3240 = vpop.f32.mrf.mxu0
        %3241 = vdwg.mxu0
        %v3242 = vsel %vm1397, %v3239, -inf
        %3243 = vmax.xlane.f32.xlu0 %v3242
        %v3244 = vpop.xlane.xlu0 %3243
        %v3245 = vsub.f32 %v3239, %v3244
        %v3246 = vmul.f32 %v3245, 1.442695
        %v3247 = vpow.pop %v3246
        %v3248 = vsel %vm1397, %v3247, 0.0
        %3249 = vadd.xlane.f32.xlu0 %v3248
        %v3250 = vpop.xlane.xlu0 %3249
        %v3251 = vrcp.pop %v3250
        %v3252 = vmul.f32 %v3247, %v3251
        %v3253 = vpack.c.bf16 %v3252, %v3252
        %3254 = vrot.lane.b32.xlu0 %v3219, 64
        %v3255 = vpop.permute.xlu0 %3254
        %v3257 = vsel %vm1397, %v3253, 0
        %v3260 = vsel %vm1434, %v3255, 0
        %3262 = vmatpush.bf16.msra.mxu0 0
        %3263 = vmatpush.bf16.msra.mxu0 0
        %3264 = vmatpush.bf16.msra.mxu0 0
        %3265 = vmatpush.bf16.msra.mxu0 0
        %3266 = vmatpush.bf16.msra.mxu0 0
        %3267 = vmatpush.bf16.msra.mxu0 0
        %3268 = vmatpush.bf16.msra.mxu0 0
        %3269 = vmatpush.bf16.msra.mxu0 %v3260
        %3270 = vmatmul.bf16.gmra.mxu0 %v3257
        %v3271 = vpop.f32.mrf.mxu0
        %v3272 = vadd.f32 0.0, %v3271
        %v3273 = vpop.f32.mrf.mxu0
        %3274 = vdwg.mxu0
        %3275 = vrot.lane.b32.xlu0 %v3219, 120
        %v3276 = vpop.permute.xlu0 %3275
        %3277 = vrot.lane.b32.xlu0 %v3219, 88
        %v3278 = vpop.permute.xlu0 %3277
        %v3280 = vsel %vm1397, %v3276, 0
        %v3283 = vsel %vm1397, %v3278, 0
        %3285 = vmatpush.bf16.xpose.msra.mxu0 0
        %3286 = vmatpush.bf16.xpose.msra.mxu0 0
        %3287 = vmatpush.bf16.xpose.msra.mxu0 0
        %3288 = vmatpush.bf16.xpose.msra.mxu0 0
        %3289 = vmatpush.bf16.xpose.msra.mxu0 0
        %3290 = vmatpush.bf16.xpose.msra.mxu0 0
        %3291 = vmatpush.bf16.xpose.msra.mxu0 0
        %3292 = vmatpush.bf16.xpose.msra.mxu0 %v3283
        %3293 = vmatmul.bf16.gmra.mxu0 %v3280
        %v3294 = vpop.f32.mrf.mxu0
        %v3295 = vadd.f32 0.0, %v3294
        %v3296 = vpop.f32.mrf.mxu0
        %3297 = vdwg.mxu0
        %v3298 = vsel %vm1397, %v3295, -inf
        %3299 = vmax.xlane.f32.xlu0 %v3298
        %v3300 = vpop.xlane.xlu0 %3299
        %v3301 = vsub.f32 %v3295, %v3300
        %v3302 = vmul.f32 %v3301, 1.442695
        %v3303 = vpow.pop %v3302
        %v3304 = vsel %vm1397, %v3303, 0.0
        %3305 = vadd.xlane.f32.xlu0 %v3304
        %v3306 = vpop.xlane.xlu0 %3305
        %v3307 = vrcp.pop %v3306
        %v3308 = vmul.f32 %v3303, %v3307
        %v3309 = vpack.c.bf16 %v3308, %v3308
        %3310 = vrot.lane.b32.xlu0 %v3219, 56
        %v3311 = vpop.permute.xlu0 %3310
        %v3313 = vsel %vm1397, %v3309, 0
        %v3316 = vsel %vm1434, %v3311, 0
        %3318 = vmatpush.bf16.msra.mxu0 0
        %3319 = vmatpush.bf16.msra.mxu0 0
        %3320 = vmatpush.bf16.msra.mxu0 0
        %3321 = vmatpush.bf16.msra.mxu0 0
        %3322 = vmatpush.bf16.msra.mxu0 0
        %3323 = vmatpush.bf16.msra.mxu0 0
        %3324 = vmatpush.bf16.msra.mxu0 0
        %3325 = vmatpush.bf16.msra.mxu0 %v3316
        %3326 = vmatmul.bf16.gmra.mxu0 %v3313
        %v3327 = vpop.f32.mrf.mxu0
        %v3328 = vadd.f32 0.0, %v3327
        %v3329 = vpop.f32.mrf.mxu0
        %3330 = vdwg.mxu0
        %3331 = vrot.lane.b32.xlu0 %v3219, 112
        %v3332 = vpop.permute.xlu0 %3331
        %3333 = vrot.lane.b32.xlu0 %v3219, 80
        %v3334 = vpop.permute.xlu0 %3333
        %v3336 = vsel %vm1397, %v3332, 0
        %v3339 = vsel %vm1397, %v3334, 0
        %3341 = vmatpush.bf16.xpose.msra.mxu0 0
        %3342 = vmatpush.bf16.xpose.msra.mxu0 0
        %3343 = vmatpush.bf16.xpose.msra.mxu0 0
        %3344 = vmatpush.bf16.xpose.msra.mxu0 0
        %3345 = vmatpush.bf16.xpose.msra.mxu0 0
        %3346 = vmatpush.bf16.xpose.msra.mxu0 0
        %3347 = vmatpush.bf16.xpose.msra.mxu0 0
        %3348 = vmatpush.bf16.xpose.msra.mxu0 %v3339
        %3349 = vmatmul.bf16.gmra.mxu0 %v3336
        %v3350 = vpop.f32.mrf.mxu0
        %v3351 = vadd.f32 0.0, %v3350
        %v3352 = vpop.f32.mrf.mxu0
        %3353 = vdwg.mxu0
        %v3354 = vsel %vm1397, %v3351, -inf
        %3355 = vmax.xlane.f32.xlu0 %v3354
        %v3356 = vpop.xlane.xlu0 %3355
        %v3357 = vsub.f32 %v3351, %v3356
        %v3358 = vmul.f32 %v3357, 1.442695
        %v3359 = vpow.pop %v3358
        %v3360 = vsel %vm1397, %v3359, 0.0
        %3361 = vadd.xlane.f32.xlu0 %v3360
        %v3362 = vpop.xlane.xlu0 %3361
        %v3363 = vrcp.pop %v3362
        %v3364 = vmul.f32 %v3359, %v3363
        %v3365 = vpack.c.bf16 %v3364, %v3364
        %3366 = vrot.lane.b32.xlu0 %v3219, 48
        %v3367 = vpop.permute.xlu0 %3366
        %v3369 = vsel %vm1397, %v3365, 0
        %v3372 = vsel %vm1434, %v3367, 0
        %3374 = vmatpush.bf16.msra.mxu0 0
        %3375 = vmatpush.bf16.msra.mxu0 0
        %3376 = vmatpush.bf16.msra.mxu0 0
        %3377 = vmatpush.bf16.msra.mxu0 0
        %3378 = vmatpush.bf16.msra.mxu0 0
        %3379 = vmatpush.bf16.msra.mxu0 0
        %3380 = vmatpush.bf16.msra.mxu0 0
        %3381 = vmatpush.bf16.msra.mxu0 %v3372
        %3382 = vmatmul.bf16.gmra.mxu0 %v3369
        %v3383 = vpop.f32.mrf.mxu0
        %v3384 = vadd.f32 0.0, %v3383
        %v3385 = vpop.f32.mrf.mxu0
        %3386 = vdwg.mxu0
        %3387 = vrot.lane.b32.xlu0 %v3219, 104
        %v3388 = vpop.permute.xlu0 %3387
        %3389 = vrot.lane.b32.xlu0 %v3219, 72
        %v3390 = vpop.permute.xlu0 %3389
        %v3392 = vsel %vm1397, %v3388, 0
        %v3395 = vsel %vm1397, %v3390, 0
        %3397 = vmatpush.bf16.xpose.msra.mxu0 0
        %3398 = vmatpush.bf16.xpose.msra.mxu0 0
        %3399 = vmatpush.bf16.xpose.msra.mxu0 0
        %3400 = vmatpush.bf16.xpose.msra.mxu0 0
        %3401 = vmatpush.bf16.xpose.msra.mxu0 0
        %3402 = vmatpush.bf16.xpose.msra.mxu0 0
        %3403 = vmatpush.bf16.xpose.msra.mxu0 0
        %3404 = vmatpush.bf16.xpose.msra.mxu0 %v3395
        %3405 = vmatmul.bf16.gmra.mxu0 %v3392
        %v3406 = vpop.f32.mrf.mxu0
        %v3407 = vadd.f32 0.0, %v3406
        %v3408 = vpop.f32.mrf.mxu0
        %3409 = vdwg.mxu0
        %v3410 = vsel %vm1397, %v3407, -inf
        %3411 = vmax.xlane.f32.xlu0 %v3410
        %v3412 = vpop.xlane.xlu0 %3411
        %v3413 = vsub.f32 %v3407, %v3412
        %v3414 = vmul.f32 %v3413, 1.442695
        %v3415 = vpow.pop %v3414
        %v3416 = vsel %vm1397, %v3415, 0.0
        %3417 = vadd.xlane.f32.xlu0 %v3416
        %v3418 = vpop.xlane.xlu0 %3417
        %v3419 = vrcp.pop %v3418
        %v3420 = vmul.f32 %v3415, %v3419
        %v3421 = vpack.c.bf16 %v3420, %v3420
        %3422 = vrot.lane.b32.xlu0 %v3219, 40
        %v3423 = vpop.permute.xlu0 %3422
        %v3425 = vsel %vm1397, %v3421, 0
        %v3428 = vsel %vm1434, %v3423, 0
        %3430 = vmatpush.bf16.msra.mxu0 0
        %3431 = vmatpush.bf16.msra.mxu0 0
        %3432 = vmatpush.bf16.msra.mxu0 0
        %3433 = vmatpush.bf16.msra.mxu0 0
        %3434 = vmatpush.bf16.msra.mxu0 0
        %3435 = vmatpush.bf16.msra.mxu0 0
        %3436 = vmatpush.bf16.msra.mxu0 0
        %3437 = vmatpush.bf16.msra.mxu0 %v3428
        %3438 = vmatmul.bf16.gmra.mxu0 %v3425
        %v3439 = vpop.f32.mrf.mxu0
        %v3440 = vadd.f32 0.0, %v3439
        %v3441 = vpop.f32.mrf.mxu0
        %3442 = vdwg.mxu0
        %3444 = vrot.lane.b32.xlu0 %v3328, 8
        %v3445 = vpop.permute.xlu0 %3444
        %3448 = vrot.lane.b32.xlu0 %v3384, 16
        %v3449 = vpop.permute.xlu0 %3448
        %3452 = vrot.lane.b32.xlu0 %v3440, 24
        %v3453 = vpop.permute.xlu0 %3452
        %v3455 = vsel %vm1397, %v3272, %v3445
        %v3456 = vsel %vm1632, %v3455, %v3449
        %v3457 = vsel %vm1634, %v3456, %v3453
        %v3458 = vpack.c.bf16 %v3457, %v3457
        %v3460 = vperm.slane %v3182, 0
        %v3466 = vunpack.c.l.b16 %v3177
        %v3467 = vunpack.c.l.b16 %v3178
        %v3468 = vunpack.c.l.b16 %v3179
        %v3469 = vunpack.c.l.b16 %v3180
        %v3470 = vpack.c.b16 %v3467, %v3466
        %v3471 = vpack.c.b16 %v3469, %v3468
        %v3475 = vsel %vm1376, %v3458, 0
        %3477 = vmatpush.bf16.msra.mxu0 0
        %3478 = vmatpush.bf16.msra.mxu0 0
        %3479 = vmatpush.bf16.msra.mxu0 0
        %3480 = vmatpush.bf16.msra.mxu0 0
        %3481 = vmatpush.bf16.msra.mxu0 0
        %3482 = vmatpush.bf16.msra.mxu0 0
        %3483 = vmatpush.bf16.msra.mxu0 %v3471
        %3484 = vmatpush.bf16.msra.mxu0 %v3470
        %3485 = vmatmul.bf16.gmra.mxu0 %v3475
        %v3486 = vpop.f32.mrf.mxu0
        %v3487 = vadd.f32 %v3460, %v3486
        %v3488 = vpop.f32.mrf.mxu0
        %3489 = vdwg.mxu0
        %v3490 = vadd.f32 %v3168, %v3487
        %v3491 = vsel %vm1376, %v3490, 0.0
        %3492 = vadd.xlane.f32.xlu0 %v3491
        %v3493 = vpop.xlane.xlu0 %3492
        %v3494 = vmul.f32 %v3493, %v1678
        %v3495 = vsub.f32 %v3490, %v3494
        %v3496 = vmul.f32 %v3495, %v3495
        %v3497 = vsel %vm1376, %v3496, 0.0
        %3498 = vadd.xlane.f32.xlu0 %v3497
        %v3499 = vpop.xlane.xlu0 %3498
        %v3500 = vmul.f32 %v3499, %v1678
        %v3501 = vadd.f32 %v3500, 1e-05
        %v3502 = vrsqrt.pop %v3501
        %v3503 = vmul.f32 %v3502, %v3501
        %v3504 = vmul.f32 %v3503, %v3502
        %v3505 = vmul.f32 0.5, %v3504
        %v3506 = vsub.f32 1.5, %v3505
        %v3507 = vmul.f32 %v3502, %v3506
        %vm3508 = vweird.f32 %v3501
        %vm3509 = vweird.f32 %v3502
        %vm3510 = vmor %vm3508, %vm3509
        %v3511 = vsel %vm3510, %v3502, %v3507
        %v3512 = vmul.f32 %v3495, %v3511
        %v3514 = vperm.slane %v3184, 0
        %v3516 = vmul.f32 %v3512, %v3514
        %v3518 = vperm.slane %v3186, 0
        %v3520 = vadd.f32 %v3516, %v3518
        %s3521 = scalar_lea.vmem %s51, 16
        %v3522 = vld [vmem:[%s3521] sm:$0xf]
        %v3523 = vld [vmem:[%s3521 + $0x4] sm:$0xf]
        %v3524 = vld [vmem:[%s3521 + $0x8] sm:$0xf]
        %v3525 = vld [vmem:[%s3521 + $0xc] sm:$0xf]
        %s3526 = scalar_lea.vmem %s53, 1
        %v3527 = vld [vmem:[%s3526] sm:$0x1]
        %s3528 = scalar_lea.vmem %s55, 16
        %v3529 = vld [vmem:[%s3528] sm:$0xf]
        %v3530 = vld [vmem:[%s3528 + $0x4] sm:$0xf]
        %v3531 = vld [vmem:[%s3528 + $0x8] sm:$0xf]
        %v3532 = vld [vmem:[%s3528 + $0xc] sm:$0xf]
        %s3533 = scalar_lea.vmem %s57, 1
        %v3534 = vld [vmem:[%s3533] sm:$0x1]
        %s3535 = scalar_lea.vmem %s59, 16
        %v3536 = vld [vmem:[%s3535] sm:$0xf]
        %v3537 = vld [vmem:[%s3535 + $0x4] sm:$0xf]
        %v3538 = vld [vmem:[%s3535 + $0x8] sm:$0xf]
        %v3539 = vld [vmem:[%s3535 + $0xc] sm:$0xf]
        %s3540 = scalar_lea.vmem %s61, 1
        %v3541 = vld [vmem:[%s3540] sm:$0x1]
        %s3542 = scalar_lea.vmem %s63, 1
        %v3543 = vld [vmem:[%s3542] sm:$0x1]
        %s3544 = scalar_lea.vmem %s65, 1
        %v3545 = vld [vmem:[%s3544] sm:$0x1]
        %v3546 = vpack.c.bf16 %v3520, %v3520
        %v3548 = vperm.slane %v3527, 0
        %v3554 = vunpack.c.l.b16 %v3522
        %v3555 = vunpack.c.l.b16 %v3523
        %v3556 = vunpack.c.l.b16 %v3524
        %v3557 = vunpack.c.l.b16 %v3525
        %v3558 = vpack.c.b16 %v3555, %v3554
        %v3559 = vpack.c.b16 %v3557, %v3556
        %v3563 = vsel %vm1376, %v3546, 0
        %3565 = vmatpush.bf16.msra.mxu0 0
        %3566 = vmatpush.bf16.msra.mxu0 0
        %3567 = vmatpush.bf16.msra.mxu0 0
        %3568 = vmatpush.bf16.msra.mxu0 0
        %3569 = vmatpush.bf16.msra.mxu0 0
        %3570 = vmatpush.bf16.msra.mxu0 0
        %3571 = vmatpush.bf16.msra.mxu0 %v3559
        %3572 = vmatpush.bf16.msra.mxu0 %v3558
        %3573 = vmatmul.bf16.gmra.mxu0 %v3563
        %v3574 = vpop.f32.mrf.mxu0
        %v3575 = vadd.f32 %v3548, %v3574
        %v3576 = vpop.f32.mrf.mxu0
        %3577 = vdwg.mxu0
        %v3579 = vperm.slane %v3534, 0
        %v3585 = vunpack.c.l.b16 %v3529
        %v3586 = vunpack.c.l.b16 %v3530
        %v3587 = vunpack.c.l.b16 %v3531
        %v3588 = vunpack.c.l.b16 %v3532
        %v3589 = vpack.c.b16 %v3586, %v3585
        %v3590 = vpack.c.b16 %v3588, %v3587
        %3593 = vmatpush.bf16.msra.mxu0 0
        %3594 = vmatpush.bf16.msra.mxu0 0
        %3595 = vmatpush.bf16.msra.mxu0 0
        %3596 = vmatpush.bf16.msra.mxu0 0
        %3597 = vmatpush.bf16.msra.mxu0 0
        %3598 = vmatpush.bf16.msra.mxu0 0
        %3599 = vmatpush.bf16.msra.mxu0 %v3590
        %3600 = vmatpush.bf16.msra.mxu0 %v3589
        %3601 = vmatmul.bf16.gmra.mxu0 %v2727
        %v3602 = vpop.f32.mrf.mxu0
        %v3603 = vadd.f32 %v3579, %v3602
        %v3604 = vpop.f32.mrf.mxu0
        %3605 = vdwg.mxu0
        %v3606 = vpack.c.bf16 %v3575, %v3575
        %v3607 = vpack.c.bf16 %v3603, %v3603
        %v3609 = vsel %vm1397, %v3606, 0
        %v3612 = vsel %vm1397, %v3607, 0
        %3614 = vmatpush.bf16.xpose.msra.mxu0 0
        %3615 = vmatpush.bf16.xpose.msra.mxu0 0
        %3616 = vmatpush.bf16.xpose.msra.mxu0 0
        %3617 = vmatpush.bf16.xpose.msra.mxu0 0
        %3618 = vmatpush.bf16.xpose.msra.mxu0 0
        %3619 = vmatpush.bf16.xpose.msra.mxu0 0
        %3620 = vmatpush.bf16.xpose.msra.mxu0 0
        %3621 = vmatpush.bf16.xpose.msra.mxu0 %v3612
        %3622 = vmatmul.bf16.gmra.mxu0 %v3609
        %v3623 = vpop.f32.mrf.mxu0
        %v3624 = vadd.f32 0.0, %v3623
        %v3625 = vpop.f32.mrf.mxu0
        %3626 = vdwg.mxu0
        %v3627 = vsel %vm1397, %v3624, -inf
        %3628 = vmax.xlane.f32.xlu0 %v3627
        %v3629 = vpop.xlane.xlu0 %3628
        %v3630 = vsub.f32 %v3624, %v3629
        %v3631 = vmul.f32 %v3630, 1.442695
        %v3632 = vpow.pop %v3631
        %v3633 = vsel %vm1397, %v3632, 0.0
        %3634 = vadd.xlane.f32.xlu0 %v3633
        %v3635 = vpop.xlane.xlu0 %3634
        %v3636 = vrcp.pop %v3635
        %v3637 = vmul.f32 %v3632, %v3636
        %v3638 = vpack.c.bf16 %v3637, %v3637
        %3640 = vrot.lane.b32.xlu0 %v3607, 96
        %v3641 = vpop.permute.xlu0 %3640
        %v3643 = vsel %vm1397, %v3638, 0
        %v3646 = vsel %vm1434, %v3641, 0
        %3648 = vmatpush.bf16.msra.mxu0 0
        %3649 = vmatpush.bf16.msra.mxu0 0
        %3650 = vmatpush.bf16.msra.mxu0 0
        %3651 = vmatpush.bf16.msra.mxu0 0
        %3652 = vmatpush.bf16.msra.mxu0 0
        %3653 = vmatpush.bf16.msra.mxu0 0
        %3654 = vmatpush.bf16.msra.mxu0 0
        %3655 = vmatpush.bf16.msra.mxu0 %v3646
        %3656 = vmatmul.bf16.gmra.mxu0 %v3643
        %v3657 = vpop.f32.mrf.mxu0
        %v3658 = vadd.f32 0.0, %v3657
        %v3659 = vpop.f32.mrf.mxu0
        %3660 = vdwg.mxu0
        %3662 = vrot.lane.b32.xlu0 %v3606, 120
        %v3663 = vpop.permute.xlu0 %3662
        %3664 = vrot.lane.b32.xlu0 %v3607, 120
        %v3665 = vpop.permute.xlu0 %3664
        %v3667 = vsel %vm1397, %v3663, 0
        %v3670 = vsel %vm1397, %v3665, 0
        %3672 = vmatpush.bf16.xpose.msra.mxu0 0
        %3673 = vmatpush.bf16.xpose.msra.mxu0 0
        %3674 = vmatpush.bf16.xpose.msra.mxu0 0
        %3675 = vmatpush.bf16.xpose.msra.mxu0 0
        %3676 = vmatpush.bf16.xpose.msra.mxu0 0
        %3677 = vmatpush.bf16.xpose.msra.mxu0 0
        %3678 = vmatpush.bf16.xpose.msra.mxu0 0
        %3679 = vmatpush.bf16.xpose.msra.mxu0 %v3670
        %3680 = vmatmul.bf16.gmra.mxu0 %v3667
        %v3681 = vpop.f32.mrf.mxu0
        %v3682 = vadd.f32 0.0, %v3681
        %v3683 = vpop.f32.mrf.mxu0
        %3684 = vdwg.mxu0
        %v3685 = vsel %vm1397, %v3682, -inf
        %3686 = vmax.xlane.f32.xlu0 %v3685
        %v3687 = vpop.xlane.xlu0 %3686
        %v3688 = vsub.f32 %v3682, %v3687
        %v3689 = vmul.f32 %v3688, 1.442695
        %v3690 = vpow.pop %v3689
        %v3691 = vsel %vm1397, %v3690, 0.0
        %3692 = vadd.xlane.f32.xlu0 %v3691
        %v3693 = vpop.xlane.xlu0 %3692
        %v3694 = vrcp.pop %v3693
        %v3695 = vmul.f32 %v3690, %v3694
        %v3696 = vpack.c.bf16 %v3695, %v3695
        %3697 = vrot.lane.b32.xlu0 %v3607, 88
        %v3698 = vpop.permute.xlu0 %3697
        %v3700 = vsel %vm1397, %v3696, 0
        %v3703 = vsel %vm1434, %v3698, 0
        %3705 = vmatpush.bf16.msra.mxu0 0
        %3706 = vmatpush.bf16.msra.mxu0 0
        %3707 = vmatpush.bf16.msra.mxu0 0
        %3708 = vmatpush.bf16.msra.mxu0 0
        %3709 = vmatpush.bf16.msra.mxu0 0
        %3710 = vmatpush.bf16.msra.mxu0 0
        %3711 = vmatpush.bf16.msra.mxu0 0
        %3712 = vmatpush.bf16.msra.mxu0 %v3703
        %3713 = vmatmul.bf16.gmra.mxu0 %v3700
        %v3714 = vpop.f32.mrf.mxu0
        %v3715 = vadd.f32 0.0, %v3714
        %v3716 = vpop.f32.mrf.mxu0
        %3717 = vdwg.mxu0
        %3718 = vrot.lane.b32.xlu0 %v3606, 112
        %v3719 = vpop.permute.xlu0 %3718
        %3720 = vrot.lane.b32.xlu0 %v3607, 112
        %v3721 = vpop.permute.xlu0 %3720
        %v3723 = vsel %vm1397, %v3719, 0
        %v3726 = vsel %vm1397, %v3721, 0
        %3728 = vmatpush.bf16.xpose.msra.mxu0 0
        %3729 = vmatpush.bf16.xpose.msra.mxu0 0
        %3730 = vmatpush.bf16.xpose.msra.mxu0 0
        %3731 = vmatpush.bf16.xpose.msra.mxu0 0
        %3732 = vmatpush.bf16.xpose.msra.mxu0 0
        %3733 = vmatpush.bf16.xpose.msra.mxu0 0
        %3734 = vmatpush.bf16.xpose.msra.mxu0 0
        %3735 = vmatpush.bf16.xpose.msra.mxu0 %v3726
        %3736 = vmatmul.bf16.gmra.mxu0 %v3723
        %v3737 = vpop.f32.mrf.mxu0
        %v3738 = vadd.f32 0.0, %v3737
        %v3739 = vpop.f32.mrf.mxu0
        %3740 = vdwg.mxu0
        %v3741 = vsel %vm1397, %v3738, -inf
        %3742 = vmax.xlane.f32.xlu0 %v3741
        %v3743 = vpop.xlane.xlu0 %3742
        %v3744 = vsub.f32 %v3738, %v3743
        %v3745 = vmul.f32 %v3744, 1.442695
        %v3746 = vpow.pop %v3745
        %v3747 = vsel %vm1397, %v3746, 0.0
        %3748 = vadd.xlane.f32.xlu0 %v3747
        %v3749 = vpop.xlane.xlu0 %3748
        %v3750 = vrcp.pop %v3749
        %v3751 = vmul.f32 %v3746, %v3750
        %v3752 = vpack.c.bf16 %v3751, %v3751
        %3753 = vrot.lane.b32.xlu0 %v3607, 80
        %v3754 = vpop.permute.xlu0 %3753
        %v3756 = vsel %vm1397, %v3752, 0
        %v3759 = vsel %vm1434, %v3754, 0
        %3761 = vmatpush.bf16.msra.mxu0 0
        %3762 = vmatpush.bf16.msra.mxu0 0
        %3763 = vmatpush.bf16.msra.mxu0 0
        %3764 = vmatpush.bf16.msra.mxu0 0
        %3765 = vmatpush.bf16.msra.mxu0 0
        %3766 = vmatpush.bf16.msra.mxu0 0
        %3767 = vmatpush.bf16.msra.mxu0 0
        %3768 = vmatpush.bf16.msra.mxu0 %v3759
        %3769 = vmatmul.bf16.gmra.mxu0 %v3756
        %v3770 = vpop.f32.mrf.mxu0
        %v3771 = vadd.f32 0.0, %v3770
        %v3772 = vpop.f32.mrf.mxu0
        %3773 = vdwg.mxu0
        %3774 = vrot.lane.b32.xlu0 %v3606, 104
        %v3775 = vpop.permute.xlu0 %3774
        %3776 = vrot.lane.b32.xlu0 %v3607, 104
        %v3777 = vpop.permute.xlu0 %3776
        %v3779 = vsel %vm1397, %v3775, 0
        %v3782 = vsel %vm1397, %v3777, 0
        %3784 = vmatpush.bf16.xpose.msra.mxu0 0
        %3785 = vmatpush.bf16.xpose.msra.mxu0 0
        %3786 = vmatpush.bf16.xpose.msra.mxu0 0
        %3787 = vmatpush.bf16.xpose.msra.mxu0 0
        %3788 = vmatpush.bf16.xpose.msra.mxu0 0
        %3789 = vmatpush.bf16.xpose.msra.mxu0 0
        %3790 = vmatpush.bf16.xpose.msra.mxu0 0
        %3791 = vmatpush.bf16.xpose.msra.mxu0 %v3782
        %3792 = vmatmul.bf16.gmra.mxu0 %v3779
        %v3793 = vpop.f32.mrf.mxu0
        %v3794 = vadd.f32 0.0, %v3793
        %v3795 = vpop.f32.mrf.mxu0
        %3796 = vdwg.mxu0
        %v3797 = vsel %vm1397, %v3794, -inf
        %3798 = vmax.xlane.f32.xlu0 %v3797
        %v3799 = vpop.xlane.xlu0 %3798
        %v3800 = vsub.f32 %v3794, %v3799
        %v3801 = vmul.f32 %v3800, 1.442695
        %v3802 = vpow.pop %v3801
        %v3803 = vsel %vm1397, %v3802, 0.0
        %3804 = vadd.xlane.f32.xlu0 %v3803
        %v3805 = vpop.xlane.xlu0 %3804
        %v3806 = vrcp.pop %v3805
        %v3807 = vmul.f32 %v3802, %v3806
        %v3808 = vpack.c.bf16 %v3807, %v3807
        %3809 = vrot.lane.b32.xlu0 %v3607, 72
        %v3810 = vpop.permute.xlu0 %3809
        %v3812 = vsel %vm1397, %v3808, 0
        %v3815 = vsel %vm1434, %v3810, 0
        %3817 = vmatpush.bf16.msra.mxu0 0
        %3818 = vmatpush.bf16.msra.mxu0 0
        %3819 = vmatpush.bf16.msra.mxu0 0
        %3820 = vmatpush.bf16.msra.mxu0 0
        %3821 = vmatpush.bf16.msra.mxu0 0
        %3822 = vmatpush.bf16.msra.mxu0 0
        %3823 = vmatpush.bf16.msra.mxu0 0
        %3824 = vmatpush.bf16.msra.mxu0 %v3815
        %3825 = vmatmul.bf16.gmra.mxu0 %v3812
        %v3826 = vpop.f32.mrf.mxu0
        %v3827 = vadd.f32 0.0, %v3826
        %v3828 = vpop.f32.mrf.mxu0
        %3829 = vdwg.mxu0
        %3831 = vrot.lane.b32.xlu0 %v3715, 8
        %v3832 = vpop.permute.xlu0 %3831
        %3835 = vrot.lane.b32.xlu0 %v3771, 16
        %v3836 = vpop.permute.xlu0 %3835
        %3839 = vrot.lane.b32.xlu0 %v3827, 24
        %v3840 = vpop.permute.xlu0 %3839
        %v3842 = vsel %vm1397, %v3658, %v3832
        %v3843 = vsel %vm1632, %v3842, %v3836
        %v3844 = vsel %vm1634, %v3843, %v3840
        %v3845 = vpack.c.bf16 %v3844, %v3844
        %v3847 = vperm.slane %v3541, 0
        %v3853 = vunpack.c.l.b16 %v3536
        %v3854 = vunpack.c.l.b16 %v3537
        %v3855 = vunpack.c.l.b16 %v3538
        %v3856 = vunpack.c.l.b16 %v3539
        %v3857 = vpack.c.b16 %v3854, %v3853
        %v3858 = vpack.c.b16 %v3856, %v3855
        %v3862 = vsel %vm1376, %v3845, 0
        %3864 = vmatpush.bf16.msra.mxu0 0
        %3865 = vmatpush.bf16.msra.mxu0 0
        %3866 = vmatpush.bf16.msra.mxu0 0
        %3867 = vmatpush.bf16.msra.mxu0 0
        %3868 = vmatpush.bf16.msra.mxu0 0
        %3869 = vmatpush.bf16.msra.mxu0 0
        %3870 = vmatpush.bf16.msra.mxu0 %v3858
        %3871 = vmatpush.bf16.msra.mxu0 %v3857
        %3872 = vmatmul.bf16.gmra.mxu0 %v3862
        %v3873 = vpop.f32.mrf.mxu0
        %v3874 = vadd.f32 %v3847, %v3873
        %v3875 = vpop.f32.mrf.mxu0
        %3876 = vdwg.mxu0
        %v3877 = vadd.f32 %v3520, %v3874
        %v3878 = vsel %vm1376, %v3877, 0.0
        %3879 = vadd.xlane.f32.xlu0 %v3878
        %v3880 = vpop.xlane.xlu0 %3879
        %v3881 = vmul.f32 %v3880, %v1678
        %v3882 = vsub.f32 %v3877, %v3881
        %v3883 = vmul.f32 %v3882, %v3882
        %v3884 = vsel %vm1376, %v3883, 0.0
        %3885 = vadd.xlane.f32.xlu0 %v3884
        %v3886 = vpop.xlane.xlu0 %3885
        %v3887 = vmul.f32 %v3886, %v1678
        %v3888 = vadd.f32 %v3887, 1e-05
        %v3889 = vrsqrt.pop %v3888
        %v3890 = vmul.f32 %v3889, %v3888
        %v3891 = vmul.f32 %v3890, %v3889
        %v3892 = vmul.f32 0.5, %v3891
        %v3893 = vsub.f32 1.5, %v3892
        %v3894 = vmul.f32 %v3889, %v3893
        %vm3895 = vweird.f32 %v3888
        %vm3896 = vweird.f32 %v3889
        %vm3897 = vmor %vm3895, %vm3896
        %v3898 = vsel %vm3897, %v3889, %v3894
        %v3899 = vmul.f32 %v3882, %v3898
        %v3901 = vperm.slane %v3543, 0
        %v3903 = vmul.f32 %v3899, %v3901
        %v3905 = vperm.slane %v3545, 0
        %v3907 = vadd.f32 %v3903, %v3905
        %s3908 = scalar_lea.vmem %s67, 16
        %v3909 = vld [vmem:[%s3908] sm:$0xf]
        %v3910 = vld [vmem:[%s3908 + $0x4] sm:$0xf]
        %v3911 = vld [vmem:[%s3908 + $0x8] sm:$0xf]
        %v3912 = vld [vmem:[%s3908 + $0xc] sm:$0xf]
        %s3913 = scalar_lea.vmem %s69, 1
        %v3914 = vld [vmem:[%s3913] sm:$0x1]
        %s3915 = scalar_lea.vmem %s71, 32
        %v3916 = vld [vmem:[%s3915] sm:$0xf]
        %v3917 = vld [vmem:[%s3915 + $0x4] sm:$0xf]
        %v3918 = vld [vmem:[%s3915 + $0x8] sm:$0xf]
        %v3919 = vld [vmem:[%s3915 + $0xc] sm:$0xf]
        %v3920 = vld [vmem:[%s3915 + $0x10] sm:$0xf]
        %v3921 = vld [vmem:[%s3915 + $0x14] sm:$0xf]
        %v3922 = vld [vmem:[%s3915 + $0x18] sm:$0xf]
        %v3923 = vld [vmem:[%s3915 + $0x1c] sm:$0xf]
        %s3924 = scalar_lea.vmem %s73, 1
        %v3925 = vld [vmem:[%s3924] sm:$0x1]
        %s3926 = scalar_lea.vmem %s75, 1
        %v3927 = vld [vmem:[%s3926] sm:$0x1]
        %s3928 = scalar_lea.vmem %s77, 1
        %v3929 = vld [vmem:[%s3928] sm:$0x1]
        %v3930 = vpack.c.bf16 %v3907, %v3907
        %v3932 = vperm.slane %v3914, 0
        %v3938 = vunpack.c.l.b16 %v3909
        %v3939 = vunpack.c.l.b16 %v3910
        %v3940 = vunpack.c.l.b16 %v3911
        %v3941 = vunpack.c.l.b16 %v3912
        %v3942 = vpack.c.b16 %v3939, %v3938
        %v3943 = vpack.c.b16 %v3941, %v3940
        %v3947 = vsel %vm1376, %v3930, 0
        %3949 = vmatpush.bf16.msra.mxu0 0
        %3950 = vmatpush.bf16.msra.mxu0 0
        %3951 = vmatpush.bf16.msra.mxu0 0
        %3952 = vmatpush.bf16.msra.mxu0 0
        %3953 = vmatpush.bf16.msra.mxu0 0
        %3954 = vmatpush.bf16.msra.mxu0 0
        %3955 = vmatpush.bf16.msra.mxu0 %v3943
        %3956 = vmatpush.bf16.msra.mxu0 %v3942
        %3957 = vmatmul.bf16.gmra.mxu0 %v3947
        %v3958 = vpop.f32.mrf.mxu0
        %v3959 = vadd.f32 %v3932, %v3958
        %v3960 = vpop.f32.mrf.mxu0
        %3961 = vdwg.mxu0
        %v3962 = vmax.f32 %v3959, 0.0
        %v3963 = vpack.c.bf16 %v3962, %v3962
        %v3972 = vunpack.c.l.b16 %v3916
        %v3973 = vunpack.c.l.b16 %v3917
        %v3974 = vunpack.c.l.b16 %v3918
        %v3975 = vunpack.c.l.b16 %v3919
        %v3976 = vunpack.c.l.b16 %v3920
        %v3977 = vunpack.c.l.b16 %v3921
        %v3978 = vunpack.c.l.b16 %v3922
        %v3979 = vunpack.c.l.b16 %v3923
        %v3980 = vpack.c.b16 %v3973, %v3972
        %v3981 = vpack.c.b16 %v3975, %v3974
        %v3982 = vpack.c.b16 %v3977, %v3976
        %v3983 = vpack.c.b16 %v3979, %v3978
        %v3989 = vsel %vm1780, %v3963, 0
        %3991 = vmatpush.bf16.msra.mxu0 0
        %3992 = vmatpush.bf16.msra.mxu0 0
        %3993 = vmatpush.bf16.msra.mxu0 0
        %3994 = vmatpush.bf16.msra.mxu0 0
        %3995 = vmatpush.bf16.msra.mxu0 %v3983
        %3996 = vmatpush.bf16.msra.mxu0 %v3982
        %3997 = vmatpush.bf16.msra.mxu0 %v3981
        %3998 = vmatpush.bf16.msra.mxu0 %v3980
        %3999 = vmatmul.bf16.gmra.mxu0 %v3989
        %v4000 = vpop.f32.mrf.mxu0
        %v4001 = vadd.f32 0.0, %v4000
        %v4002 = vpop.f32.mrf.mxu0
        %4003 = vdwg.mxu0
        %v4004 = vadd.f32 %v3907, %v4001
        %v4006 = vperm.slane %v3925, 0
        %v4008 = vadd.f32 %v4004, %v4006
        %v4009 = vsel %vm1376, %v4008, 0.0
        %4010 = vadd.xlane.f32.xlu0 %v4009
        %v4011 = vpop.xlane.xlu0 %4010
        %v4012 = vmul.f32 %v4011, %v1678
        %v4013 = vsub.f32 %v4008, %v4012
        %v4014 = vmul.f32 %v4013, %v4013
        %v4015 = vsel %vm1376, %v4014, 0.0
        %4016 = vadd.xlane.f32.xlu0 %v4015
        %v4017 = vpop.xlane.xlu0 %4016
        %v4018 = vmul.f32 %v4017, %v1678
        %v4019 = vadd.f32 %v4018, 1e-05
        %v4020 = vrsqrt.pop %v4019
        %v4021 = vmul.f32 %v4020, %v4019
        %v4022 = vmul.f32 %v4021, %v4020
        %v4023 = vmul.f32 0.5, %v4022
        %v4024 = vsub.f32 1.5, %v4023
        %v4025 = vmul.f32 %v4020, %v4024
        %vm4026 = vweird.f32 %v4019
        %vm4027 = vweird.f32 %v4020
        %vm4028 = vmor %vm4026, %vm4027
        %v4029 = vsel %vm4028, %v4020, %v4025
        %v4030 = vmul.f32 %v4013, %v4029
        %v4032 = vperm.slane %v3927, 0
        %v4034 = vmul.f32 %v4030, %v4032
        %v4036 = vperm.slane %v3929, 0
        %v4038 = vadd.f32 %v4034, %v4036
        %v4039 = vld [vmem:[%s79] sm:$0xf]
        %v4040 = vld [vmem:[%s79 + $0x4] sm:$0xf]
        %v4041 = vld [vmem:[%s79 + $0x8] sm:$0xf]
        %v4042 = vld [vmem:[%s79 + $0xc] sm:$0xf]
        %v4043 = vpack.c.bf16 %v4038, %v4038
        %v4044 = vld [vmem:[%s81] sm:$0x1]
        %v4046 = vperm.slane %v4044, 0
        %v4052 = vunpack.c.l.b16 %v4039
        %v4053 = vunpack.c.l.b16 %v4040
        %v4054 = vunpack.c.l.b16 %v4041
        %v4055 = vunpack.c.l.b16 %v4042
        %v4056 = vpack.c.b16 %v4053, %v4052
        %v4057 = vpack.c.b16 %v4055, %v4054
        %v4061 = vsel %vm1376, %v4043, 0
        %4063 = vmatpush.bf16.msra.mxu0 0
        %4064 = vmatpush.bf16.msra.mxu0 0
        %4065 = vmatpush.bf16.msra.mxu0 0
        %4066 = vmatpush.bf16.msra.mxu0 0
        %4067 = vmatpush.bf16.msra.mxu0 0
        %4068 = vmatpush.bf16.msra.mxu0 0
        %4069 = vmatpush.bf16.msra.mxu0 %v4057
        %4070 = vmatpush.bf16.msra.mxu0 %v4056
        %4071 = vmatmul.bf16.gmra.mxu0 %v4061
        %v4072 = vpop.f32.mrf.mxu0
        %v4073 = vadd.f32 %v4046, %v4072
        %v4074 = vpop.f32.mrf.mxu0
        %4075 = vdwg.mxu0
        %4076 = vst.msk [vmem:[%s1253] sm:$0xff] %vm1285, %v4073
        %s4077 = sand.u32 %s981, 1
        %s4078 = scalar_lea.sflag [#allocation3], %s4077
        %s4079 = sand.u32 %s981, 1
        %s4080 = smul.addr %s4079, 8
        %s4081 = scalar_lea.vmem [#allocation2], %s4080
        // Predicated region
        $region185: #{transformer_forward.1} parent=183 // pred_check
          %p4082 = pneg %p991
        $region186: #{transformer_forward.1} parent=183 // pred_check_branch
          %4084 = sbr.rel (%p4082) target = $region188
        $region187: #{transformer_forward.1} parent=183 // pred_region
          %4086 = vsyncadd %s4078, 0
          %s4087 = smul.addr %s97, 8
          %s4088 = scalar_lea.hbm %s83, %s4087
          %s4090 = sshll.u32 %s4081, 4
          %s4091 = int_to_ptr.vmem [resolvable:$true] %s4090
          %s4092 = sshll.u32 %s4088, 4
          %s4093 = int_to_ptr.hbm [resolvable:$true] %s4092
          %4095 = dma.vmem_to_hbm [thread:$0]  %s4091, 128, %s4093, %s4078
        $region188: #{transformer_forward.1} parent=183 // pred_fallthru
          _
      $region184: #{transformer_forward.1} parent=5 // pred_fallthru
        _
      %p4096 = scmp.le.s32.totalorder 2, %s92
      // Predicated region
      $region189: #{transformer_forward.1} parent=5 // pred_check
        %p4097 = pneg %p4096
      $region190: #{transformer_forward.1} parent=5 // pred_check_branch
        %4099 = sbr.rel (%p4097) target = $region192
      $region191: #{transformer_forward.1} parent=5 // pred_region
        %s4100 = ssub.s32 %s92, 2
        // Predicated region
        $region193: #{transformer_forward.1} parent=191 // pred_check
          %p4101 = pneg %p997
        $region194: #{transformer_forward.1} parent=191 // pred_check_branch
          %4103 = sbr.rel (%p4101) target = $region196
        $region195: #{transformer_forward.1} parent=191 // pred_region
          %s4104 = sand.u32 %s982, 1
          %s4105 = scalar_lea.sflag [#allocation3], %s4104
          %s4106 = sand.u32 %s982, 1
          %s4107 = smul.addr %s4106, 8
          %s4108 = scalar_lea.vmem [#allocation2], %s4107
          %4110 = dma.done %s4105, 128
        $region196: #{transformer_forward.1} parent=191 // pred_fallthru
          _
      $region192: #{transformer_forward.1} parent=5 // pred_fallthru
        _
    $region6: #{transformer_forward.1} parent=1 // loop_footer
      %s96 = sadd.s32 1, %s92
    $region7: #{transformer_forward.1} parent=1 // loop_footer_branch
      %91 = sbr.rel target = $region3
    $region8: #{transformer_forward.1} parent=1 // loop_exit
      _
    %4111 = vsyncpa [#allocation3], 1
    %s4112 = scalar_lea.sflag [#allocation3], 1
    %4113 = vsyncpa %s4112, 1

</llo_original>
